<compile_context>
chip_gen: v5e
topology: v5e:2x2
jax: 0.10.0
libtpu: 0.0.40
codegen_flags: <defaults>
</compile_context>

<pallas_src>
import functools
import math

import jax
import jax.numpy as jnp
from jax import lax
from jax.experimental import pallas as pl
from jax.experimental.pallas import tpu as pltpu

BN_EPS = 1e-5
NUM_CLASSES = 3                 # len(set(head_cat_dict.values()))
PAD_CLASSES = 128               # lane-dense output width (sliced back to 3 outside)
MAX_VIDEO_BLOCK_BYTES = 8 * 1024 * 1024   # logical bytes per streamed block (x2 buffered)
VMEM_LIMIT_BYTES = 48 * 1024 * 1024


def _round_up(x, m):
    return (x + m - 1) // m * m


# ---------------------------------------------------------------------------
# Kernel 1: streamed global-average-pool partial sums (the memory-bound phase).
# ---------------------------------------------------------------------------
def gap_kernel(video_ref, acc_ref, *, rows_total, rows_blk, blocks_per_split,
               need_mask):
    s = pl.program_id(1)

    @pl.when(s == 0)
    def _():
        acc_ref[...] = jnp.zeros_like(acc_ref)

    blk = video_ref[...].astype(jnp.float32)          # (B, C, rows_blk, 128)
    if need_mask:
        # Ragged tail: out-of-bounds block rows hold unspecified data -> mask
        # by the intended global row index before summing.
        p = pl.program_id(0)
        start = (p * blocks_per_split + s) * rows_blk
        row_ids = lax.broadcasted_iota(jnp.int32, (rows_blk, 128), 0)
        blk = jnp.where(row_ids < (rows_total - start), blk, 0.0)

    # Keep the 128-lane axis in the accumulator (pure VPU adds per step); the
    # single cross-lane reduce happens once in the epilogue kernel.
    acc_ref[...] += jnp.sum(blk, axis=2)              # (B, C, 128)


# ---------------------------------------------------------------------------
# Kernel 2: tiny fused epilogue (coords branch + final fc), single invocation.
# ---------------------------------------------------------------------------
def epilogue_kernel(part_ref, coords_ref, wh_ref, bh_ref,
                    w1_ref, b1_ref, w2_ref, b2_ref,
                    wfh_ref, wfc_ref, bf_ref, out_ref, *, inv_spatial):
    # ---- finish the global average pool ------------------------------------
    part = jnp.sum(part_ref[...], axis=0)             # (B, C, 128) combine TC splits
    pooled = jnp.sum(part, axis=-1) * inv_spatial     # (B, C)      one XLU reduce

    # TODO(synk): the real module runs a Kinetics-pretrained 3D ResNet-34 whose
    # definition/checkpoint is not part of the provided source; it is replaced
    # by global average pooling + Linear(3 -> 512) so the 512-dim feature
    # contract and the final fc are exact.
    wh = wh_ref[...]                                  # (3, 512)
    head_feat = (pooled[:, 0:1] * wh[0:1, :]
                 + pooled[:, 1:2] * wh[1:2, :]
                 + pooled[:, 2:3] * wh[2:3, :]
                 + bh_ref[...])                       # (B, 512) 3 VPU broadcast-FMAs

    # ---- coords branch ------------------------------------------------------
    x = coords_ref[...]                               # (B, 32, 58)
    B, C1, L1 = x.shape                               # static

    # fc_layer1: Linear(58 -> 20) on the last axis
    h1 = jnp.dot(x.reshape(B * C1, L1), w1_ref[...],
                 preferred_element_type=jnp.float32)  # (B*32, 20)
    h1 = h1.reshape(B, C1, 20) + b1_ref[...]          # (B, 32, 20)

    # BatchNorm1d(32, affine=False): training-mode batch stats over (N, L),
    # two-pass (shifted) variance for numerical safety.
    inv_n1 = 1.0 / float(B * 20)
    mu1 = jnp.sum(h1, axis=(0, 2), keepdims=True) * inv_n1
    d1 = h1 - mu1
    var1 = jnp.sum(d1 * d1, axis=(0, 2), keepdims=True) * inv_n1
    h1 = jnp.maximum(d1 * lax.rsqrt(var1 + BN_EPS), 0.0)

    # permute(0, 2, 1) then fc_layer2: Linear(32 -> 10).  The transpose is a
    # one-time tiny (B, 20, 32) relayout inside a negligible epilogue; kept
    # (instead of a 3-D dot_general) for lowering robustness.
    h1t = jnp.swapaxes(h1, 1, 2)                      # (B, 20, 32)
    h2 = jnp.dot(h1t.reshape(B * 20, C1), w2_ref[...],
                 preferred_element_type=jnp.float32)  # (B*20, 10)
    h2 = h2.reshape(B, 20, 10) + b2_ref[...]          # (B, 20, 10)

    # BatchNorm1d(20, affine=False), two-pass variance
    inv_n2 = 1.0 / float(B * 10)
    mu2 = jnp.sum(h2, axis=(0, 2), keepdims=True) * inv_n2
    d2 = h2 - mu2
    var2 = jnp.sum(d2 * d2, axis=(0, 2), keepdims=True) * inv_n2
    h2 = jnp.maximum(d2 * lax.rsqrt(var2 + BN_EPS), 0.0)

    # view(batch, 1, 200) + squeeze(1)
    coords_feat = h2.reshape(B, 200)                  # (B, 200)

    # cat([head_feat, coords_feat], 1) @ Wf + bf, Wf/bf padded to 128 lanes.
    out = (jnp.dot(head_feat, wfh_ref[...], preferred_element_type=jnp.float32)
           + jnp.dot(coords_feat, wfc_ref[...], preferred_element_type=jnp.float32)
           + bf_ref[...])                             # (B, 128) lane-dense store
    out_ref[...] = out.astype(out_ref.dtype)


def init_params(key):
    """Deterministic PyTorch-Linear-style init (U[-1/sqrt(fan_in), 1/sqrt(fan_in)])."""
    def linear(k, fan_in, fan_out):
        kw, kb = jax.random.split(k)
        bound = 1.0 / math.sqrt(fan_in)
        w = jax.random.uniform(kw, (fan_in, fan_out), jnp.float32, -bound, bound)
        b = jax.random.uniform(kb, (fan_out,), jnp.float32, -bound, bound)
        return w, b

    k = jax.random.split(key, 4)
    wh, bh = linear(k[0], 3, 512)                  # stub head projection (see TODO)
    w1, b1 = linear(k[1], 58, 20)                  # fc_layer1
    w2, b2 = linear(k[2], 32, 10)                  # fc_layer2
    wf, bf = linear(k[3], 512 + 200, NUM_CLASSES)  # final fc
    return dict(wh=wh, bh=bh, w1=w1, b1=b1, w2=w2, b2=b2,
                wfh=wf[:512], wfc=wf[512:], bf=bf)


@jax.jit
def head_net_forward(video_clip, coords_clip, params):
    B, C, T, H, W = video_clip.shape
    spatial = T * H * W

    # ---- dense (rows, 128) view of the video: free reshape when 128-divisible
    if spatial % 128 == 0:
        video4 = video_clip.reshape(B, C, spatial // 128, 128)
    else:
        # TODO(synk): this pad costs one extra HBM pass; the real module's
        # 32*112*112 clips are 128-divisible so this path is normally unused.
        lane_pad = 128 - spatial % 128
        video4 = jnp.pad(video_clip.reshape(B, C, spatial),
                         ((0, 0), (0, 0), (0, lane_pad))).reshape(B, C, -1, 128)
    rows_total = video4.shape[2]

    # ---- block sizing: ~8 MiB logical per streamed block (x2 double-buffered)
    itemsize = video4.dtype.itemsize
    bytes_per_row = B * C * 128 * itemsize
    rows_blk = max(8, (MAX_VIDEO_BLOCK_BYTES // bytes_per_row) // 8 * 8)
    rows_blk = min(rows_blk, _round_up(rows_total, 8))
    num_blocks = (rows_total + rows_blk - 1) // rows_blk

    # ---- split streaming across the 2 v7x TensorCores (no-op on v5e/v6e) ----
    nsplit = 2 if num_blocks >= 2 else 1
    blocks_per_split = (num_blocks + nsplit - 1) // nsplit
    need_mask = (nsplit * blocks_per_split * rows_blk) != rows_total

    def video_map(p, s):
        idx = p * blocks_per_split + s
        return (0, 0, jnp.minimum(idx, num_blocks - 1), 0)

    gap = functools.partial(gap_kernel, rows_total=rows_total, rows_blk=rows_blk,
                            blocks_per_split=blocks_per_split, need_mask=need_mask)

    partials = pl.pallas_call(
        gap,
        out_shape=jax.ShapeDtypeStruct((nsplit, B, C, 128), jnp.float32),
        grid_spec=pltpu.PrefetchScalarGridSpec(
            num_scalar_prefetch=0,
            grid=(nsplit, blocks_per_split),
            in_specs=[pl.BlockSpec((B, C, rows_blk, 128), video_map)],
            out_specs=pl.BlockSpec((None, B, C, 128), lambda p, s: (p, 0, 0, 0)),
        ),
        compiler_params=pltpu.CompilerParams(
            dimension_semantics=("parallel", "arbitrary"),
            vmem_limit_bytes=VMEM_LIMIT_BYTES,
        ),
    )(video4)

    # ---- epilogue: everything fits whole in VMEM, single invocation ---------
    coords = coords_clip.astype(jnp.float32)
    pad = PAD_CLASSES - NUM_CLASSES
    wfh_p = jnp.pad(params["wfh"], ((0, 0), (0, pad)))           # (512, 128)
    wfc_p = jnp.pad(params["wfc"], ((0, 0), (0, pad)))           # (200, 128)
    bf_p = jnp.pad(params["bf"], ((0, pad),)).reshape(1, -1)     # (1, 128)

    epi = functools.partial(epilogue_kernel, inv_spatial=1.0 / float(spatial))
    out_padded = pl.pallas_call(
        epi,
        out_shape=jax.ShapeDtypeStruct((B, PAD_CLASSES), jnp.float32),
    )(partials, coords,
      params["wh"], params["bh"].reshape(1, -1),
      params["w1"], params["b1"].reshape(1, 1, -1),
      params["w2"], params["b2"].reshape(1, 1, -1),
      wfh_p, wfc_p, bf_p)

    return out_padded[:, :NUM_CLASSES]


if __name__ == "__main__":
    key = jax.random.PRNGKey(0)
    kp, kv, kc = jax.random.split(key, 3)

    params = init_params(kp)

    B, T, H, W = 2, 8, 16, 16
    video_clip = jax.random.normal(kv, (B, 3, T, H, W), jnp.float32)   # NCDHW
    coords_clip = jax.random.normal(kc, (B, 32, 58), jnp.float32)      # (N, C, L)

    out = head_net_forward(video_clip, coords_clip, params)
    out = jax.block_until_ready(out)
    assert out.shape == (B, NUM_CLASSES) and out.dtype == jnp.float32

    print("KERNEL_OK")
</pallas_src>

<mosaic_0001>
module attributes {stable_mosaic.version = 11 : i64} {
  func.func @gap_kernel(%arg0: i32, %arg1: i32, %arg2: memref<2x3x16x128xf32, #tpu.memory_space<vmem>>, %arg3: memref<1x2x3x128xf32, #tpu.memory_space<vmem>>) attributes {dimension_semantics = [#tpu.dimension_semantics<parallel>, #tpu.dimension_semantics<arbitrary>], iteration_bounds = array<i64: 1, 1>, scalar_prefetch = 0 : i64, scratch_operands = 0 : i64, tpu.core_type = #tpu.core_type<tc>, window_params = [{transform_indices = @transform_0, window_bounds = array<i64: 2, 3, 16, 128>}, {transform_indices = @transform_1, window_bounds = array<i64: 1, 2, 3, 128>}]} {
    %c0_i32 = arith.constant 0 : i32
    %0 = arith.cmpi eq, %arg1, %c0_i32 : i32
    %1 = arith.extui %0 : i1 to i32
    %c0_i32_0 = arith.constant 0 : i32
    %2 = arith.cmpi ne, %1, %c0_i32_0 : i32
    scf.if %2 {
      %cst_12 = arith.constant 0.000000e+00 : f32
      %11 = vector.broadcast %cst_12 : f32 to vector<2x3x128xf32>
      %c0_13 = arith.constant 0 : index
      %c0_14 = arith.constant 0 : index
      %c0_15 = arith.constant 0 : index
      %c0_16 = arith.constant 0 : index
      %12 = vector.load %arg3[%c0_13, %c0_14, %c0_15, %c0_16] : memref<1x2x3x128xf32, #tpu.memory_space<vmem>>, vector<1x2x3x128xf32>
      %13 = vector.shape_cast %12 : vector<1x2x3x128xf32> to vector<2x3x128xf32>
      %14 = vector.shape_cast %11 : vector<2x3x128xf32> to vector<1x2x3x128xf32>
      tpu.vector_store %arg3[%c0_13, %c0_14, %c0_15, %c0_16], %14 {strides = array<i32>} : memref<1x2x3x128xf32, #tpu.memory_space<vmem>>, vector<1x2x3x128xf32>,
    } else {
    }
    %c0 = arith.constant 0 : index
    %c0_1 = arith.constant 0 : index
    %c0_2 = arith.constant 0 : index
    %c0_3 = arith.constant 0 : index
    %3 = vector.load %arg2[%c0, %c0_1, %c0_2, %c0_3] : memref<2x3x16x128xf32, #tpu.memory_space<vmem>>, vector<2x3x16x128xf32>
    %c0_4 = arith.constant 0 : index
    %c0_5 = arith.constant 0 : index
    %c0_6 = arith.constant 0 : index
    %c0_7 = arith.constant 0 : index
    %4 = vector.load %arg3[%c0_4, %c0_5, %c0_6, %c0_7] : memref<1x2x3x128xf32, #tpu.memory_space<vmem>>, vector<1x2x3x128xf32>
    %5 = vector.shape_cast %4 : vector<1x2x3x128xf32> to vector<2x3x128xf32>
    %cst = arith.constant dense<0.000000e+00> : vector<2x3x128xf32>
    %6 = vector.multi_reduction <add>, %3, %cst [2] : vector<2x3x16x128xf32> to vector<2x3x128xf32>
    %7 = arith.addf %5, %6 : vector<2x3x128xf32>
    %c0_8 = arith.constant 0 : index
    %c0_9 = arith.constant 0 : index
    %c0_10 = arith.constant 0 : index
    %c0_11 = arith.constant 0 : index
    %8 = vector.load %arg3[%c0_8, %c0_9, %c0_10, %c0_11] : memref<1x2x3x128xf32, #tpu.memory_space<vmem>>, vector<1x2x3x128xf32>
    %9 = vector.shape_cast %8 : vector<1x2x3x128xf32> to vector<2x3x128xf32>
    %10 = vector.shape_cast %7 : vector<2x3x128xf32> to vector<1x2x3x128xf32>
    tpu.vector_store %arg3[%c0_8, %c0_9, %c0_10, %c0_11], %10 {strides = array<i32>} : memref<1x2x3x128xf32, #tpu.memory_space<vmem>>, vector<1x2x3x128xf32>,
    return
  }
  func.func @transform_0(%arg0: i32, %arg1: i32) -> (i32, i32, i32, i32) {
    %c1_i32 = arith.constant 1 : i32
    %0 = arith.muli %arg0, %c1_i32 : i32
    %1 = arith.addi %0, %arg1 : i32
    %c0_i32 = arith.constant 0 : i32
    %2 = arith.minsi %1, %c0_i32 : i32
    %c0_i32_0 = arith.constant 0 : i32
    %c0_i32_1 = arith.constant 0 : i32
    %c0_i32_2 = arith.constant 0 : i32
    %c0_i32_3 = arith.constant 0 : i32
    return %c0_i32_0, %c0_i32_1, %2, %c0_i32_2 : i32, i32, i32, i32
  }
  func.func @transform_1(%arg0: i32, %arg1: i32) -> (i32, i32, i32, i32) {
    %c0_i32 = arith.constant 0 : i32
    %c0_i32_0 = arith.constant 0 : i32
    %c0_i32_1 = arith.constant 0 : i32
    %c0_i32_2 = arith.constant 0 : i32
    return %arg0, %c0_i32, %c0_i32_0, %c0_i32_1 : i32, i32, i32, i32
  }
}

module attributes {stable_mosaic.version = 11 : i64} {
  func.func @epilogue_kernel(%arg0: memref<1x2x3x128xf32, #tpu.memory_space<vmem>>, %arg1: memref<2x32x58xf32, #tpu.memory_space<vmem>>, %arg2: memref<3x512xf32, #tpu.memory_space<vmem>>, %arg3: memref<1x512xf32, #tpu.memory_space<vmem>>, %arg4: memref<58x20xf32, #tpu.memory_space<vmem>>, %arg5: memref<1x1x20xf32, #tpu.memory_space<vmem>>, %arg6: memref<32x10xf32, #tpu.memory_space<vmem>>, %arg7: memref<1x1x10xf32, #tpu.memory_space<vmem>>, %arg8: memref<512x128xf32, #tpu.memory_space<vmem>>, %arg9: memref<200x128xf32, #tpu.memory_space<vmem>>, %arg10: memref<1x128xf32, #tpu.memory_space<vmem>>, %arg11: memref<2x128xf32, #tpu.memory_space<vmem>>) attributes {dimension_semantics = [], scalar_prefetch = 0 : i64, scratch_operands = 0 : i64, tpu.core_type = #tpu.core_type<tc>} {
    %c0 = arith.constant 0 : index
    %c0_0 = arith.constant 0 : index
    %c0_1 = arith.constant 0 : index
    %c0_2 = arith.constant 0 : index
    %0 = vector.load %arg0[%c0, %c0_0, %c0_1, %c0_2] : memref<1x2x3x128xf32, #tpu.memory_space<vmem>>, vector<1x2x3x128xf32>
    %cst = arith.constant dense<0.000000e+00> : vector<2x3x128xf32>
    %1 = vector.multi_reduction <add>, %0, %cst [0] : vector<1x2x3x128xf32> to vector<2x3x128xf32>
    %cst_3 = arith.constant dense<0.000000e+00> : vector<2x3xf32>
    %2 = vector.multi_reduction <add>, %1, %cst_3 [2] : vector<2x3x128xf32> to vector<2x3xf32>
    %cst_4 = arith.constant 4.8828125E-4 : f32
    %3 = vector.broadcast %cst_4 : f32 to vector<2x3xf32>
    %4 = arith.mulf %2, %3 : vector<2x3xf32>
    %c0_5 = arith.constant 0 : index
    %c0_6 = arith.constant 0 : index
    %5 = vector.load %arg2[%c0_5, %c0_6] : memref<3x512xf32, #tpu.memory_space<vmem>>, vector<3x512xf32>
    %6 = vector.extract_strided_slice %4 {offsets = [0, 0], sizes = [2, 1], strides = [1, 1]} : vector<2x3xf32> to vector<2x1xf32>
    %7 = vector.extract_strided_slice %5 {offsets = [0, 0], sizes = [1, 512], strides = [1, 1]} : vector<3x512xf32> to vector<1x512xf32>
    %8 = vector.broadcast %6 : vector<2x1xf32> to vector<2x512xf32>
    %9 = vector.broadcast %7 : vector<1x512xf32> to vector<2x512xf32>
    %10 = arith.mulf %8, %9 : vector<2x512xf32>
    %11 = vector.extract_strided_slice %4 {offsets = [0, 1], sizes = [2, 1], strides = [1, 1]} : vector<2x3xf32> to vector<2x1xf32>
    %12 = vector.extract_strided_slice %5 {offsets = [1, 0], sizes = [1, 512], strides = [1, 1]} : vector<3x512xf32> to vector<1x512xf32>
    %13 = vector.broadcast %11 : vector<2x1xf32> to vector<2x512xf32>
    %14 = vector.broadcast %12 : vector<1x512xf32> to vector<2x512xf32>
    %15 = arith.mulf %13, %14 : vector<2x512xf32>
    %16 = arith.addf %10, %15 : vector<2x512xf32>
    %17 = vector.extract_strided_slice %4 {offsets = [0, 2], sizes = [2, 1], strides = [1, 1]} : vector<2x3xf32> to vector<2x1xf32>
    %18 = vector.extract_strided_slice %5 {offsets = [2, 0], sizes = [1, 512], strides = [1, 1]} : vector<3x512xf32> to vector<1x512xf32>
    %19 = vector.broadcast %17 : vector<2x1xf32> to vector<2x512xf32>
    %20 = vector.broadcast %18 : vector<1x512xf32> to vector<2x512xf32>
    %21 = arith.mulf %19, %20 : vector<2x512xf32>
    %22 = arith.addf %16, %21 : vector<2x512xf32>
    %c0_7 = arith.constant 0 : index
    %c0_8 = arith.constant 0 : index
    %23 = vector.load %arg3[%c0_7, %c0_8] : memref<1x512xf32, #tpu.memory_space<vmem>>, vector<1x512xf32>
    %24 = vector.broadcast %23 : vector<1x512xf32> to vector<2x512xf32>
    %25 = arith.addf %22, %24 : vector<2x512xf32>
    %c0_9 = arith.constant 0 : index
    %c0_10 = arith.constant 0 : index
    %c0_11 = arith.constant 0 : index
    %26 = vector.load %arg1[%c0_9, %c0_10, %c0_11] : memref<2x32x58xf32, #tpu.memory_space<vmem>>, vector<2x32x58xf32>
    %27 = vector.shape_cast %26 : vector<2x32x58xf32> to vector<64x58xf32>
    %c0_12 = arith.constant 0 : index
    %c0_13 = arith.constant 0 : index
    %28 = vector.load %arg4[%c0_12, %c0_13] : memref<58x20xf32, #tpu.memory_space<vmem>>, vector<58x20xf32>
    %cst_14 = arith.constant dense<0.000000e+00> : vector<64x20xf32>
    %29 = tpu.matmul %27, %28, %cst_14 {dimension_numbers = #tpu.dot_dimension_numbers<[1], [0], [0], [1], [0, 0, 1, 1], [], []>} : vector<64x58xf32>, vector<58x20xf32>, vector<64x20xf32> -> vector<64x20xf32>
    %30 = vector.shape_cast %29 : vector<64x20xf32> to vector<2x32x20xf32>
    %c0_15 = arith.constant 0 : index
    %c0_16 = arith.constant 0 : index
    %c0_17 = arith.constant 0 : index
    %31 = vector.load %arg5[%c0_15, %c0_16, %c0_17] : memref<1x1x20xf32, #tpu.memory_space<vmem>>, vector<1x1x20xf32>
    %32 = vector.broadcast %31 : vector<1x1x20xf32> to vector<2x32x20xf32>
    %33 = arith.addf %30, %32 : vector<2x32x20xf32>
    %cst_18 = arith.constant dense<0.000000e+00> : vector<32xf32>
    %34 = vector.multi_reduction <add>, %33, %cst_18 [0, 2] : vector<2x32x20xf32> to vector<32xf32>
    %35 = vector.shape_cast %34 : vector<32xf32> to vector<1x32x1xf32>
    %cst_19 = arith.constant 2.500000e-02 : f32
    %36 = vector.broadcast %cst_19 : f32 to vector<1x32x1xf32>
    %37 = arith.mulf %35, %36 : vector<1x32x1xf32>
    %38 = vector.broadcast %37 : vector<1x32x1xf32> to vector<2x32x20xf32>
    %39 = arith.subf %33, %38 : vector<2x32x20xf32>
    %40 = arith.mulf %39, %39 : vector<2x32x20xf32>
    %cst_20 = arith.constant dense<0.000000e+00> : vector<32xf32>
    %41 = vector.multi_reduction <add>, %40, %cst_20 [0, 2] : vector<2x32x20xf32> to vector<32xf32>
    %42 = vector.shape_cast %41 : vector<32xf32> to vector<1x32x1xf32>
    %cst_21 = arith.constant 2.500000e-02 : f32
    %43 = vector.broadcast %cst_21 : f32 to vector<1x32x1xf32>
    %44 = arith.mulf %42, %43 : vector<1x32x1xf32>
    %cst_22 = arith.constant 9.99999974E-6 : f32
    %45 = vector.broadcast %cst_22 : f32 to vector<1x32x1xf32>
    %46 = arith.addf %44, %45 : vector<1x32x1xf32>
    %47 = math.rsqrt %46 : vector<1x32x1xf32>
    %48 = vector.broadcast %47 : vector<1x32x1xf32> to vector<2x32x20xf32>
    %49 = arith.mulf %39, %48 : vector<2x32x20xf32>
    %cst_23 = arith.constant 0.000000e+00 : f32
    %50 = vector.broadcast %cst_23 : f32 to vector<2x32x20xf32>
    %51 = arith.maximumf %49, %50 : vector<2x32x20xf32>
    %52 = tpu.transpose %51, [0, 2, 1] : vector<2x32x20xf32> -> vector<2x20x32xf32>
    %53 = vector.shape_cast %52 : vector<2x20x32xf32> to vector<40x32xf32>
    %c0_24 = arith.constant 0 : index
    %c0_25 = arith.constant 0 : index
    %54 = vector.load %arg6[%c0_24, %c0_25] : memref<32x10xf32, #tpu.memory_space<vmem>>, vector<32x10xf32>
    %cst_26 = arith.constant dense<0.000000e+00> : vector<40x10xf32>
    %55 = tpu.matmul %53, %54, %cst_26 {dimension_numbers = #tpu.dot_dimension_numbers<[1], [0], [0], [1], [0, 0, 1, 1], [], []>} : vector<40x32xf32>, vector<32x10xf32>, vector<40x10xf32> -> vector<40x10xf32>
    %56 = vector.shape_cast %55 : vector<40x10xf32> to vector<2x20x10xf32>
    %c0_27 = arith.constant 0 : index
    %c0_28 = arith.constant 0 : index
    %c0_29 = arith.constant 0 : index
    %57 = vector.load %arg7[%c0_27, %c0_28, %c0_29] : memref<1x1x10xf32, #tpu.memory_space<vmem>>, vector<1x1x10xf32>
    %58 = vector.broadcast %57 : vector<1x1x10xf32> to vector<2x20x10xf32>
    %59 = arith.addf %56, %58 : vector<2x20x10xf32>
    %cst_30 = arith.constant dense<0.000000e+00> : vector<20xf32>
    %60 = vector.multi_reduction <add>, %59, %cst_30 [0, 2] : vector<2x20x10xf32> to vector<20xf32>
    %61 = vector.shape_cast %60 : vector<20xf32> to vector<1x20x1xf32>
    %cst_31 = arith.constant 5.000000e-02 : f32
    %62 = vector.broadcast %cst_31 : f32 to vector<1x20x1xf32>
    %63 = arith.mulf %61, %62 : vector<1x20x1xf32>
    %64 = vector.broadcast %63 : vector<1x20x1xf32> to vector<2x20x10xf32>
    %65 = arith.subf %59, %64 : vector<2x20x10xf32>
    %66 = arith.mulf %65, %65 : vector<2x20x10xf32>
    %cst_32 = arith.constant dense<0.000000e+00> : vector<20xf32>
    %67 = vector.multi_reduction <add>, %66, %cst_32 [0, 2] : vector<2x20x10xf32> to vector<20xf32>
    %68 = vector.shape_cast %67 : vector<20xf32> to vector<1x20x1xf32>
    %cst_33 = arith.constant 5.000000e-02 : f32
    %69 = vector.broadcast %cst_33 : f32 to vector<1x20x1xf32>
    %70 = arith.mulf %68, %69 : vector<1x20x1xf32>
    %cst_34 = arith.constant 9.99999974E-6 : f32
    %71 = vector.broadcast %cst_34 : f32 to vector<1x20x1xf32>
    %72 = arith.addf %70, %71 : vector<1x20x1xf32>
    %73 = math.rsqrt %72 : vector<1x20x1xf32>
    %74 = vector.broadcast %73 : vector<1x20x1xf32> to vector<2x20x10xf32>
    %75 = arith.mulf %65, %74 : vector<2x20x10xf32>
    %cst_35 = arith.constant 0.000000e+00 : f32
    %76 = vector.broadcast %cst_35 : f32 to vector<2x20x10xf32>
    %77 = arith.maximumf %75, %76 : vector<2x20x10xf32>
    %78 = vector.shape_cast %77 : vector<2x20x10xf32> to vector<2x200xf32>
    %c0_36 = arith.constant 0 : index
    %c0_37 = arith.constant 0 : index
    %79 = vector.load %arg8[%c0_36, %c0_37] : memref<512x128xf32, #tpu.memory_space<vmem>>, vector<512x128xf32>
    %cst_38 = arith.constant dense<0.000000e+00> : vector<2x128xf32>
    %80 = tpu.matmul %25, %79, %cst_38 {dimension_numbers = #tpu.dot_dimension_numbers<[1], [0], [0], [1], [0, 0, 1, 1], [], []>} : vector<2x512xf32>, vector<512x128xf32>, vector<2x128xf32> -> vector<2x128xf32>
    %c0_39 = arith.constant 0 : index
    %c0_40 = arith.constant 0 : index
    %81 = vector.load %arg9[%c0_39, %c0_40] : memref<200x128xf32, #tpu.memory_space<vmem>>, vector<200x128xf32>
    %cst_41 = arith.constant dense<0.000000e+00> : vector<2x128xf32>
    %82 = tpu.matmul %78, %81, %cst_41 {dimension_numbers = #tpu.dot_dimension_numbers<[1], [0], [0], [1], [0, 0, 1, 1], [], []>} : vector<2x200xf32>, vector<200x128xf32>, vector<2x128xf32> -> vector<2x128xf32>
    %83 = arith.addf %80, %82 : vector<2x128xf32>
    %c0_42 = arith.constant 0 : index
    %c0_43 = arith.constant 0 : index
    %84 = vector.load %arg10[%c0_42, %c0_43] : memref<1x128xf32, #tpu.memory_space<vmem>>, vector<1x128xf32>
    %85 = vector.broadcast %84 : vector<1x128xf32> to vector<2x128xf32>
    %86 = arith.addf %83, %85 : vector<2x128xf32>
    %c0_44 = arith.constant 0 : index
    %c0_45 = arith.constant 0 : index
    %87 = vector.load %arg11[%c0_44, %c0_45] : memref<2x128xf32, #tpu.memory_space<vmem>>, vector<2x128xf32>
    tpu.vector_store %arg11[%c0_44, %c0_45], %86 {strides = array<i32>} : memref<2x128xf32, #tpu.memory_space<vmem>>, vector<2x128xf32>,
    return
  }
}

</mosaic_0001>

<llo_original>
// kernel: head_net_forward.2
$region0: #{head_net_forward.2}
  #allocation0 [shape = 'u32[]', space=smem, size = 0x4, offset = 0x4, fixed_abs, tag = 'smem constant byte address 0x4 - core index']
  #allocation1 [shape = 'u32[72,128]{1,0:T(1,128)}', space=vmem, size = 0x9000, scoped, tag = 'internal scratch']
  %s0 = inlined_call_operand.vmem [shape: f32[2,3,16,128], index: 0, kind: input, shape index: {}]
  %s1 = inlined_call_operand.vmem [shape: f32[1,2,3,128], index: 1, kind: output, shape index: {}]
  %s2 = sld [smem:[#allocation0]]
  $region18: #{head_net_forward.2} parent=0
    _
  %s4 = ssub.s32 1, %s2
  %s5 = scalar_select 0, %s4, %s2
  // Predicated region
  $region2: #{head_net_forward.2} parent=0 // pred_check
    _
  $region3: #{head_net_forward.2} parent=0 // pred_check_branch
    %7 = sbr.rel (0) target = $region5
  $region4: #{head_net_forward.2} parent=0 // pred_region
    %s8 = sadd.s32 0, 0
    %p9 = scmp.lt.s32.totalorder %s8, 0
    %s10 = scalar_select %p9, %s8, 0
    %s11 = smul.u32 2, %s10
    %p12 = scmp.lt.s32.totalorder %s11, 1
    %s13 = scalar_select %p12, %s11, 1
    %s14 = smul.addr %s13, 8
    %s15 = scalar_lea.vmem %s0, %s14
    %s16 = sadd.s32 0, 0
    %p17 = scmp.lt.s32.totalorder %s16, 0
    %s18 = scalar_select %p17, %s16, 0
    %s19 = smul.u32 2, %s18
  $region5: #{head_net_forward.2} parent=0 // pred_fallthru
    _
  %s20 = sadd.s32 0, 0
  %p21 = scmp.lt.s32.totalorder %s20, 0
  %s22 = scalar_select %p21, %s20, 0
  %s23 = smul.u32 2, %s22
  %p24 = scmp.lt.s32.totalorder %s23, 1
  %s25 = scalar_select %p24, %s23, 1
  %s26 = smul.addr %s25, 8
  %s27 = scalar_lea.vmem %s0, %s26
  %s28 = sadd.s32 0, 0
  %p29 = scmp.lt.s32.totalorder %s28, 0
  %s30 = scalar_select %p29, %s28, 0
  %s31 = smul.u32 2, %s30
  %p32 = scmp.lt.s32.totalorder %s31, 1
  %s33 = scalar_select %p32, %s31, 1
  %s34 = smul.addr %s33, 8
  %s35 = scalar_lea.vmem %s0, %s34
  %s36 = sadd.s32 0, 0
  %p37 = scmp.lt.s32.totalorder %s36, 0
  %s38 = scalar_select %p37, %s36, 0
  %s39 = smul.u32 2, %s38
  %p40 = scmp.eq.s32.totalorder 0, 0
  // Predicated region
  $region6: #{head_net_forward.2} parent=0 // pred_check
    %p41 = pneg %p40
  $region7: #{head_net_forward.2} parent=0 // pred_check_branch
    %43 = sbr.rel (%p41) target = $region9
  $region8: #{head_net_forward.2} parent=0 // pred_region
    %44 = vst [vmem:[%s1] sm:$0x7] 0.0
    %45 = vst [vmem:[%s1 + $0x4] sm:$0x7] 0.0
  $region9: #{head_net_forward.2} parent=0 // pred_fallthru
    _
  %v46 = vld [vmem:[%s35] sm:$0xff]
  %v47 = vld [vmem:[%s35 + $0x8] sm:$0xff]
  %v48 = vld [vmem:[%s35 + $0x10] sm:$0xff]
  %v49 = vld [vmem:[%s35 + $0x18] sm:$0xff]
  %v50 = vld [vmem:[%s35 + $0x20] sm:$0xff]
  %v51 = vld [vmem:[%s35 + $0x28] sm:$0xff]
  %v52 = vld [vmem:[%s35 + $0x30] sm:$0xff]
  %v53 = vld [vmem:[%s35 + $0x38] sm:$0xff]
  %v54 = vld [vmem:[%s35 + $0x40] sm:$0xff]
  %v55 = vld [vmem:[%s35 + $0x48] sm:$0xff]
  %v56 = vld [vmem:[%s35 + $0x50] sm:$0xff]
  %v57 = vld [vmem:[%s35 + $0x58] sm:$0xff]
  %v58 = vld [vmem:[%s1] sm:$0x7]
  %v59 = vld [vmem:[%s1 + $0x4] sm:$0x7]
  %v60 = vadd.f32 %v46, %v47
  %v61 = vrot.slane %v60, 4
  %v62 = vadd.f32 %v60, %v61
  %v63 = vrot.slane %v62, 2
  %v64 = vadd.f32 %v62, %v63
  %v65 = vrot.slane %v64, 1
  %v66 = vadd.f32 %v64, %v65
  %v67 = vadd.f32 %v48, %v49
  %v68 = vrot.slane %v67, 4
  %v69 = vadd.f32 %v67, %v68
  %v70 = vrot.slane %v69, 2
  %v71 = vadd.f32 %v69, %v70
  %v72 = vrot.slane %v71, 1
  %v73 = vadd.f32 %v71, %v72
  %v74 = vadd.f32 %v50, %v51
  %v75 = vrot.slane %v74, 4
  %v76 = vadd.f32 %v74, %v75
  %v77 = vrot.slane %v76, 2
  %v78 = vadd.f32 %v76, %v77
  %v79 = vrot.slane %v78, 1
  %v80 = vadd.f32 %v78, %v79
  %v81 = vadd.f32 %v52, %v53
  %v82 = vrot.slane %v81, 4
  %v83 = vadd.f32 %v81, %v82
  %v84 = vrot.slane %v83, 2
  %v85 = vadd.f32 %v83, %v84
  %v86 = vrot.slane %v85, 1
  %v87 = vadd.f32 %v85, %v86
  %v88 = vadd.f32 %v54, %v55
  %v89 = vrot.slane %v88, 4
  %v90 = vadd.f32 %v88, %v89
  %v91 = vrot.slane %v90, 2
  %v92 = vadd.f32 %v90, %v91
  %v93 = vrot.slane %v92, 1
  %v94 = vadd.f32 %v92, %v93
  %v95 = vadd.f32 %v56, %v57
  %v96 = vrot.slane %v95, 4
  %v97 = vadd.f32 %v95, %v96
  %v98 = vrot.slane %v97, 2
  %v99 = vadd.f32 %v97, %v98
  %v100 = vrot.slane %v99, 1
  %v101 = vadd.f32 %v99, %v100
  %vm108 = vcmask 1041409
  %v109 = vsel %vm108, %v73, %v66
  %vm110 = vcmask 1042434
  %v111 = vsel %vm110, %v80, %v109
  %v112 = vsel %vm108, %v94, %v87
  %v113 = vsel %vm110, %v101, %v112
  %v116 = vadd.f32 %v58, %v111
  %v117 = vadd.f32 %v59, %v113
  %118 = vst [vmem:[%s1] sm:$0x7] %v116
  %119 = vst [vmem:[%s1 + $0x4] sm:$0x7] %v117
  // Predicated region
  $region10: #{head_net_forward.2} parent=0 // pred_check
    _
  $region11: #{head_net_forward.2} parent=0 // pred_check_branch
    %121 = sbr.rel (0) target = $region13
  $region12: #{head_net_forward.2} parent=0 // pred_region
    _
  $region13: #{head_net_forward.2} parent=0 // pred_fallthru
    _
  // Predicated region
  $region14: #{head_net_forward.2} parent=0 // pred_check
    _
  $region15: #{head_net_forward.2} parent=0 // pred_check_branch
    %123 = sbr.rel (0) target = $region17
  $region16: #{head_net_forward.2} parent=0 // pred_region
    _
  $region17: #{head_net_forward.2} parent=0 // pred_fallthru
    _

// kernel: head_net_forward.3
$region0: #{head_net_forward.3}
  #allocation0 [shape = 'u32[]', space=smem, size = 0x4, offset = 0x4, fixed_abs, tag = 'smem constant byte address 0x4 - core index']
  #allocation1 [shape = 'u32[72,128]{1,0:T(1,128)}', space=vmem, size = 0x9000, scoped, tag = 'internal scratch']
  %s0 = inlined_call_operand.vmem [shape: f32[1,2,3,128], index: 0, kind: input, shape index: {}]
  %s1 = inlined_call_operand.vmem [shape: f32[2,32,58], index: 1, kind: input, shape index: {}]
  %s2 = inlined_call_operand.vmem [shape: f32[3,512], index: 2, kind: input, shape index: {}]
  %s3 = inlined_call_operand.vmem [shape: f32[1,512], index: 3, kind: input, shape index: {}]
  %s4 = inlined_call_operand.vmem [shape: f32[58,20], index: 4, kind: input, shape index: {}]
  %s5 = inlined_call_operand.vmem [shape: f32[1,1,20], index: 5, kind: input, shape index: {}]
  %s6 = inlined_call_operand.vmem [shape: f32[32,10], index: 6, kind: input, shape index: {}]
  %s7 = inlined_call_operand.vmem [shape: f32[1,1,10], index: 7, kind: input, shape index: {}]
  %s8 = inlined_call_operand.vmem [shape: f32[512,128], index: 8, kind: input, shape index: {}]
  %s9 = inlined_call_operand.vmem [shape: f32[200,128], index: 9, kind: input, shape index: {}]
  %s10 = inlined_call_operand.vmem [shape: f32[1,128], index: 10, kind: input, shape index: {}]
  %s11 = inlined_call_operand.hbm [shape: f32[2,128], index: 11, kind: output, shape index: {}]
  %s12 = sld [smem:[#allocation0]]
  $region54: #{head_net_forward.3} parent=0
    _
  %s14 = ssub.s32 1, %s12
  %s15 = scalar_select 0, %s14, %s12
  $region1: #{head_net_forward.3} parent=0
    #allocation2 [shape = 'u8[1024]{0}', space=vmem, size = 0x400, scoped, tag = 'output window, operand 0, single buffered']
    #allocation3 [shape = 's32[1]{0}', space=sflag, size = 0x4, scoped, tag = 'scoped memory for head_net_forward.3']
    %16 = vsyncpa [#allocation3], 0
    // Predicated region
    $region2: #{head_net_forward.3} parent=1 // pred_check
      _
    $region3: #{head_net_forward.3} parent=1 // pred_check_branch
      %18 = sbr.rel (0) target = $region5
    $region4: #{head_net_forward.3} parent=1 // pred_region
      _
    $region5: #{head_net_forward.3} parent=1 // pred_fallthru
      _
    // Predicated region
    $region6: #{head_net_forward.3} parent=1 // pred_check
      _
    $region7: #{head_net_forward.3} parent=1 // pred_check_branch
      %20 = sbr.rel (0) target = $region9
    $region8: #{head_net_forward.3} parent=1 // pred_region
      _
    $region9: #{head_net_forward.3} parent=1 // pred_fallthru
      _
    // Predicated region
    $region10: #{head_net_forward.3} parent=1 // pred_check
      _
    $region11: #{head_net_forward.3} parent=1 // pred_check_branch
      %22 = sbr.rel (0) target = $region13
    $region12: #{head_net_forward.3} parent=1 // pred_region
      _
    $region13: #{head_net_forward.3} parent=1 // pred_fallthru
      _
    // Predicated region
    $region14: #{head_net_forward.3} parent=1 // pred_check
      _
    $region15: #{head_net_forward.3} parent=1 // pred_check_branch
      %24 = sbr.rel (0) target = $region17
    $region16: #{head_net_forward.3} parent=1 // pred_region
      _
    $region17: #{head_net_forward.3} parent=1 // pred_fallthru
      _
    // Predicated region
    $region18: #{head_net_forward.3} parent=1 // pred_check
      _
    $region19: #{head_net_forward.3} parent=1 // pred_check_branch
      %26 = sbr.rel (0) target = $region21
    $region20: #{head_net_forward.3} parent=1 // pred_region
      _
    $region21: #{head_net_forward.3} parent=1 // pred_fallthru
      _
    // Predicated region
    $region22: #{head_net_forward.3} parent=1 // pred_check
      _
    $region23: #{head_net_forward.3} parent=1 // pred_check_branch
      %28 = sbr.rel (0) target = $region25
    $region24: #{head_net_forward.3} parent=1 // pred_region
      _
    $region25: #{head_net_forward.3} parent=1 // pred_fallthru
      _
    // Predicated region
    $region26: #{head_net_forward.3} parent=1 // pred_check
      _
    $region27: #{head_net_forward.3} parent=1 // pred_check_branch
      %30 = sbr.rel (0) target = $region29
    $region28: #{head_net_forward.3} parent=1 // pred_region
      _
    $region29: #{head_net_forward.3} parent=1 // pred_fallthru
      _
    // Predicated region
    $region30: #{head_net_forward.3} parent=1 // pred_check
      _
    $region31: #{head_net_forward.3} parent=1 // pred_check_branch
      %32 = sbr.rel (0) target = $region33
    $region32: #{head_net_forward.3} parent=1 // pred_region
      _
    $region33: #{head_net_forward.3} parent=1 // pred_fallthru
      _
    // Predicated region
    $region34: #{head_net_forward.3} parent=1 // pred_check
      _
    $region35: #{head_net_forward.3} parent=1 // pred_check_branch
      %34 = sbr.rel (0) target = $region37
    $region36: #{head_net_forward.3} parent=1 // pred_region
      _
    $region37: #{head_net_forward.3} parent=1 // pred_fallthru
      _
    // Predicated region
    $region38: #{head_net_forward.3} parent=1 // pred_check
      _
    $region39: #{head_net_forward.3} parent=1 // pred_check_branch
      %36 = sbr.rel (0) target = $region41
    $region40: #{head_net_forward.3} parent=1 // pred_region
      _
    $region41: #{head_net_forward.3} parent=1 // pred_fallthru
      _
    // Predicated region
    $region42: #{head_net_forward.3} parent=1 // pred_check
      _
    $region43: #{head_net_forward.3} parent=1 // pred_check_branch
      %38 = sbr.rel (0) target = $region45
    $region44: #{head_net_forward.3} parent=1 // pred_region
      _
    $region45: #{head_net_forward.3} parent=1 // pred_fallthru
      _
    %v39 = vld [vmem:[%s0] sm:$0x7]
    %v40 = vld [vmem:[%s0 + $0x4] sm:$0x7]
    %v41 = vadd.f32 %v39, 0.0
    %v42 = vadd.f32 %v40, 0.0
    %vm43 = vcmask 1042432
    %v44 = vsel %vm43, %v41, 0.0
    %45 = vadd.xlane.f32.xlu0 %v44
    %v46 = vpop.xlane.xlu0 %45
    %v47 = vsel %vm43, %v42, 0.0
    %48 = vadd.xlane.f32.xlu0 %v47
    %v49 = vpop.xlane.xlu0 %48
    %v50 = vmul.f32 %v46, 0.00048828125
    %v51 = vmul.f32 %v49, 0.00048828125
    %v52 = vld [vmem:[%s2] sm:$0x77]
    %v53 = vld [vmem:[%s2 + $0x8] sm:$0x77]
    %v54 = vperm.slane %v50, 0
    %v55 = vperm.slane %v51, 0
    %v58 = vperm.slane %v52, 0
    %v59 = vperm.slane %v52, 4
    %v60 = vperm.slane %v53, 0
    %v61 = vperm.slane %v53, 4
    %v66 = vperm.slane %v58, 0
    %v67 = vperm.slane %v59, 0
    %v68 = vperm.slane %v60, 0
    %v69 = vperm.slane %v61, 0
    %v74 = vlaneseq
    %v75 = vshrl.u32 %v74, 7
    %77 = vset.pattern.permute.xlu0 %v75
    %78 = vperm.xlu0 %77, %v66
    %v79 = vpop.permute.xlu0 %78
    %v80 = vlaneseq
    %v81 = vshrl.u32 %v80, 7
    %v82 = vadd.s32 %v81, 8
    %83 = vset.pattern.permute.xlu0 %v82
    %84 = vperm.xlu0 %83, %v66
    %v85 = vpop.permute.xlu0 %84
    %v86 = vlaneseq
    %v87 = vshrl.u32 %v86, 7
    %v88 = vadd.s32 %v87, 16
    %89 = vset.pattern.permute.xlu0 %v88
    %90 = vperm.xlu0 %89, %v66
    %v91 = vpop.permute.xlu0 %90
    %v92 = vlaneseq
    %v93 = vshrl.u32 %v92, 7
    %v94 = vadd.s32 %v93, 24
    %95 = vset.pattern.permute.xlu0 %v94
    %96 = vperm.xlu0 %95, %v66
    %v97 = vpop.permute.xlu0 %96
    %v98 = vlaneseq
    %v99 = vshrl.u32 %v98, 7
    %v100 = vadd.s32 %v99, 32
    %101 = vset.pattern.permute.xlu0 %v100
    %102 = vperm.xlu0 %101, %v66
    %v103 = vpop.permute.xlu0 %102
    %v104 = vlaneseq
    %v105 = vshrl.u32 %v104, 7
    %v106 = vadd.s32 %v105, 40
    %107 = vset.pattern.permute.xlu0 %v106
    %108 = vperm.xlu0 %107, %v66
    %v109 = vpop.permute.xlu0 %108
    %v110 = vlaneseq
    %v111 = vshrl.u32 %v110, 7
    %v112 = vadd.s32 %v111, 48
    %113 = vset.pattern.permute.xlu0 %v112
    %114 = vperm.xlu0 %113, %v66
    %v115 = vpop.permute.xlu0 %114
    %v116 = vlaneseq
    %v117 = vshrl.u32 %v116, 7
    %v118 = vadd.s32 %v117, 56
    %119 = vset.pattern.permute.xlu0 %v118
    %120 = vperm.xlu0 %119, %v66
    %v121 = vpop.permute.xlu0 %120
    %v122 = vlaneseq
    %v123 = vshrl.u32 %v122, 7
    %v124 = vadd.s32 %v123, 64
    %125 = vset.pattern.permute.xlu0 %v124
    %126 = vperm.xlu0 %125, %v66
    %v127 = vpop.permute.xlu0 %126
    %v128 = vlaneseq
    %v129 = vshrl.u32 %v128, 7
    %v130 = vadd.s32 %v129, 72
    %131 = vset.pattern.permute.xlu0 %v130
    %132 = vperm.xlu0 %131, %v66
    %v133 = vpop.permute.xlu0 %132
    %v134 = vlaneseq
    %v135 = vshrl.u32 %v134, 7
    %v136 = vadd.s32 %v135, 80
    %137 = vset.pattern.permute.xlu0 %v136
    %138 = vperm.xlu0 %137, %v66
    %v139 = vpop.permute.xlu0 %138
    %v140 = vlaneseq
    %v141 = vshrl.u32 %v140, 7
    %v142 = vadd.s32 %v141, 88
    %143 = vset.pattern.permute.xlu0 %v142
    %144 = vperm.xlu0 %143, %v66
    %v145 = vpop.permute.xlu0 %144
    %v146 = vlaneseq
    %v147 = vshrl.u32 %v146, 7
    %v148 = vadd.s32 %v147, 96
    %149 = vset.pattern.permute.xlu0 %v148
    %150 = vperm.xlu0 %149, %v66
    %v151 = vpop.permute.xlu0 %150
    %v152 = vlaneseq
    %v153 = vshrl.u32 %v152, 7
    %v154 = vadd.s32 %v153, 104
    %155 = vset.pattern.permute.xlu0 %v154
    %156 = vperm.xlu0 %155, %v66
    %v157 = vpop.permute.xlu0 %156
    %v158 = vlaneseq
    %v159 = vshrl.u32 %v158, 7
    %v160 = vadd.s32 %v159, 112
    %161 = vset.pattern.permute.xlu0 %v160
    %162 = vperm.xlu0 %161, %v66
    %v163 = vpop.permute.xlu0 %162
    %v164 = vlaneseq
    %v165 = vshrl.u32 %v164, 7
    %v166 = vadd.s32 %v165, 120
    %167 = vset.pattern.permute.xlu0 %v166
    %168 = vperm.xlu0 %167, %v66
    %v169 = vpop.permute.xlu0 %168
    %v170 = vlaneseq
    %v171 = vshrl.u32 %v170, 7
    %173 = vset.pattern.permute.xlu0 %v171
    %174 = vperm.xlu0 %173, %v67
    %v175 = vpop.permute.xlu0 %174
    %v176 = vlaneseq
    %v177 = vshrl.u32 %v176, 7
    %v178 = vadd.s32 %v177, 8
    %179 = vset.pattern.permute.xlu0 %v178
    %180 = vperm.xlu0 %179, %v67
    %v181 = vpop.permute.xlu0 %180
    %v182 = vlaneseq
    %v183 = vshrl.u32 %v182, 7
    %v184 = vadd.s32 %v183, 16
    %185 = vset.pattern.permute.xlu0 %v184
    %186 = vperm.xlu0 %185, %v67
    %v187 = vpop.permute.xlu0 %186
    %v188 = vlaneseq
    %v189 = vshrl.u32 %v188, 7
    %v190 = vadd.s32 %v189, 24
    %191 = vset.pattern.permute.xlu0 %v190
    %192 = vperm.xlu0 %191, %v67
    %v193 = vpop.permute.xlu0 %192
    %v194 = vlaneseq
    %v195 = vshrl.u32 %v194, 7
    %v196 = vadd.s32 %v195, 32
    %197 = vset.pattern.permute.xlu0 %v196
    %198 = vperm.xlu0 %197, %v67
    %v199 = vpop.permute.xlu0 %198
    %v200 = vlaneseq
    %v201 = vshrl.u32 %v200, 7
    %v202 = vadd.s32 %v201, 40
    %203 = vset.pattern.permute.xlu0 %v202
    %204 = vperm.xlu0 %203, %v67
    %v205 = vpop.permute.xlu0 %204
    %v206 = vlaneseq
    %v207 = vshrl.u32 %v206, 7
    %v208 = vadd.s32 %v207, 48
    %209 = vset.pattern.permute.xlu0 %v208
    %210 = vperm.xlu0 %209, %v67
    %v211 = vpop.permute.xlu0 %210
    %v212 = vlaneseq
    %v213 = vshrl.u32 %v212, 7
    %v214 = vadd.s32 %v213, 56
    %215 = vset.pattern.permute.xlu0 %v214
    %216 = vperm.xlu0 %215, %v67
    %v217 = vpop.permute.xlu0 %216
    %v218 = vlaneseq
    %v219 = vshrl.u32 %v218, 7
    %v220 = vadd.s32 %v219, 64
    %221 = vset.pattern.permute.xlu0 %v220
    %222 = vperm.xlu0 %221, %v67
    %v223 = vpop.permute.xlu0 %222
    %v224 = vlaneseq
    %v225 = vshrl.u32 %v224, 7
    %v226 = vadd.s32 %v225, 72
    %227 = vset.pattern.permute.xlu0 %v226
    %228 = vperm.xlu0 %227, %v67
    %v229 = vpop.permute.xlu0 %228
    %v230 = vlaneseq
    %v231 = vshrl.u32 %v230, 7
    %v232 = vadd.s32 %v231, 80
    %233 = vset.pattern.permute.xlu0 %v232
    %234 = vperm.xlu0 %233, %v67
    %v235 = vpop.permute.xlu0 %234
    %v236 = vlaneseq
    %v237 = vshrl.u32 %v236, 7
    %v238 = vadd.s32 %v237, 88
    %239 = vset.pattern.permute.xlu0 %v238
    %240 = vperm.xlu0 %239, %v67
    %v241 = vpop.permute.xlu0 %240
    %v242 = vlaneseq
    %v243 = vshrl.u32 %v242, 7
    %v244 = vadd.s32 %v243, 96
    %245 = vset.pattern.permute.xlu0 %v244
    %246 = vperm.xlu0 %245, %v67
    %v247 = vpop.permute.xlu0 %246
    %v248 = vlaneseq
    %v249 = vshrl.u32 %v248, 7
    %v250 = vadd.s32 %v249, 104
    %251 = vset.pattern.permute.xlu0 %v250
    %252 = vperm.xlu0 %251, %v67
    %v253 = vpop.permute.xlu0 %252
    %v254 = vlaneseq
    %v255 = vshrl.u32 %v254, 7
    %v256 = vadd.s32 %v255, 112
    %257 = vset.pattern.permute.xlu0 %v256
    %258 = vperm.xlu0 %257, %v67
    %v259 = vpop.permute.xlu0 %258
    %v260 = vlaneseq
    %v261 = vshrl.u32 %v260, 7
    %v262 = vadd.s32 %v261, 120
    %263 = vset.pattern.permute.xlu0 %v262
    %264 = vperm.xlu0 %263, %v67
    %v265 = vpop.permute.xlu0 %264
    %v266 = vlaneseq
    %v267 = vshrl.u32 %v266, 7
    %269 = vset.pattern.permute.xlu0 %v267
    %270 = vperm.xlu0 %269, %v68
    %v271 = vpop.permute.xlu0 %270
    %v272 = vlaneseq
    %v273 = vshrl.u32 %v272, 7
    %v274 = vadd.s32 %v273, 8
    %275 = vset.pattern.permute.xlu0 %v274
    %276 = vperm.xlu0 %275, %v68
    %v277 = vpop.permute.xlu0 %276
    %v278 = vlaneseq
    %v279 = vshrl.u32 %v278, 7
    %v280 = vadd.s32 %v279, 16
    %281 = vset.pattern.permute.xlu0 %v280
    %282 = vperm.xlu0 %281, %v68
    %v283 = vpop.permute.xlu0 %282
    %v284 = vlaneseq
    %v285 = vshrl.u32 %v284, 7
    %v286 = vadd.s32 %v285, 24
    %287 = vset.pattern.permute.xlu0 %v286
    %288 = vperm.xlu0 %287, %v68
    %v289 = vpop.permute.xlu0 %288
    %v290 = vlaneseq
    %v291 = vshrl.u32 %v290, 7
    %v292 = vadd.s32 %v291, 32
    %293 = vset.pattern.permute.xlu0 %v292
    %294 = vperm.xlu0 %293, %v68
    %v295 = vpop.permute.xlu0 %294
    %v296 = vlaneseq
    %v297 = vshrl.u32 %v296, 7
    %v298 = vadd.s32 %v297, 40
    %299 = vset.pattern.permute.xlu0 %v298
    %300 = vperm.xlu0 %299, %v68
    %v301 = vpop.permute.xlu0 %300
    %v302 = vlaneseq
    %v303 = vshrl.u32 %v302, 7
    %v304 = vadd.s32 %v303, 48
    %305 = vset.pattern.permute.xlu0 %v304
    %306 = vperm.xlu0 %305, %v68
    %v307 = vpop.permute.xlu0 %306
    %v308 = vlaneseq
    %v309 = vshrl.u32 %v308, 7
    %v310 = vadd.s32 %v309, 56
    %311 = vset.pattern.permute.xlu0 %v310
    %312 = vperm.xlu0 %311, %v68
    %v313 = vpop.permute.xlu0 %312
    %v314 = vlaneseq
    %v315 = vshrl.u32 %v314, 7
    %v316 = vadd.s32 %v315, 64
    %317 = vset.pattern.permute.xlu0 %v316
    %318 = vperm.xlu0 %317, %v68
    %v319 = vpop.permute.xlu0 %318
    %v320 = vlaneseq
    %v321 = vshrl.u32 %v320, 7
    %v322 = vadd.s32 %v321, 72
    %323 = vset.pattern.permute.xlu0 %v322
    %324 = vperm.xlu0 %323, %v68
    %v325 = vpop.permute.xlu0 %324
    %v326 = vlaneseq
    %v327 = vshrl.u32 %v326, 7
    %v328 = vadd.s32 %v327, 80
    %329 = vset.pattern.permute.xlu0 %v328
    %330 = vperm.xlu0 %329, %v68
    %v331 = vpop.permute.xlu0 %330
    %v332 = vlaneseq
    %v333 = vshrl.u32 %v332, 7
    %v334 = vadd.s32 %v333, 88
    %335 = vset.pattern.permute.xlu0 %v334
    %336 = vperm.xlu0 %335, %v68
    %v337 = vpop.permute.xlu0 %336
    %v338 = vlaneseq
    %v339 = vshrl.u32 %v338, 7
    %v340 = vadd.s32 %v339, 96
    %341 = vset.pattern.permute.xlu0 %v340
    %342 = vperm.xlu0 %341, %v68
    %v343 = vpop.permute.xlu0 %342
    %v344 = vlaneseq
    %v345 = vshrl.u32 %v344, 7
    %v346 = vadd.s32 %v345, 104
    %347 = vset.pattern.permute.xlu0 %v346
    %348 = vperm.xlu0 %347, %v68
    %v349 = vpop.permute.xlu0 %348
    %v350 = vlaneseq
    %v351 = vshrl.u32 %v350, 7
    %v352 = vadd.s32 %v351, 112
    %353 = vset.pattern.permute.xlu0 %v352
    %354 = vperm.xlu0 %353, %v68
    %v355 = vpop.permute.xlu0 %354
    %v356 = vlaneseq
    %v357 = vshrl.u32 %v356, 7
    %v358 = vadd.s32 %v357, 120
    %359 = vset.pattern.permute.xlu0 %v358
    %360 = vperm.xlu0 %359, %v68
    %v361 = vpop.permute.xlu0 %360
    %v362 = vlaneseq
    %v363 = vshrl.u32 %v362, 7
    %365 = vset.pattern.permute.xlu0 %v363
    %366 = vperm.xlu0 %365, %v69
    %v367 = vpop.permute.xlu0 %366
    %v368 = vlaneseq
    %v369 = vshrl.u32 %v368, 7
    %v370 = vadd.s32 %v369, 8
    %371 = vset.pattern.permute.xlu0 %v370
    %372 = vperm.xlu0 %371, %v69
    %v373 = vpop.permute.xlu0 %372
    %v374 = vlaneseq
    %v375 = vshrl.u32 %v374, 7
    %v376 = vadd.s32 %v375, 16
    %377 = vset.pattern.permute.xlu0 %v376
    %378 = vperm.xlu0 %377, %v69
    %v379 = vpop.permute.xlu0 %378
    %v380 = vlaneseq
    %v381 = vshrl.u32 %v380, 7
    %v382 = vadd.s32 %v381, 24
    %383 = vset.pattern.permute.xlu0 %v382
    %384 = vperm.xlu0 %383, %v69
    %v385 = vpop.permute.xlu0 %384
    %v386 = vlaneseq
    %v387 = vshrl.u32 %v386, 7
    %v388 = vadd.s32 %v387, 32
    %389 = vset.pattern.permute.xlu0 %v388
    %390 = vperm.xlu0 %389, %v69
    %v391 = vpop.permute.xlu0 %390
    %v392 = vlaneseq
    %v393 = vshrl.u32 %v392, 7
    %v394 = vadd.s32 %v393, 40
    %395 = vset.pattern.permute.xlu0 %v394
    %396 = vperm.xlu0 %395, %v69
    %v397 = vpop.permute.xlu0 %396
    %v398 = vlaneseq
    %v399 = vshrl.u32 %v398, 7
    %v400 = vadd.s32 %v399, 48
    %401 = vset.pattern.permute.xlu0 %v400
    %402 = vperm.xlu0 %401, %v69
    %v403 = vpop.permute.xlu0 %402
    %v404 = vlaneseq
    %v405 = vshrl.u32 %v404, 7
    %v406 = vadd.s32 %v405, 56
    %407 = vset.pattern.permute.xlu0 %v406
    %408 = vperm.xlu0 %407, %v69
    %v409 = vpop.permute.xlu0 %408
    %v410 = vlaneseq
    %v411 = vshrl.u32 %v410, 7
    %v412 = vadd.s32 %v411, 64
    %413 = vset.pattern.permute.xlu0 %v412
    %414 = vperm.xlu0 %413, %v69
    %v415 = vpop.permute.xlu0 %414
    %v416 = vlaneseq
    %v417 = vshrl.u32 %v416, 7
    %v418 = vadd.s32 %v417, 72
    %419 = vset.pattern.permute.xlu0 %v418
    %420 = vperm.xlu0 %419, %v69
    %v421 = vpop.permute.xlu0 %420
    %v422 = vlaneseq
    %v423 = vshrl.u32 %v422, 7
    %v424 = vadd.s32 %v423, 80
    %425 = vset.pattern.permute.xlu0 %v424
    %426 = vperm.xlu0 %425, %v69
    %v427 = vpop.permute.xlu0 %426
    %v428 = vlaneseq
    %v429 = vshrl.u32 %v428, 7
    %v430 = vadd.s32 %v429, 88
    %431 = vset.pattern.permute.xlu0 %v430
    %432 = vperm.xlu0 %431, %v69
    %v433 = vpop.permute.xlu0 %432
    %v434 = vlaneseq
    %v435 = vshrl.u32 %v434, 7
    %v436 = vadd.s32 %v435, 96
    %437 = vset.pattern.permute.xlu0 %v436
    %438 = vperm.xlu0 %437, %v69
    %v439 = vpop.permute.xlu0 %438
    %v440 = vlaneseq
    %v441 = vshrl.u32 %v440, 7
    %v442 = vadd.s32 %v441, 104
    %443 = vset.pattern.permute.xlu0 %v442
    %444 = vperm.xlu0 %443, %v69
    %v445 = vpop.permute.xlu0 %444
    %v446 = vlaneseq
    %v447 = vshrl.u32 %v446, 7
    %v448 = vadd.s32 %v447, 112
    %449 = vset.pattern.permute.xlu0 %v448
    %450 = vperm.xlu0 %449, %v69
    %v451 = vpop.permute.xlu0 %450
    %v452 = vlaneseq
    %v453 = vshrl.u32 %v452, 7
    %v454 = vadd.s32 %v453, 120
    %455 = vset.pattern.permute.xlu0 %v454
    %456 = vperm.xlu0 %455, %v69
    %v457 = vpop.permute.xlu0 %456
    %v522 = vmul.f32 %v54, %v79
    %v523 = vmul.f32 %v54, %v85
    %v524 = vmul.f32 %v54, %v91
    %v525 = vmul.f32 %v54, %v97
    %v526 = vmul.f32 %v54, %v103
    %v527 = vmul.f32 %v54, %v109
    %v528 = vmul.f32 %v54, %v115
    %v529 = vmul.f32 %v54, %v121
    %v530 = vmul.f32 %v54, %v127
    %v531 = vmul.f32 %v54, %v133
    %v532 = vmul.f32 %v54, %v139
    %v533 = vmul.f32 %v54, %v145
    %v534 = vmul.f32 %v54, %v151
    %v535 = vmul.f32 %v54, %v157
    %v536 = vmul.f32 %v54, %v163
    %v537 = vmul.f32 %v54, %v169
    %v538 = vmul.f32 %v54, %v175
    %v539 = vmul.f32 %v54, %v181
    %v540 = vmul.f32 %v54, %v187
    %v541 = vmul.f32 %v54, %v193
    %v542 = vmul.f32 %v54, %v199
    %v543 = vmul.f32 %v54, %v205
    %v544 = vmul.f32 %v54, %v211
    %v545 = vmul.f32 %v54, %v217
    %v546 = vmul.f32 %v54, %v223
    %v547 = vmul.f32 %v54, %v229
    %v548 = vmul.f32 %v54, %v235
    %v549 = vmul.f32 %v54, %v241
    %v550 = vmul.f32 %v54, %v247
    %v551 = vmul.f32 %v54, %v253
    %v552 = vmul.f32 %v54, %v259
    %v553 = vmul.f32 %v54, %v265
    %v554 = vmul.f32 %v54, %v271
    %v555 = vmul.f32 %v54, %v277
    %v556 = vmul.f32 %v54, %v283
    %v557 = vmul.f32 %v54, %v289
    %v558 = vmul.f32 %v54, %v295
    %v559 = vmul.f32 %v54, %v301
    %v560 = vmul.f32 %v54, %v307
    %v561 = vmul.f32 %v54, %v313
    %v562 = vmul.f32 %v54, %v319
    %v563 = vmul.f32 %v54, %v325
    %v564 = vmul.f32 %v54, %v331
    %v565 = vmul.f32 %v54, %v337
    %v566 = vmul.f32 %v54, %v343
    %v567 = vmul.f32 %v54, %v349
    %v568 = vmul.f32 %v54, %v355
    %v569 = vmul.f32 %v54, %v361
    %v570 = vmul.f32 %v54, %v367
    %v571 = vmul.f32 %v54, %v373
    %v572 = vmul.f32 %v54, %v379
    %v573 = vmul.f32 %v54, %v385
    %v574 = vmul.f32 %v54, %v391
    %v575 = vmul.f32 %v54, %v397
    %v576 = vmul.f32 %v54, %v403
    %v577 = vmul.f32 %v54, %v409
    %v578 = vmul.f32 %v54, %v415
    %v579 = vmul.f32 %v54, %v421
    %v580 = vmul.f32 %v54, %v427
    %v581 = vmul.f32 %v54, %v433
    %v582 = vmul.f32 %v54, %v439
    %v583 = vmul.f32 %v54, %v445
    %v584 = vmul.f32 %v54, %v451
    %v585 = vmul.f32 %v54, %v457
    %v586 = vmul.f32 %v55, %v79
    %v587 = vmul.f32 %v55, %v85
    %v588 = vmul.f32 %v55, %v91
    %v589 = vmul.f32 %v55, %v97
    %v590 = vmul.f32 %v55, %v103
    %v591 = vmul.f32 %v55, %v109
    %v592 = vmul.f32 %v55, %v115
    %v593 = vmul.f32 %v55, %v121
    %v594 = vmul.f32 %v55, %v127
    %v595 = vmul.f32 %v55, %v133
    %v596 = vmul.f32 %v55, %v139
    %v597 = vmul.f32 %v55, %v145
    %v598 = vmul.f32 %v55, %v151
    %v599 = vmul.f32 %v55, %v157
    %v600 = vmul.f32 %v55, %v163
    %v601 = vmul.f32 %v55, %v169
    %v602 = vmul.f32 %v55, %v175
    %v603 = vmul.f32 %v55, %v181
    %v604 = vmul.f32 %v55, %v187
    %v605 = vmul.f32 %v55, %v193
    %v606 = vmul.f32 %v55, %v199
    %v607 = vmul.f32 %v55, %v205
    %v608 = vmul.f32 %v55, %v211
    %v609 = vmul.f32 %v55, %v217
    %v610 = vmul.f32 %v55, %v223
    %v611 = vmul.f32 %v55, %v229
    %v612 = vmul.f32 %v55, %v235
    %v613 = vmul.f32 %v55, %v241
    %v614 = vmul.f32 %v55, %v247
    %v615 = vmul.f32 %v55, %v253
    %v616 = vmul.f32 %v55, %v259
    %v617 = vmul.f32 %v55, %v265
    %v618 = vmul.f32 %v55, %v271
    %v619 = vmul.f32 %v55, %v277
    %v620 = vmul.f32 %v55, %v283
    %v621 = vmul.f32 %v55, %v289
    %v622 = vmul.f32 %v55, %v295
    %v623 = vmul.f32 %v55, %v301
    %v624 = vmul.f32 %v55, %v307
    %v625 = vmul.f32 %v55, %v313
    %v626 = vmul.f32 %v55, %v319
    %v627 = vmul.f32 %v55, %v325
    %v628 = vmul.f32 %v55, %v331
    %v629 = vmul.f32 %v55, %v337
    %v630 = vmul.f32 %v55, %v343
    %v631 = vmul.f32 %v55, %v349
    %v632 = vmul.f32 %v55, %v355
    %v633 = vmul.f32 %v55, %v361
    %v634 = vmul.f32 %v55, %v367
    %v635 = vmul.f32 %v55, %v373
    %v636 = vmul.f32 %v55, %v379
    %v637 = vmul.f32 %v55, %v385
    %v638 = vmul.f32 %v55, %v391
    %v639 = vmul.f32 %v55, %v397
    %v640 = vmul.f32 %v55, %v403
    %v641 = vmul.f32 %v55, %v409
    %v642 = vmul.f32 %v55, %v415
    %v643 = vmul.f32 %v55, %v421
    %v644 = vmul.f32 %v55, %v427
    %v645 = vmul.f32 %v55, %v433
    %v646 = vmul.f32 %v55, %v439
    %v647 = vmul.f32 %v55, %v445
    %v648 = vmul.f32 %v55, %v451
    %v649 = vmul.f32 %v55, %v457
    %v650 = vperm.slane %v50, 1
    %v651 = vperm.slane %v51, 1
    %v652 = vperm.slane %v52, 1
    %v653 = vperm.slane %v52, 5
    %v654 = vperm.slane %v53, 1
    %v655 = vperm.slane %v53, 5
    %v660 = vperm.slane %v652, 1
    %v661 = vperm.slane %v653, 1
    %v662 = vperm.slane %v654, 1
    %v663 = vperm.slane %v655, 1
    %v668 = vlaneseq
    %v669 = vshrl.u32 %v668, 7
    %671 = vset.pattern.permute.xlu0 %v669
    %672 = vperm.xlu0 %671, %v660
    %v673 = vpop.permute.xlu0 %672
    %v674 = vlaneseq
    %v675 = vshrl.u32 %v674, 7
    %v676 = vadd.s32 %v675, 8
    %677 = vset.pattern.permute.xlu0 %v676
    %678 = vperm.xlu0 %677, %v660
    %v679 = vpop.permute.xlu0 %678
    %v680 = vlaneseq
    %v681 = vshrl.u32 %v680, 7
    %v682 = vadd.s32 %v681, 16
    %683 = vset.pattern.permute.xlu0 %v682
    %684 = vperm.xlu0 %683, %v660
    %v685 = vpop.permute.xlu0 %684
    %v686 = vlaneseq
    %v687 = vshrl.u32 %v686, 7
    %v688 = vadd.s32 %v687, 24
    %689 = vset.pattern.permute.xlu0 %v688
    %690 = vperm.xlu0 %689, %v660
    %v691 = vpop.permute.xlu0 %690
    %v692 = vlaneseq
    %v693 = vshrl.u32 %v692, 7
    %v694 = vadd.s32 %v693, 32
    %695 = vset.pattern.permute.xlu0 %v694
    %696 = vperm.xlu0 %695, %v660
    %v697 = vpop.permute.xlu0 %696
    %v698 = vlaneseq
    %v699 = vshrl.u32 %v698, 7
    %v700 = vadd.s32 %v699, 40
    %701 = vset.pattern.permute.xlu0 %v700
    %702 = vperm.xlu0 %701, %v660
    %v703 = vpop.permute.xlu0 %702
    %v704 = vlaneseq
    %v705 = vshrl.u32 %v704, 7
    %v706 = vadd.s32 %v705, 48
    %707 = vset.pattern.permute.xlu0 %v706
    %708 = vperm.xlu0 %707, %v660
    %v709 = vpop.permute.xlu0 %708
    %v710 = vlaneseq
    %v711 = vshrl.u32 %v710, 7
    %v712 = vadd.s32 %v711, 56
    %713 = vset.pattern.permute.xlu0 %v712
    %714 = vperm.xlu0 %713, %v660
    %v715 = vpop.permute.xlu0 %714
    %v716 = vlaneseq
    %v717 = vshrl.u32 %v716, 7
    %v718 = vadd.s32 %v717, 64
    %719 = vset.pattern.permute.xlu0 %v718
    %720 = vperm.xlu0 %719, %v660
    %v721 = vpop.permute.xlu0 %720
    %v722 = vlaneseq
    %v723 = vshrl.u32 %v722, 7
    %v724 = vadd.s32 %v723, 72
    %725 = vset.pattern.permute.xlu0 %v724
    %726 = vperm.xlu0 %725, %v660
    %v727 = vpop.permute.xlu0 %726
    %v728 = vlaneseq
    %v729 = vshrl.u32 %v728, 7
    %v730 = vadd.s32 %v729, 80
    %731 = vset.pattern.permute.xlu0 %v730
    %732 = vperm.xlu0 %731, %v660
    %v733 = vpop.permute.xlu0 %732
    %v734 = vlaneseq
    %v735 = vshrl.u32 %v734, 7
    %v736 = vadd.s32 %v735, 88
    %737 = vset.pattern.permute.xlu0 %v736
    %738 = vperm.xlu0 %737, %v660
    %v739 = vpop.permute.xlu0 %738
    %v740 = vlaneseq
    %v741 = vshrl.u32 %v740, 7
    %v742 = vadd.s32 %v741, 96
    %743 = vset.pattern.permute.xlu0 %v742
    %744 = vperm.xlu0 %743, %v660
    %v745 = vpop.permute.xlu0 %744
    %v746 = vlaneseq
    %v747 = vshrl.u32 %v746, 7
    %v748 = vadd.s32 %v747, 104
    %749 = vset.pattern.permute.xlu0 %v748
    %750 = vperm.xlu0 %749, %v660
    %v751 = vpop.permute.xlu0 %750
    %v752 = vlaneseq
    %v753 = vshrl.u32 %v752, 7
    %v754 = vadd.s32 %v753, 112
    %755 = vset.pattern.permute.xlu0 %v754
    %756 = vperm.xlu0 %755, %v660
    %v757 = vpop.permute.xlu0 %756
    %v758 = vlaneseq
    %v759 = vshrl.u32 %v758, 7
    %v760 = vadd.s32 %v759, 120
    %761 = vset.pattern.permute.xlu0 %v760
    %762 = vperm.xlu0 %761, %v660
    %v763 = vpop.permute.xlu0 %762
    %v764 = vlaneseq
    %v765 = vshrl.u32 %v764, 7
    %767 = vset.pattern.permute.xlu0 %v765
    %768 = vperm.xlu0 %767, %v661
    %v769 = vpop.permute.xlu0 %768
    %v770 = vlaneseq
    %v771 = vshrl.u32 %v770, 7
    %v772 = vadd.s32 %v771, 8
    %773 = vset.pattern.permute.xlu0 %v772
    %774 = vperm.xlu0 %773, %v661
    %v775 = vpop.permute.xlu0 %774
    %v776 = vlaneseq
    %v777 = vshrl.u32 %v776, 7
    %v778 = vadd.s32 %v777, 16
    %779 = vset.pattern.permute.xlu0 %v778
    %780 = vperm.xlu0 %779, %v661
    %v781 = vpop.permute.xlu0 %780
    %v782 = vlaneseq
    %v783 = vshrl.u32 %v782, 7
    %v784 = vadd.s32 %v783, 24
    %785 = vset.pattern.permute.xlu0 %v784
    %786 = vperm.xlu0 %785, %v661
    %v787 = vpop.permute.xlu0 %786
    %v788 = vlaneseq
    %v789 = vshrl.u32 %v788, 7
    %v790 = vadd.s32 %v789, 32
    %791 = vset.pattern.permute.xlu0 %v790
    %792 = vperm.xlu0 %791, %v661
    %v793 = vpop.permute.xlu0 %792
    %v794 = vlaneseq
    %v795 = vshrl.u32 %v794, 7
    %v796 = vadd.s32 %v795, 40
    %797 = vset.pattern.permute.xlu0 %v796
    %798 = vperm.xlu0 %797, %v661
    %v799 = vpop.permute.xlu0 %798
    %v800 = vlaneseq
    %v801 = vshrl.u32 %v800, 7
    %v802 = vadd.s32 %v801, 48
    %803 = vset.pattern.permute.xlu0 %v802
    %804 = vperm.xlu0 %803, %v661
    %v805 = vpop.permute.xlu0 %804
    %v806 = vlaneseq
    %v807 = vshrl.u32 %v806, 7
    %v808 = vadd.s32 %v807, 56
    %809 = vset.pattern.permute.xlu0 %v808
    %810 = vperm.xlu0 %809, %v661
    %v811 = vpop.permute.xlu0 %810
    %v812 = vlaneseq
    %v813 = vshrl.u32 %v812, 7
    %v814 = vadd.s32 %v813, 64
    %815 = vset.pattern.permute.xlu0 %v814
    %816 = vperm.xlu0 %815, %v661
    %v817 = vpop.permute.xlu0 %816
    %v818 = vlaneseq
    %v819 = vshrl.u32 %v818, 7
    %v820 = vadd.s32 %v819, 72
    %821 = vset.pattern.permute.xlu0 %v820
    %822 = vperm.xlu0 %821, %v661
    %v823 = vpop.permute.xlu0 %822
    %v824 = vlaneseq
    %v825 = vshrl.u32 %v824, 7
    %v826 = vadd.s32 %v825, 80
    %827 = vset.pattern.permute.xlu0 %v826
    %828 = vperm.xlu0 %827, %v661
    %v829 = vpop.permute.xlu0 %828
    %v830 = vlaneseq
    %v831 = vshrl.u32 %v830, 7
    %v832 = vadd.s32 %v831, 88
    %833 = vset.pattern.permute.xlu0 %v832
    %834 = vperm.xlu0 %833, %v661
    %v835 = vpop.permute.xlu0 %834
    %v836 = vlaneseq
    %v837 = vshrl.u32 %v836, 7
    %v838 = vadd.s32 %v837, 96
    %839 = vset.pattern.permute.xlu0 %v838
    %840 = vperm.xlu0 %839, %v661
    %v841 = vpop.permute.xlu0 %840
    %v842 = vlaneseq
    %v843 = vshrl.u32 %v842, 7
    %v844 = vadd.s32 %v843, 104
    %845 = vset.pattern.permute.xlu0 %v844
    %846 = vperm.xlu0 %845, %v661
    %v847 = vpop.permute.xlu0 %846
    %v848 = vlaneseq
    %v849 = vshrl.u32 %v848, 7
    %v850 = vadd.s32 %v849, 112
    %851 = vset.pattern.permute.xlu0 %v850
    %852 = vperm.xlu0 %851, %v661
    %v853 = vpop.permute.xlu0 %852
    %v854 = vlaneseq
    %v855 = vshrl.u32 %v854, 7
    %v856 = vadd.s32 %v855, 120
    %857 = vset.pattern.permute.xlu0 %v856
    %858 = vperm.xlu0 %857, %v661
    %v859 = vpop.permute.xlu0 %858
    %v860 = vlaneseq
    %v861 = vshrl.u32 %v860, 7
    %863 = vset.pattern.permute.xlu0 %v861
    %864 = vperm.xlu0 %863, %v662
    %v865 = vpop.permute.xlu0 %864
    %v866 = vlaneseq
    %v867 = vshrl.u32 %v866, 7
    %v868 = vadd.s32 %v867, 8
    %869 = vset.pattern.permute.xlu0 %v868
    %870 = vperm.xlu0 %869, %v662
    %v871 = vpop.permute.xlu0 %870
    %v872 = vlaneseq
    %v873 = vshrl.u32 %v872, 7
    %v874 = vadd.s32 %v873, 16
    %875 = vset.pattern.permute.xlu0 %v874
    %876 = vperm.xlu0 %875, %v662
    %v877 = vpop.permute.xlu0 %876
    %v878 = vlaneseq
    %v879 = vshrl.u32 %v878, 7
    %v880 = vadd.s32 %v879, 24
    %881 = vset.pattern.permute.xlu0 %v880
    %882 = vperm.xlu0 %881, %v662
    %v883 = vpop.permute.xlu0 %882
    %v884 = vlaneseq
    %v885 = vshrl.u32 %v884, 7
    %v886 = vadd.s32 %v885, 32
    %887 = vset.pattern.permute.xlu0 %v886
    %888 = vperm.xlu0 %887, %v662
    %v889 = vpop.permute.xlu0 %888
    %v890 = vlaneseq
    %v891 = vshrl.u32 %v890, 7
    %v892 = vadd.s32 %v891, 40
    %893 = vset.pattern.permute.xlu0 %v892
    %894 = vperm.xlu0 %893, %v662
    %v895 = vpop.permute.xlu0 %894
    %v896 = vlaneseq
    %v897 = vshrl.u32 %v896, 7
    %v898 = vadd.s32 %v897, 48
    %899 = vset.pattern.permute.xlu0 %v898
    %900 = vperm.xlu0 %899, %v662
    %v901 = vpop.permute.xlu0 %900
    %v902 = vlaneseq
    %v903 = vshrl.u32 %v902, 7
    %v904 = vadd.s32 %v903, 56
    %905 = vset.pattern.permute.xlu0 %v904
    %906 = vperm.xlu0 %905, %v662
    %v907 = vpop.permute.xlu0 %906
    %v908 = vlaneseq
    %v909 = vshrl.u32 %v908, 7
    %v910 = vadd.s32 %v909, 64
    %911 = vset.pattern.permute.xlu0 %v910
    %912 = vperm.xlu0 %911, %v662
    %v913 = vpop.permute.xlu0 %912
    %v914 = vlaneseq
    %v915 = vshrl.u32 %v914, 7
    %v916 = vadd.s32 %v915, 72
    %917 = vset.pattern.permute.xlu0 %v916
    %918 = vperm.xlu0 %917, %v662
    %v919 = vpop.permute.xlu0 %918
    %v920 = vlaneseq
    %v921 = vshrl.u32 %v920, 7
    %v922 = vadd.s32 %v921, 80
    %923 = vset.pattern.permute.xlu0 %v922
    %924 = vperm.xlu0 %923, %v662
    %v925 = vpop.permute.xlu0 %924
    %v926 = vlaneseq
    %v927 = vshrl.u32 %v926, 7
    %v928 = vadd.s32 %v927, 88
    %929 = vset.pattern.permute.xlu0 %v928
    %930 = vperm.xlu0 %929, %v662
    %v931 = vpop.permute.xlu0 %930
    %v932 = vlaneseq
    %v933 = vshrl.u32 %v932, 7
    %v934 = vadd.s32 %v933, 96
    %935 = vset.pattern.permute.xlu0 %v934
    %936 = vperm.xlu0 %935, %v662
    %v937 = vpop.permute.xlu0 %936
    %v938 = vlaneseq
    %v939 = vshrl.u32 %v938, 7
    %v940 = vadd.s32 %v939, 104
    %941 = vset.pattern.permute.xlu0 %v940
    %942 = vperm.xlu0 %941, %v662
    %v943 = vpop.permute.xlu0 %942
    %v944 = vlaneseq
    %v945 = vshrl.u32 %v944, 7
    %v946 = vadd.s32 %v945, 112
    %947 = vset.pattern.permute.xlu0 %v946
    %948 = vperm.xlu0 %947, %v662
    %v949 = vpop.permute.xlu0 %948
    %v950 = vlaneseq
    %v951 = vshrl.u32 %v950, 7
    %v952 = vadd.s32 %v951, 120
    %953 = vset.pattern.permute.xlu0 %v952
    %954 = vperm.xlu0 %953, %v662
    %v955 = vpop.permute.xlu0 %954
    %v956 = vlaneseq
    %v957 = vshrl.u32 %v956, 7
    %959 = vset.pattern.permute.xlu0 %v957
    %960 = vperm.xlu0 %959, %v663
    %v961 = vpop.permute.xlu0 %960
    %v962 = vlaneseq
    %v963 = vshrl.u32 %v962, 7
    %v964 = vadd.s32 %v963, 8
    %965 = vset.pattern.permute.xlu0 %v964
    %966 = vperm.xlu0 %965, %v663
    %v967 = vpop.permute.xlu0 %966
    %v968 = vlaneseq
    %v969 = vshrl.u32 %v968, 7
    %v970 = vadd.s32 %v969, 16
    %971 = vset.pattern.permute.xlu0 %v970
    %972 = vperm.xlu0 %971, %v663
    %v973 = vpop.permute.xlu0 %972
    %v974 = vlaneseq
    %v975 = vshrl.u32 %v974, 7
    %v976 = vadd.s32 %v975, 24
    %977 = vset.pattern.permute.xlu0 %v976
    %978 = vperm.xlu0 %977, %v663
    %v979 = vpop.permute.xlu0 %978
    %v980 = vlaneseq
    %v981 = vshrl.u32 %v980, 7
    %v982 = vadd.s32 %v981, 32
    %983 = vset.pattern.permute.xlu0 %v982
    %984 = vperm.xlu0 %983, %v663
    %v985 = vpop.permute.xlu0 %984
    %v986 = vlaneseq
    %v987 = vshrl.u32 %v986, 7
    %v988 = vadd.s32 %v987, 40
    %989 = vset.pattern.permute.xlu0 %v988
    %990 = vperm.xlu0 %989, %v663
    %v991 = vpop.permute.xlu0 %990
    %v992 = vlaneseq
    %v993 = vshrl.u32 %v992, 7
    %v994 = vadd.s32 %v993, 48
    %995 = vset.pattern.permute.xlu0 %v994
    %996 = vperm.xlu0 %995, %v663
    %v997 = vpop.permute.xlu0 %996
    %v998 = vlaneseq
    %v999 = vshrl.u32 %v998, 7
    %v1000 = vadd.s32 %v999, 56
    %1001 = vset.pattern.permute.xlu0 %v1000
    %1002 = vperm.xlu0 %1001, %v663
    %v1003 = vpop.permute.xlu0 %1002
    %v1004 = vlaneseq
    %v1005 = vshrl.u32 %v1004, 7
    %v1006 = vadd.s32 %v1005, 64
    %1007 = vset.pattern.permute.xlu0 %v1006
    %1008 = vperm.xlu0 %1007, %v663
    %v1009 = vpop.permute.xlu0 %1008
    %v1010 = vlaneseq
    %v1011 = vshrl.u32 %v1010, 7
    %v1012 = vadd.s32 %v1011, 72
    %1013 = vset.pattern.permute.xlu0 %v1012
    %1014 = vperm.xlu0 %1013, %v663
    %v1015 = vpop.permute.xlu0 %1014
    %v1016 = vlaneseq
    %v1017 = vshrl.u32 %v1016, 7
    %v1018 = vadd.s32 %v1017, 80
    %1019 = vset.pattern.permute.xlu0 %v1018
    %1020 = vperm.xlu0 %1019, %v663
    %v1021 = vpop.permute.xlu0 %1020
    %v1022 = vlaneseq
    %v1023 = vshrl.u32 %v1022, 7
    %v1024 = vadd.s32 %v1023, 88
    %1025 = vset.pattern.permute.xlu0 %v1024
    %1026 = vperm.xlu0 %1025, %v663
    %v1027 = vpop.permute.xlu0 %1026
    %v1028 = vlaneseq
    %v1029 = vshrl.u32 %v1028, 7
    %v1030 = vadd.s32 %v1029, 96
    %1031 = vset.pattern.permute.xlu0 %v1030
    %1032 = vperm.xlu0 %1031, %v663
    %v1033 = vpop.permute.xlu0 %1032
    %v1034 = vlaneseq
    %v1035 = vshrl.u32 %v1034, 7
    %v1036 = vadd.s32 %v1035, 104
    %1037 = vset.pattern.permute.xlu0 %v1036
    %1038 = vperm.xlu0 %1037, %v663
    %v1039 = vpop.permute.xlu0 %1038
    %v1040 = vlaneseq
    %v1041 = vshrl.u32 %v1040, 7
    %v1042 = vadd.s32 %v1041, 112
    %1043 = vset.pattern.permute.xlu0 %v1042
    %1044 = vperm.xlu0 %1043, %v663
    %v1045 = vpop.permute.xlu0 %1044
    %v1046 = vlaneseq
    %v1047 = vshrl.u32 %v1046, 7
    %v1048 = vadd.s32 %v1047, 120
    %1049 = vset.pattern.permute.xlu0 %v1048
    %1050 = vperm.xlu0 %1049, %v663
    %v1051 = vpop.permute.xlu0 %1050
    %v1116 = vmul.f32 %v650, %v673
    %v1117 = vmul.f32 %v650, %v679
    %v1118 = vmul.f32 %v650, %v685
    %v1119 = vmul.f32 %v650, %v691
    %v1120 = vmul.f32 %v650, %v697
    %v1121 = vmul.f32 %v650, %v703
    %v1122 = vmul.f32 %v650, %v709
    %v1123 = vmul.f32 %v650, %v715
    %v1124 = vmul.f32 %v650, %v721
    %v1125 = vmul.f32 %v650, %v727
    %v1126 = vmul.f32 %v650, %v733
    %v1127 = vmul.f32 %v650, %v739
    %v1128 = vmul.f32 %v650, %v745
    %v1129 = vmul.f32 %v650, %v751
    %v1130 = vmul.f32 %v650, %v757
    %v1131 = vmul.f32 %v650, %v763
    %v1132 = vmul.f32 %v650, %v769
    %v1133 = vmul.f32 %v650, %v775
    %v1134 = vmul.f32 %v650, %v781
    %v1135 = vmul.f32 %v650, %v787
    %v1136 = vmul.f32 %v650, %v793
    %v1137 = vmul.f32 %v650, %v799
    %v1138 = vmul.f32 %v650, %v805
    %v1139 = vmul.f32 %v650, %v811
    %v1140 = vmul.f32 %v650, %v817
    %v1141 = vmul.f32 %v650, %v823
    %v1142 = vmul.f32 %v650, %v829
    %v1143 = vmul.f32 %v650, %v835
    %v1144 = vmul.f32 %v650, %v841
    %v1145 = vmul.f32 %v650, %v847
    %v1146 = vmul.f32 %v650, %v853
    %v1147 = vmul.f32 %v650, %v859
    %v1148 = vmul.f32 %v650, %v865
    %v1149 = vmul.f32 %v650, %v871
    %v1150 = vmul.f32 %v650, %v877
    %v1151 = vmul.f32 %v650, %v883
    %v1152 = vmul.f32 %v650, %v889
    %v1153 = vmul.f32 %v650, %v895
    %v1154 = vmul.f32 %v650, %v901
    %v1155 = vmul.f32 %v650, %v907
    %v1156 = vmul.f32 %v650, %v913
    %v1157 = vmul.f32 %v650, %v919
    %v1158 = vmul.f32 %v650, %v925
    %v1159 = vmul.f32 %v650, %v931
    %v1160 = vmul.f32 %v650, %v937
    %v1161 = vmul.f32 %v650, %v943
    %v1162 = vmul.f32 %v650, %v949
    %v1163 = vmul.f32 %v650, %v955
    %v1164 = vmul.f32 %v650, %v961
    %v1165 = vmul.f32 %v650, %v967
    %v1166 = vmul.f32 %v650, %v973
    %v1167 = vmul.f32 %v650, %v979
    %v1168 = vmul.f32 %v650, %v985
    %v1169 = vmul.f32 %v650, %v991
    %v1170 = vmul.f32 %v650, %v997
    %v1171 = vmul.f32 %v650, %v1003
    %v1172 = vmul.f32 %v650, %v1009
    %v1173 = vmul.f32 %v650, %v1015
    %v1174 = vmul.f32 %v650, %v1021
    %v1175 = vmul.f32 %v650, %v1027
    %v1176 = vmul.f32 %v650, %v1033
    %v1177 = vmul.f32 %v650, %v1039
    %v1178 = vmul.f32 %v650, %v1045
    %v1179 = vmul.f32 %v650, %v1051
    %v1180 = vmul.f32 %v651, %v673
    %v1181 = vmul.f32 %v651, %v679
    %v1182 = vmul.f32 %v651, %v685
    %v1183 = vmul.f32 %v651, %v691
    %v1184 = vmul.f32 %v651, %v697
    %v1185 = vmul.f32 %v651, %v703
    %v1186 = vmul.f32 %v651, %v709
    %v1187 = vmul.f32 %v651, %v715
    %v1188 = vmul.f32 %v651, %v721
    %v1189 = vmul.f32 %v651, %v727
    %v1190 = vmul.f32 %v651, %v733
    %v1191 = vmul.f32 %v651, %v739
    %v1192 = vmul.f32 %v651, %v745
    %v1193 = vmul.f32 %v651, %v751
    %v1194 = vmul.f32 %v651, %v757
    %v1195 = vmul.f32 %v651, %v763
    %v1196 = vmul.f32 %v651, %v769
    %v1197 = vmul.f32 %v651, %v775
    %v1198 = vmul.f32 %v651, %v781
    %v1199 = vmul.f32 %v651, %v787
    %v1200 = vmul.f32 %v651, %v793
    %v1201 = vmul.f32 %v651, %v799
    %v1202 = vmul.f32 %v651, %v805
    %v1203 = vmul.f32 %v651, %v811
    %v1204 = vmul.f32 %v651, %v817
    %v1205 = vmul.f32 %v651, %v823
    %v1206 = vmul.f32 %v651, %v829
    %v1207 = vmul.f32 %v651, %v835
    %v1208 = vmul.f32 %v651, %v841
    %v1209 = vmul.f32 %v651, %v847
    %v1210 = vmul.f32 %v651, %v853
    %v1211 = vmul.f32 %v651, %v859
    %v1212 = vmul.f32 %v651, %v865
    %v1213 = vmul.f32 %v651, %v871
    %v1214 = vmul.f32 %v651, %v877
    %v1215 = vmul.f32 %v651, %v883
    %v1216 = vmul.f32 %v651, %v889
    %v1217 = vmul.f32 %v651, %v895
    %v1218 = vmul.f32 %v651, %v901
    %v1219 = vmul.f32 %v651, %v907
    %v1220 = vmul.f32 %v651, %v913
    %v1221 = vmul.f32 %v651, %v919
    %v1222 = vmul.f32 %v651, %v925
    %v1223 = vmul.f32 %v651, %v931
    %v1224 = vmul.f32 %v651, %v937
    %v1225 = vmul.f32 %v651, %v943
    %v1226 = vmul.f32 %v651, %v949
    %v1227 = vmul.f32 %v651, %v955
    %v1228 = vmul.f32 %v651, %v961
    %v1229 = vmul.f32 %v651, %v967
    %v1230 = vmul.f32 %v651, %v973
    %v1231 = vmul.f32 %v651, %v979
    %v1232 = vmul.f32 %v651, %v985
    %v1233 = vmul.f32 %v651, %v991
    %v1234 = vmul.f32 %v651, %v997
    %v1235 = vmul.f32 %v651, %v1003
    %v1236 = vmul.f32 %v651, %v1009
    %v1237 = vmul.f32 %v651, %v1015
    %v1238 = vmul.f32 %v651, %v1021
    %v1239 = vmul.f32 %v651, %v1027
    %v1240 = vmul.f32 %v651, %v1033
    %v1241 = vmul.f32 %v651, %v1039
    %v1242 = vmul.f32 %v651, %v1045
    %v1243 = vmul.f32 %v651, %v1051
    %v1244 = vadd.f32 %v522, %v1116
    %v1245 = vadd.f32 %v523, %v1117
    %v1246 = vadd.f32 %v524, %v1118
    %v1247 = vadd.f32 %v525, %v1119
    %v1248 = vadd.f32 %v526, %v1120
    %v1249 = vadd.f32 %v527, %v1121
    %v1250 = vadd.f32 %v528, %v1122
    %v1251 = vadd.f32 %v529, %v1123
    %v1252 = vadd.f32 %v530, %v1124
    %v1253 = vadd.f32 %v531, %v1125
    %v1254 = vadd.f32 %v532, %v1126
    %v1255 = vadd.f32 %v533, %v1127
    %v1256 = vadd.f32 %v534, %v1128
    %v1257 = vadd.f32 %v535, %v1129
    %v1258 = vadd.f32 %v536, %v1130
    %v1259 = vadd.f32 %v537, %v1131
    %v1260 = vadd.f32 %v538, %v1132
    %v1261 = vadd.f32 %v539, %v1133
    %v1262 = vadd.f32 %v540, %v1134
    %v1263 = vadd.f32 %v541, %v1135
    %v1264 = vadd.f32 %v542, %v1136
    %v1265 = vadd.f32 %v543, %v1137
    %v1266 = vadd.f32 %v544, %v1138
    %v1267 = vadd.f32 %v545, %v1139
    %v1268 = vadd.f32 %v546, %v1140
    %v1269 = vadd.f32 %v547, %v1141
    %v1270 = vadd.f32 %v548, %v1142
    %v1271 = vadd.f32 %v549, %v1143
    %v1272 = vadd.f32 %v550, %v1144
    %v1273 = vadd.f32 %v551, %v1145
    %v1274 = vadd.f32 %v552, %v1146
    %v1275 = vadd.f32 %v553, %v1147
    %v1276 = vadd.f32 %v554, %v1148
    %v1277 = vadd.f32 %v555, %v1149
    %v1278 = vadd.f32 %v556, %v1150
    %v1279 = vadd.f32 %v557, %v1151
    %v1280 = vadd.f32 %v558, %v1152
    %v1281 = vadd.f32 %v559, %v1153
    %v1282 = vadd.f32 %v560, %v1154
    %v1283 = vadd.f32 %v561, %v1155
    %v1284 = vadd.f32 %v562, %v1156
    %v1285 = vadd.f32 %v563, %v1157
    %v1286 = vadd.f32 %v564, %v1158
    %v1287 = vadd.f32 %v565, %v1159
    %v1288 = vadd.f32 %v566, %v1160
    %v1289 = vadd.f32 %v567, %v1161
    %v1290 = vadd.f32 %v568, %v1162
    %v1291 = vadd.f32 %v569, %v1163
    %v1292 = vadd.f32 %v570, %v1164
    %v1293 = vadd.f32 %v571, %v1165
    %v1294 = vadd.f32 %v572, %v1166
    %v1295 = vadd.f32 %v573, %v1167
    %v1296 = vadd.f32 %v574, %v1168
    %v1297 = vadd.f32 %v575, %v1169
    %v1298 = vadd.f32 %v576, %v1170
    %v1299 = vadd.f32 %v577, %v1171
    %v1300 = vadd.f32 %v578, %v1172
    %v1301 = vadd.f32 %v579, %v1173
    %v1302 = vadd.f32 %v580, %v1174
    %v1303 = vadd.f32 %v581, %v1175
    %v1304 = vadd.f32 %v582, %v1176
    %v1305 = vadd.f32 %v583, %v1177
    %v1306 = vadd.f32 %v584, %v1178
    %v1307 = vadd.f32 %v585, %v1179
    %v1308 = vadd.f32 %v586, %v1180
    %v1309 = vadd.f32 %v587, %v1181
    %v1310 = vadd.f32 %v588, %v1182
    %v1311 = vadd.f32 %v589, %v1183
    %v1312 = vadd.f32 %v590, %v1184
    %v1313 = vadd.f32 %v591, %v1185
    %v1314 = vadd.f32 %v592, %v1186
    %v1315 = vadd.f32 %v593, %v1187
    %v1316 = vadd.f32 %v594, %v1188
    %v1317 = vadd.f32 %v595, %v1189
    %v1318 = vadd.f32 %v596, %v1190
    %v1319 = vadd.f32 %v597, %v1191
    %v1320 = vadd.f32 %v598, %v1192
    %v1321 = vadd.f32 %v599, %v1193
    %v1322 = vadd.f32 %v600, %v1194
    %v1323 = vadd.f32 %v601, %v1195
    %v1324 = vadd.f32 %v602, %v1196
    %v1325 = vadd.f32 %v603, %v1197
    %v1326 = vadd.f32 %v604, %v1198
    %v1327 = vadd.f32 %v605, %v1199
    %v1328 = vadd.f32 %v606, %v1200
    %v1329 = vadd.f32 %v607, %v1201
    %v1330 = vadd.f32 %v608, %v1202
    %v1331 = vadd.f32 %v609, %v1203
    %v1332 = vadd.f32 %v610, %v1204
    %v1333 = vadd.f32 %v611, %v1205
    %v1334 = vadd.f32 %v612, %v1206
    %v1335 = vadd.f32 %v613, %v1207
    %v1336 = vadd.f32 %v614, %v1208
    %v1337 = vadd.f32 %v615, %v1209
    %v1338 = vadd.f32 %v616, %v1210
    %v1339 = vadd.f32 %v617, %v1211
    %v1340 = vadd.f32 %v618, %v1212
    %v1341 = vadd.f32 %v619, %v1213
    %v1342 = vadd.f32 %v620, %v1214
    %v1343 = vadd.f32 %v621, %v1215
    %v1344 = vadd.f32 %v622, %v1216
    %v1345 = vadd.f32 %v623, %v1217
    %v1346 = vadd.f32 %v624, %v1218
    %v1347 = vadd.f32 %v625, %v1219
    %v1348 = vadd.f32 %v626, %v1220
    %v1349 = vadd.f32 %v627, %v1221
    %v1350 = vadd.f32 %v628, %v1222
    %v1351 = vadd.f32 %v629, %v1223
    %v1352 = vadd.f32 %v630, %v1224
    %v1353 = vadd.f32 %v631, %v1225
    %v1354 = vadd.f32 %v632, %v1226
    %v1355 = vadd.f32 %v633, %v1227
    %v1356 = vadd.f32 %v634, %v1228
    %v1357 = vadd.f32 %v635, %v1229
    %v1358 = vadd.f32 %v636, %v1230
    %v1359 = vadd.f32 %v637, %v1231
    %v1360 = vadd.f32 %v638, %v1232
    %v1361 = vadd.f32 %v639, %v1233
    %v1362 = vadd.f32 %v640, %v1234
    %v1363 = vadd.f32 %v641, %v1235
    %v1364 = vadd.f32 %v642, %v1236
    %v1365 = vadd.f32 %v643, %v1237
    %v1366 = vadd.f32 %v644, %v1238
    %v1367 = vadd.f32 %v645, %v1239
    %v1368 = vadd.f32 %v646, %v1240
    %v1369 = vadd.f32 %v647, %v1241
    %v1370 = vadd.f32 %v648, %v1242
    %v1371 = vadd.f32 %v649, %v1243
    %v1372 = vperm.slane %v50, 2
    %v1373 = vperm.slane %v51, 2
    %v1374 = vperm.slane %v52, 2
    %v1375 = vperm.slane %v52, 6
    %v1376 = vperm.slane %v53, 2
    %v1377 = vperm.slane %v53, 6
    %v1382 = vperm.slane %v1374, 2
    %v1383 = vperm.slane %v1375, 2
    %v1384 = vperm.slane %v1376, 2
    %v1385 = vperm.slane %v1377, 2
    %v1390 = vlaneseq
    %v1391 = vshrl.u32 %v1390, 7
    %1393 = vset.pattern.permute.xlu0 %v1391
    %1394 = vperm.xlu0 %1393, %v1382
    %v1395 = vpop.permute.xlu0 %1394
    %v1396 = vlaneseq
    %v1397 = vshrl.u32 %v1396, 7
    %v1398 = vadd.s32 %v1397, 8
    %1399 = vset.pattern.permute.xlu0 %v1398
    %1400 = vperm.xlu0 %1399, %v1382
    %v1401 = vpop.permute.xlu0 %1400
    %v1402 = vlaneseq
    %v1403 = vshrl.u32 %v1402, 7
    %v1404 = vadd.s32 %v1403, 16
    %1405 = vset.pattern.permute.xlu0 %v1404
    %1406 = vperm.xlu0 %1405, %v1382
    %v1407 = vpop.permute.xlu0 %1406
    %v1408 = vlaneseq
    %v1409 = vshrl.u32 %v1408, 7
    %v1410 = vadd.s32 %v1409, 24
    %1411 = vset.pattern.permute.xlu0 %v1410
    %1412 = vperm.xlu0 %1411, %v1382
    %v1413 = vpop.permute.xlu0 %1412
    %v1414 = vlaneseq
    %v1415 = vshrl.u32 %v1414, 7
    %v1416 = vadd.s32 %v1415, 32
    %1417 = vset.pattern.permute.xlu0 %v1416
    %1418 = vperm.xlu0 %1417, %v1382
    %v1419 = vpop.permute.xlu0 %1418
    %v1420 = vlaneseq
    %v1421 = vshrl.u32 %v1420, 7
    %v1422 = vadd.s32 %v1421, 40
    %1423 = vset.pattern.permute.xlu0 %v1422
    %1424 = vperm.xlu0 %1423, %v1382
    %v1425 = vpop.permute.xlu0 %1424
    %v1426 = vlaneseq
    %v1427 = vshrl.u32 %v1426, 7
    %v1428 = vadd.s32 %v1427, 48
    %1429 = vset.pattern.permute.xlu0 %v1428
    %1430 = vperm.xlu0 %1429, %v1382
    %v1431 = vpop.permute.xlu0 %1430
    %v1432 = vlaneseq
    %v1433 = vshrl.u32 %v1432, 7
    %v1434 = vadd.s32 %v1433, 56
    %1435 = vset.pattern.permute.xlu0 %v1434
    %1436 = vperm.xlu0 %1435, %v1382
    %v1437 = vpop.permute.xlu0 %1436
    %v1438 = vlaneseq
    %v1439 = vshrl.u32 %v1438, 7
    %v1440 = vadd.s32 %v1439, 64
    %1441 = vset.pattern.permute.xlu0 %v1440
    %1442 = vperm.xlu0 %1441, %v1382
    %v1443 = vpop.permute.xlu0 %1442
    %v1444 = vlaneseq
    %v1445 = vshrl.u32 %v1444, 7
    %v1446 = vadd.s32 %v1445, 72
    %1447 = vset.pattern.permute.xlu0 %v1446
    %1448 = vperm.xlu0 %1447, %v1382
    %v1449 = vpop.permute.xlu0 %1448
    %v1450 = vlaneseq
    %v1451 = vshrl.u32 %v1450, 7
    %v1452 = vadd.s32 %v1451, 80
    %1453 = vset.pattern.permute.xlu0 %v1452
    %1454 = vperm.xlu0 %1453, %v1382
    %v1455 = vpop.permute.xlu0 %1454
    %v1456 = vlaneseq
    %v1457 = vshrl.u32 %v1456, 7
    %v1458 = vadd.s32 %v1457, 88
    %1459 = vset.pattern.permute.xlu0 %v1458
    %1460 = vperm.xlu0 %1459, %v1382
    %v1461 = vpop.permute.xlu0 %1460
    %v1462 = vlaneseq
    %v1463 = vshrl.u32 %v1462, 7
    %v1464 = vadd.s32 %v1463, 96
    %1465 = vset.pattern.permute.xlu0 %v1464
    %1466 = vperm.xlu0 %1465, %v1382
    %v1467 = vpop.permute.xlu0 %1466
    %v1468 = vlaneseq
    %v1469 = vshrl.u32 %v1468, 7
    %v1470 = vadd.s32 %v1469, 104
    %1471 = vset.pattern.permute.xlu0 %v1470
    %1472 = vperm.xlu0 %1471, %v1382
    %v1473 = vpop.permute.xlu0 %1472
    %v1474 = vlaneseq
    %v1475 = vshrl.u32 %v1474, 7
    %v1476 = vadd.s32 %v1475, 112
    %1477 = vset.pattern.permute.xlu0 %v1476
    %1478 = vperm.xlu0 %1477, %v1382
    %v1479 = vpop.permute.xlu0 %1478
    %v1480 = vlaneseq
    %v1481 = vshrl.u32 %v1480, 7
    %v1482 = vadd.s32 %v1481, 120
    %1483 = vset.pattern.permute.xlu0 %v1482
    %1484 = vperm.xlu0 %1483, %v1382
    %v1485 = vpop.permute.xlu0 %1484
    %v1486 = vlaneseq
    %v1487 = vshrl.u32 %v1486, 7
    %1489 = vset.pattern.permute.xlu0 %v1487
    %1490 = vperm.xlu0 %1489, %v1383
    %v1491 = vpop.permute.xlu0 %1490
    %v1492 = vlaneseq
    %v1493 = vshrl.u32 %v1492, 7
    %v1494 = vadd.s32 %v1493, 8
    %1495 = vset.pattern.permute.xlu0 %v1494
    %1496 = vperm.xlu0 %1495, %v1383
    %v1497 = vpop.permute.xlu0 %1496
    %v1498 = vlaneseq
    %v1499 = vshrl.u32 %v1498, 7
    %v1500 = vadd.s32 %v1499, 16
    %1501 = vset.pattern.permute.xlu0 %v1500
    %1502 = vperm.xlu0 %1501, %v1383
    %v1503 = vpop.permute.xlu0 %1502
    %v1504 = vlaneseq
    %v1505 = vshrl.u32 %v1504, 7
    %v1506 = vadd.s32 %v1505, 24
    %1507 = vset.pattern.permute.xlu0 %v1506
    %1508 = vperm.xlu0 %1507, %v1383
    %v1509 = vpop.permute.xlu0 %1508
    %v1510 = vlaneseq
    %v1511 = vshrl.u32 %v1510, 7
    %v1512 = vadd.s32 %v1511, 32
    %1513 = vset.pattern.permute.xlu0 %v1512
    %1514 = vperm.xlu0 %1513, %v1383
    %v1515 = vpop.permute.xlu0 %1514
    %v1516 = vlaneseq
    %v1517 = vshrl.u32 %v1516, 7
    %v1518 = vadd.s32 %v1517, 40
    %1519 = vset.pattern.permute.xlu0 %v1518
    %1520 = vperm.xlu0 %1519, %v1383
    %v1521 = vpop.permute.xlu0 %1520
    %v1522 = vlaneseq
    %v1523 = vshrl.u32 %v1522, 7
    %v1524 = vadd.s32 %v1523, 48
    %1525 = vset.pattern.permute.xlu0 %v1524
    %1526 = vperm.xlu0 %1525, %v1383
    %v1527 = vpop.permute.xlu0 %1526
    %v1528 = vlaneseq
    %v1529 = vshrl.u32 %v1528, 7
    %v1530 = vadd.s32 %v1529, 56
    %1531 = vset.pattern.permute.xlu0 %v1530
    %1532 = vperm.xlu0 %1531, %v1383
    %v1533 = vpop.permute.xlu0 %1532
    %v1534 = vlaneseq
    %v1535 = vshrl.u32 %v1534, 7
    %v1536 = vadd.s32 %v1535, 64
    %1537 = vset.pattern.permute.xlu0 %v1536
    %1538 = vperm.xlu0 %1537, %v1383
    %v1539 = vpop.permute.xlu0 %1538
    %v1540 = vlaneseq
    %v1541 = vshrl.u32 %v1540, 7
    %v1542 = vadd.s32 %v1541, 72
    %1543 = vset.pattern.permute.xlu0 %v1542
    %1544 = vperm.xlu0 %1543, %v1383
    %v1545 = vpop.permute.xlu0 %1544
    %v1546 = vlaneseq
    %v1547 = vshrl.u32 %v1546, 7
    %v1548 = vadd.s32 %v1547, 80
    %1549 = vset.pattern.permute.xlu0 %v1548
    %1550 = vperm.xlu0 %1549, %v1383
    %v1551 = vpop.permute.xlu0 %1550
    %v1552 = vlaneseq
    %v1553 = vshrl.u32 %v1552, 7
    %v1554 = vadd.s32 %v1553, 88
    %1555 = vset.pattern.permute.xlu0 %v1554
    %1556 = vperm.xlu0 %1555, %v1383
    %v1557 = vpop.permute.xlu0 %1556
    %v1558 = vlaneseq
    %v1559 = vshrl.u32 %v1558, 7
    %v1560 = vadd.s32 %v1559, 96
    %1561 = vset.pattern.permute.xlu0 %v1560
    %1562 = vperm.xlu0 %1561, %v1383
    %v1563 = vpop.permute.xlu0 %1562
    %v1564 = vlaneseq
    %v1565 = vshrl.u32 %v1564, 7
    %v1566 = vadd.s32 %v1565, 104
    %1567 = vset.pattern.permute.xlu0 %v1566
    %1568 = vperm.xlu0 %1567, %v1383
    %v1569 = vpop.permute.xlu0 %1568
    %v1570 = vlaneseq
    %v1571 = vshrl.u32 %v1570, 7
    %v1572 = vadd.s32 %v1571, 112
    %1573 = vset.pattern.permute.xlu0 %v1572
    %1574 = vperm.xlu0 %1573, %v1383
    %v1575 = vpop.permute.xlu0 %1574
    %v1576 = vlaneseq
    %v1577 = vshrl.u32 %v1576, 7
    %v1578 = vadd.s32 %v1577, 120
    %1579 = vset.pattern.permute.xlu0 %v1578
    %1580 = vperm.xlu0 %1579, %v1383
    %v1581 = vpop.permute.xlu0 %1580
    %v1582 = vlaneseq
    %v1583 = vshrl.u32 %v1582, 7
    %1585 = vset.pattern.permute.xlu0 %v1583
    %1586 = vperm.xlu0 %1585, %v1384
    %v1587 = vpop.permute.xlu0 %1586
    %v1588 = vlaneseq
    %v1589 = vshrl.u32 %v1588, 7
    %v1590 = vadd.s32 %v1589, 8
    %1591 = vset.pattern.permute.xlu0 %v1590
    %1592 = vperm.xlu0 %1591, %v1384
    %v1593 = vpop.permute.xlu0 %1592
    %v1594 = vlaneseq
    %v1595 = vshrl.u32 %v1594, 7
    %v1596 = vadd.s32 %v1595, 16
    %1597 = vset.pattern.permute.xlu0 %v1596
    %1598 = vperm.xlu0 %1597, %v1384
    %v1599 = vpop.permute.xlu0 %1598
    %v1600 = vlaneseq
    %v1601 = vshrl.u32 %v1600, 7
    %v1602 = vadd.s32 %v1601, 24
    %1603 = vset.pattern.permute.xlu0 %v1602
    %1604 = vperm.xlu0 %1603, %v1384
    %v1605 = vpop.permute.xlu0 %1604
    %v1606 = vlaneseq
    %v1607 = vshrl.u32 %v1606, 7
    %v1608 = vadd.s32 %v1607, 32
    %1609 = vset.pattern.permute.xlu0 %v1608
    %1610 = vperm.xlu0 %1609, %v1384
    %v1611 = vpop.permute.xlu0 %1610
    %v1612 = vlaneseq
    %v1613 = vshrl.u32 %v1612, 7
    %v1614 = vadd.s32 %v1613, 40
    %1615 = vset.pattern.permute.xlu0 %v1614
    %1616 = vperm.xlu0 %1615, %v1384
    %v1617 = vpop.permute.xlu0 %1616
    %v1618 = vlaneseq
    %v1619 = vshrl.u32 %v1618, 7
    %v1620 = vadd.s32 %v1619, 48
    %1621 = vset.pattern.permute.xlu0 %v1620
    %1622 = vperm.xlu0 %1621, %v1384
    %v1623 = vpop.permute.xlu0 %1622
    %v1624 = vlaneseq
    %v1625 = vshrl.u32 %v1624, 7
    %v1626 = vadd.s32 %v1625, 56
    %1627 = vset.pattern.permute.xlu0 %v1626
    %1628 = vperm.xlu0 %1627, %v1384
    %v1629 = vpop.permute.xlu0 %1628
    %v1630 = vlaneseq
    %v1631 = vshrl.u32 %v1630, 7
    %v1632 = vadd.s32 %v1631, 64
    %1633 = vset.pattern.permute.xlu0 %v1632
    %1634 = vperm.xlu0 %1633, %v1384
    %v1635 = vpop.permute.xlu0 %1634
    %v1636 = vlaneseq
    %v1637 = vshrl.u32 %v1636, 7
    %v1638 = vadd.s32 %v1637, 72
    %1639 = vset.pattern.permute.xlu0 %v1638
    %1640 = vperm.xlu0 %1639, %v1384
    %v1641 = vpop.permute.xlu0 %1640
    %v1642 = vlaneseq
    %v1643 = vshrl.u32 %v1642, 7
    %v1644 = vadd.s32 %v1643, 80
    %1645 = vset.pattern.permute.xlu0 %v1644
    %1646 = vperm.xlu0 %1645, %v1384
    %v1647 = vpop.permute.xlu0 %1646
    %v1648 = vlaneseq
    %v1649 = vshrl.u32 %v1648, 7
    %v1650 = vadd.s32 %v1649, 88
    %1651 = vset.pattern.permute.xlu0 %v1650
    %1652 = vperm.xlu0 %1651, %v1384
    %v1653 = vpop.permute.xlu0 %1652
    %v1654 = vlaneseq
    %v1655 = vshrl.u32 %v1654, 7
    %v1656 = vadd.s32 %v1655, 96
    %1657 = vset.pattern.permute.xlu0 %v1656
    %1658 = vperm.xlu0 %1657, %v1384
    %v1659 = vpop.permute.xlu0 %1658
    %v1660 = vlaneseq
    %v1661 = vshrl.u32 %v1660, 7
    %v1662 = vadd.s32 %v1661, 104
    %1663 = vset.pattern.permute.xlu0 %v1662
    %1664 = vperm.xlu0 %1663, %v1384
    %v1665 = vpop.permute.xlu0 %1664
    %v1666 = vlaneseq
    %v1667 = vshrl.u32 %v1666, 7
    %v1668 = vadd.s32 %v1667, 112
    %1669 = vset.pattern.permute.xlu0 %v1668
    %1670 = vperm.xlu0 %1669, %v1384
    %v1671 = vpop.permute.xlu0 %1670
    %v1672 = vlaneseq
    %v1673 = vshrl.u32 %v1672, 7
    %v1674 = vadd.s32 %v1673, 120
    %1675 = vset.pattern.permute.xlu0 %v1674
    %1676 = vperm.xlu0 %1675, %v1384
    %v1677 = vpop.permute.xlu0 %1676
    %v1678 = vlaneseq
    %v1679 = vshrl.u32 %v1678, 7
    %1681 = vset.pattern.permute.xlu0 %v1679
    %1682 = vperm.xlu0 %1681, %v1385
    %v1683 = vpop.permute.xlu0 %1682
    %v1684 = vlaneseq
    %v1685 = vshrl.u32 %v1684, 7
    %v1686 = vadd.s32 %v1685, 8
    %1687 = vset.pattern.permute.xlu0 %v1686
    %1688 = vperm.xlu0 %1687, %v1385
    %v1689 = vpop.permute.xlu0 %1688
    %v1690 = vlaneseq
    %v1691 = vshrl.u32 %v1690, 7
    %v1692 = vadd.s32 %v1691, 16
    %1693 = vset.pattern.permute.xlu0 %v1692
    %1694 = vperm.xlu0 %1693, %v1385
    %v1695 = vpop.permute.xlu0 %1694
    %v1696 = vlaneseq
    %v1697 = vshrl.u32 %v1696, 7
    %v1698 = vadd.s32 %v1697, 24
    %1699 = vset.pattern.permute.xlu0 %v1698
    %1700 = vperm.xlu0 %1699, %v1385
    %v1701 = vpop.permute.xlu0 %1700
    %v1702 = vlaneseq
    %v1703 = vshrl.u32 %v1702, 7
    %v1704 = vadd.s32 %v1703, 32
    %1705 = vset.pattern.permute.xlu0 %v1704
    %1706 = vperm.xlu0 %1705, %v1385
    %v1707 = vpop.permute.xlu0 %1706
    %v1708 = vlaneseq
    %v1709 = vshrl.u32 %v1708, 7
    %v1710 = vadd.s32 %v1709, 40
    %1711 = vset.pattern.permute.xlu0 %v1710
    %1712 = vperm.xlu0 %1711, %v1385
    %v1713 = vpop.permute.xlu0 %1712
    %v1714 = vlaneseq
    %v1715 = vshrl.u32 %v1714, 7
    %v1716 = vadd.s32 %v1715, 48
    %1717 = vset.pattern.permute.xlu0 %v1716
    %1718 = vperm.xlu0 %1717, %v1385
    %v1719 = vpop.permute.xlu0 %1718
    %v1720 = vlaneseq
    %v1721 = vshrl.u32 %v1720, 7
    %v1722 = vadd.s32 %v1721, 56
    %1723 = vset.pattern.permute.xlu0 %v1722
    %1724 = vperm.xlu0 %1723, %v1385
    %v1725 = vpop.permute.xlu0 %1724
    %v1726 = vlaneseq
    %v1727 = vshrl.u32 %v1726, 7
    %v1728 = vadd.s32 %v1727, 64
    %1729 = vset.pattern.permute.xlu0 %v1728
    %1730 = vperm.xlu0 %1729, %v1385
    %v1731 = vpop.permute.xlu0 %1730
    %v1732 = vlaneseq
    %v1733 = vshrl.u32 %v1732, 7
    %v1734 = vadd.s32 %v1733, 72
    %1735 = vset.pattern.permute.xlu0 %v1734
    %1736 = vperm.xlu0 %1735, %v1385
    %v1737 = vpop.permute.xlu0 %1736
    %v1738 = vlaneseq
    %v1739 = vshrl.u32 %v1738, 7
    %v1740 = vadd.s32 %v1739, 80
    %1741 = vset.pattern.permute.xlu0 %v1740
    %1742 = vperm.xlu0 %1741, %v1385
    %v1743 = vpop.permute.xlu0 %1742
    %v1744 = vlaneseq
    %v1745 = vshrl.u32 %v1744, 7
    %v1746 = vadd.s32 %v1745, 88
    %1747 = vset.pattern.permute.xlu0 %v1746
    %1748 = vperm.xlu0 %1747, %v1385
    %v1749 = vpop.permute.xlu0 %1748
    %v1750 = vlaneseq
    %v1751 = vshrl.u32 %v1750, 7
    %v1752 = vadd.s32 %v1751, 96
    %1753 = vset.pattern.permute.xlu0 %v1752
    %1754 = vperm.xlu0 %1753, %v1385
    %v1755 = vpop.permute.xlu0 %1754
    %v1756 = vlaneseq
    %v1757 = vshrl.u32 %v1756, 7
    %v1758 = vadd.s32 %v1757, 104
    %1759 = vset.pattern.permute.xlu0 %v1758
    %1760 = vperm.xlu0 %1759, %v1385
    %v1761 = vpop.permute.xlu0 %1760
    %v1762 = vlaneseq
    %v1763 = vshrl.u32 %v1762, 7
    %v1764 = vadd.s32 %v1763, 112
    %1765 = vset.pattern.permute.xlu0 %v1764
    %1766 = vperm.xlu0 %1765, %v1385
    %v1767 = vpop.permute.xlu0 %1766
    %v1768 = vlaneseq
    %v1769 = vshrl.u32 %v1768, 7
    %v1770 = vadd.s32 %v1769, 120
    %1771 = vset.pattern.permute.xlu0 %v1770
    %1772 = vperm.xlu0 %1771, %v1385
    %v1773 = vpop.permute.xlu0 %1772
    %v1838 = vmul.f32 %v1372, %v1395
    %v1839 = vmul.f32 %v1372, %v1401
    %v1840 = vmul.f32 %v1372, %v1407
    %v1841 = vmul.f32 %v1372, %v1413
    %v1842 = vmul.f32 %v1372, %v1419
    %v1843 = vmul.f32 %v1372, %v1425
    %v1844 = vmul.f32 %v1372, %v1431
    %v1845 = vmul.f32 %v1372, %v1437
    %v1846 = vmul.f32 %v1372, %v1443
    %v1847 = vmul.f32 %v1372, %v1449
    %v1848 = vmul.f32 %v1372, %v1455
    %v1849 = vmul.f32 %v1372, %v1461
    %v1850 = vmul.f32 %v1372, %v1467
    %v1851 = vmul.f32 %v1372, %v1473
    %v1852 = vmul.f32 %v1372, %v1479
    %v1853 = vmul.f32 %v1372, %v1485
    %v1854 = vmul.f32 %v1372, %v1491
    %v1855 = vmul.f32 %v1372, %v1497
    %v1856 = vmul.f32 %v1372, %v1503
    %v1857 = vmul.f32 %v1372, %v1509
    %v1858 = vmul.f32 %v1372, %v1515
    %v1859 = vmul.f32 %v1372, %v1521
    %v1860 = vmul.f32 %v1372, %v1527
    %v1861 = vmul.f32 %v1372, %v1533
    %v1862 = vmul.f32 %v1372, %v1539
    %v1863 = vmul.f32 %v1372, %v1545
    %v1864 = vmul.f32 %v1372, %v1551
    %v1865 = vmul.f32 %v1372, %v1557
    %v1866 = vmul.f32 %v1372, %v1563
    %v1867 = vmul.f32 %v1372, %v1569
    %v1868 = vmul.f32 %v1372, %v1575
    %v1869 = vmul.f32 %v1372, %v1581
    %v1870 = vmul.f32 %v1372, %v1587
    %v1871 = vmul.f32 %v1372, %v1593
    %v1872 = vmul.f32 %v1372, %v1599
    %v1873 = vmul.f32 %v1372, %v1605
    %v1874 = vmul.f32 %v1372, %v1611
    %v1875 = vmul.f32 %v1372, %v1617
    %v1876 = vmul.f32 %v1372, %v1623
    %v1877 = vmul.f32 %v1372, %v1629
    %v1878 = vmul.f32 %v1372, %v1635
    %v1879 = vmul.f32 %v1372, %v1641
    %v1880 = vmul.f32 %v1372, %v1647
    %v1881 = vmul.f32 %v1372, %v1653
    %v1882 = vmul.f32 %v1372, %v1659
    %v1883 = vmul.f32 %v1372, %v1665
    %v1884 = vmul.f32 %v1372, %v1671
    %v1885 = vmul.f32 %v1372, %v1677
    %v1886 = vmul.f32 %v1372, %v1683
    %v1887 = vmul.f32 %v1372, %v1689
    %v1888 = vmul.f32 %v1372, %v1695
    %v1889 = vmul.f32 %v1372, %v1701
    %v1890 = vmul.f32 %v1372, %v1707
    %v1891 = vmul.f32 %v1372, %v1713
    %v1892 = vmul.f32 %v1372, %v1719
    %v1893 = vmul.f32 %v1372, %v1725
    %v1894 = vmul.f32 %v1372, %v1731
    %v1895 = vmul.f32 %v1372, %v1737
    %v1896 = vmul.f32 %v1372, %v1743
    %v1897 = vmul.f32 %v1372, %v1749
    %v1898 = vmul.f32 %v1372, %v1755
    %v1899 = vmul.f32 %v1372, %v1761
    %v1900 = vmul.f32 %v1372, %v1767
    %v1901 = vmul.f32 %v1372, %v1773
    %v1902 = vmul.f32 %v1373, %v1395
    %v1903 = vmul.f32 %v1373, %v1401
    %v1904 = vmul.f32 %v1373, %v1407
    %v1905 = vmul.f32 %v1373, %v1413
    %v1906 = vmul.f32 %v1373, %v1419
    %v1907 = vmul.f32 %v1373, %v1425
    %v1908 = vmul.f32 %v1373, %v1431
    %v1909 = vmul.f32 %v1373, %v1437
    %v1910 = vmul.f32 %v1373, %v1443
    %v1911 = vmul.f32 %v1373, %v1449
    %v1912 = vmul.f32 %v1373, %v1455
    %v1913 = vmul.f32 %v1373, %v1461
    %v1914 = vmul.f32 %v1373, %v1467
    %v1915 = vmul.f32 %v1373, %v1473
    %v1916 = vmul.f32 %v1373, %v1479
    %v1917 = vmul.f32 %v1373, %v1485
    %v1918 = vmul.f32 %v1373, %v1491
    %v1919 = vmul.f32 %v1373, %v1497
    %v1920 = vmul.f32 %v1373, %v1503
    %v1921 = vmul.f32 %v1373, %v1509
    %v1922 = vmul.f32 %v1373, %v1515
    %v1923 = vmul.f32 %v1373, %v1521
    %v1924 = vmul.f32 %v1373, %v1527
    %v1925 = vmul.f32 %v1373, %v1533
    %v1926 = vmul.f32 %v1373, %v1539
    %v1927 = vmul.f32 %v1373, %v1545
    %v1928 = vmul.f32 %v1373, %v1551
    %v1929 = vmul.f32 %v1373, %v1557
    %v1930 = vmul.f32 %v1373, %v1563
    %v1931 = vmul.f32 %v1373, %v1569
    %v1932 = vmul.f32 %v1373, %v1575
    %v1933 = vmul.f32 %v1373, %v1581
    %v1934 = vmul.f32 %v1373, %v1587
    %v1935 = vmul.f32 %v1373, %v1593
    %v1936 = vmul.f32 %v1373, %v1599
    %v1937 = vmul.f32 %v1373, %v1605
    %v1938 = vmul.f32 %v1373, %v1611
    %v1939 = vmul.f32 %v1373, %v1617
    %v1940 = vmul.f32 %v1373, %v1623
    %v1941 = vmul.f32 %v1373, %v1629
    %v1942 = vmul.f32 %v1373, %v1635
    %v1943 = vmul.f32 %v1373, %v1641
    %v1944 = vmul.f32 %v1373, %v1647
    %v1945 = vmul.f32 %v1373, %v1653
    %v1946 = vmul.f32 %v1373, %v1659
    %v1947 = vmul.f32 %v1373, %v1665
    %v1948 = vmul.f32 %v1373, %v1671
    %v1949 = vmul.f32 %v1373, %v1677
    %v1950 = vmul.f32 %v1373, %v1683
    %v1951 = vmul.f32 %v1373, %v1689
    %v1952 = vmul.f32 %v1373, %v1695
    %v1953 = vmul.f32 %v1373, %v1701
    %v1954 = vmul.f32 %v1373, %v1707
    %v1955 = vmul.f32 %v1373, %v1713
    %v1956 = vmul.f32 %v1373, %v1719
    %v1957 = vmul.f32 %v1373, %v1725
    %v1958 = vmul.f32 %v1373, %v1731
    %v1959 = vmul.f32 %v1373, %v1737
    %v1960 = vmul.f32 %v1373, %v1743
    %v1961 = vmul.f32 %v1373, %v1749
    %v1962 = vmul.f32 %v1373, %v1755
    %v1963 = vmul.f32 %v1373, %v1761
    %v1964 = vmul.f32 %v1373, %v1767
    %v1965 = vmul.f32 %v1373, %v1773
    %v1966 = vadd.f32 %v1244, %v1838
    %v1967 = vadd.f32 %v1245, %v1839
    %v1968 = vadd.f32 %v1246, %v1840
    %v1969 = vadd.f32 %v1247, %v1841
    %v1970 = vadd.f32 %v1248, %v1842
    %v1971 = vadd.f32 %v1249, %v1843
    %v1972 = vadd.f32 %v1250, %v1844
    %v1973 = vadd.f32 %v1251, %v1845
    %v1974 = vadd.f32 %v1252, %v1846
    %v1975 = vadd.f32 %v1253, %v1847
    %v1976 = vadd.f32 %v1254, %v1848
    %v1977 = vadd.f32 %v1255, %v1849
    %v1978 = vadd.f32 %v1256, %v1850
    %v1979 = vadd.f32 %v1257, %v1851
    %v1980 = vadd.f32 %v1258, %v1852
    %v1981 = vadd.f32 %v1259, %v1853
    %v1982 = vadd.f32 %v1260, %v1854
    %v1983 = vadd.f32 %v1261, %v1855
    %v1984 = vadd.f32 %v1262, %v1856
    %v1985 = vadd.f32 %v1263, %v1857
    %v1986 = vadd.f32 %v1264, %v1858
    %v1987 = vadd.f32 %v1265, %v1859
    %v1988 = vadd.f32 %v1266, %v1860
    %v1989 = vadd.f32 %v1267, %v1861
    %v1990 = vadd.f32 %v1268, %v1862
    %v1991 = vadd.f32 %v1269, %v1863
    %v1992 = vadd.f32 %v1270, %v1864
    %v1993 = vadd.f32 %v1271, %v1865
    %v1994 = vadd.f32 %v1272, %v1866
    %v1995 = vadd.f32 %v1273, %v1867
    %v1996 = vadd.f32 %v1274, %v1868
    %v1997 = vadd.f32 %v1275, %v1869
    %v1998 = vadd.f32 %v1276, %v1870
    %v1999 = vadd.f32 %v1277, %v1871
    %v2000 = vadd.f32 %v1278, %v1872
    %v2001 = vadd.f32 %v1279, %v1873
    %v2002 = vadd.f32 %v1280, %v1874
    %v2003 = vadd.f32 %v1281, %v1875
    %v2004 = vadd.f32 %v1282, %v1876
    %v2005 = vadd.f32 %v1283, %v1877
    %v2006 = vadd.f32 %v1284, %v1878
    %v2007 = vadd.f32 %v1285, %v1879
    %v2008 = vadd.f32 %v1286, %v1880
    %v2009 = vadd.f32 %v1287, %v1881
    %v2010 = vadd.f32 %v1288, %v1882
    %v2011 = vadd.f32 %v1289, %v1883
    %v2012 = vadd.f32 %v1290, %v1884
    %v2013 = vadd.f32 %v1291, %v1885
    %v2014 = vadd.f32 %v1292, %v1886
    %v2015 = vadd.f32 %v1293, %v1887
    %v2016 = vadd.f32 %v1294, %v1888
    %v2017 = vadd.f32 %v1295, %v1889
    %v2018 = vadd.f32 %v1296, %v1890
    %v2019 = vadd.f32 %v1297, %v1891
    %v2020 = vadd.f32 %v1298, %v1892
    %v2021 = vadd.f32 %v1299, %v1893
    %v2022 = vadd.f32 %v1300, %v1894
    %v2023 = vadd.f32 %v1301, %v1895
    %v2024 = vadd.f32 %v1302, %v1896
    %v2025 = vadd.f32 %v1303, %v1897
    %v2026 = vadd.f32 %v1304, %v1898
    %v2027 = vadd.f32 %v1305, %v1899
    %v2028 = vadd.f32 %v1306, %v1900
    %v2029 = vadd.f32 %v1307, %v1901
    %v2030 = vadd.f32 %v1308, %v1902
    %v2031 = vadd.f32 %v1309, %v1903
    %v2032 = vadd.f32 %v1310, %v1904
    %v2033 = vadd.f32 %v1311, %v1905
    %v2034 = vadd.f32 %v1312, %v1906
    %v2035 = vadd.f32 %v1313, %v1907
    %v2036 = vadd.f32 %v1314, %v1908
    %v2037 = vadd.f32 %v1315, %v1909
    %v2038 = vadd.f32 %v1316, %v1910
    %v2039 = vadd.f32 %v1317, %v1911
    %v2040 = vadd.f32 %v1318, %v1912
    %v2041 = vadd.f32 %v1319, %v1913
    %v2042 = vadd.f32 %v1320, %v1914
    %v2043 = vadd.f32 %v1321, %v1915
    %v2044 = vadd.f32 %v1322, %v1916
    %v2045 = vadd.f32 %v1323, %v1917
    %v2046 = vadd.f32 %v1324, %v1918
    %v2047 = vadd.f32 %v1325, %v1919
    %v2048 = vadd.f32 %v1326, %v1920
    %v2049 = vadd.f32 %v1327, %v1921
    %v2050 = vadd.f32 %v1328, %v1922
    %v2051 = vadd.f32 %v1329, %v1923
    %v2052 = vadd.f32 %v1330, %v1924
    %v2053 = vadd.f32 %v1331, %v1925
    %v2054 = vadd.f32 %v1332, %v1926
    %v2055 = vadd.f32 %v1333, %v1927
    %v2056 = vadd.f32 %v1334, %v1928
    %v2057 = vadd.f32 %v1335, %v1929
    %v2058 = vadd.f32 %v1336, %v1930
    %v2059 = vadd.f32 %v1337, %v1931
    %v2060 = vadd.f32 %v1338, %v1932
    %v2061 = vadd.f32 %v1339, %v1933
    %v2062 = vadd.f32 %v1340, %v1934
    %v2063 = vadd.f32 %v1341, %v1935
    %v2064 = vadd.f32 %v1342, %v1936
    %v2065 = vadd.f32 %v1343, %v1937
    %v2066 = vadd.f32 %v1344, %v1938
    %v2067 = vadd.f32 %v1345, %v1939
    %v2068 = vadd.f32 %v1346, %v1940
    %v2069 = vadd.f32 %v1347, %v1941
    %v2070 = vadd.f32 %v1348, %v1942
    %v2071 = vadd.f32 %v1349, %v1943
    %v2072 = vadd.f32 %v1350, %v1944
    %v2073 = vadd.f32 %v1351, %v1945
    %v2074 = vadd.f32 %v1352, %v1946
    %v2075 = vadd.f32 %v1353, %v1947
    %v2076 = vadd.f32 %v1354, %v1948
    %v2077 = vadd.f32 %v1355, %v1949
    %v2078 = vadd.f32 %v1356, %v1950
    %v2079 = vadd.f32 %v1357, %v1951
    %v2080 = vadd.f32 %v1358, %v1952
    %v2081 = vadd.f32 %v1359, %v1953
    %v2082 = vadd.f32 %v1360, %v1954
    %v2083 = vadd.f32 %v1361, %v1955
    %v2084 = vadd.f32 %v1362, %v1956
    %v2085 = vadd.f32 %v1363, %v1957
    %v2086 = vadd.f32 %v1364, %v1958
    %v2087 = vadd.f32 %v1365, %v1959
    %v2088 = vadd.f32 %v1366, %v1960
    %v2089 = vadd.f32 %v1367, %v1961
    %v2090 = vadd.f32 %v1368, %v1962
    %v2091 = vadd.f32 %v1369, %v1963
    %v2092 = vadd.f32 %v1370, %v1964
    %v2093 = vadd.f32 %v1371, %v1965
    %v2094 = vld [vmem:[%s3] sm:$0xf]
    %v2096 = vperm.slane %v2094, 0
    %v2097 = vperm.slane %v2094, 1
    %v2098 = vperm.slane %v2094, 2
    %v2099 = vperm.slane %v2094, 3
    %v2100 = vlaneseq
    %v2101 = vshrl.u32 %v2100, 7
    %2103 = vset.pattern.permute.xlu0 %v2101
    %2104 = vperm.xlu0 %2103, %v2096
    %v2105 = vpop.permute.xlu0 %2104
    %v2106 = vlaneseq
    %v2107 = vshrl.u32 %v2106, 7
    %v2108 = vadd.s32 %v2107, 8
    %2109 = vset.pattern.permute.xlu0 %v2108
    %2110 = vperm.xlu0 %2109, %v2096
    %v2111 = vpop.permute.xlu0 %2110
    %v2112 = vlaneseq
    %v2113 = vshrl.u32 %v2112, 7
    %v2114 = vadd.s32 %v2113, 16
    %2115 = vset.pattern.permute.xlu0 %v2114
    %2116 = vperm.xlu0 %2115, %v2096
    %v2117 = vpop.permute.xlu0 %2116
    %v2118 = vlaneseq
    %v2119 = vshrl.u32 %v2118, 7
    %v2120 = vadd.s32 %v2119, 24
    %2121 = vset.pattern.permute.xlu0 %v2120
    %2122 = vperm.xlu0 %2121, %v2096
    %v2123 = vpop.permute.xlu0 %2122
    %v2124 = vlaneseq
    %v2125 = vshrl.u32 %v2124, 7
    %v2126 = vadd.s32 %v2125, 32
    %2127 = vset.pattern.permute.xlu0 %v2126
    %2128 = vperm.xlu0 %2127, %v2096
    %v2129 = vpop.permute.xlu0 %2128
    %v2130 = vlaneseq
    %v2131 = vshrl.u32 %v2130, 7
    %v2132 = vadd.s32 %v2131, 40
    %2133 = vset.pattern.permute.xlu0 %v2132
    %2134 = vperm.xlu0 %2133, %v2096
    %v2135 = vpop.permute.xlu0 %2134
    %v2136 = vlaneseq
    %v2137 = vshrl.u32 %v2136, 7
    %v2138 = vadd.s32 %v2137, 48
    %2139 = vset.pattern.permute.xlu0 %v2138
    %2140 = vperm.xlu0 %2139, %v2096
    %v2141 = vpop.permute.xlu0 %2140
    %v2142 = vlaneseq
    %v2143 = vshrl.u32 %v2142, 7
    %v2144 = vadd.s32 %v2143, 56
    %2145 = vset.pattern.permute.xlu0 %v2144
    %2146 = vperm.xlu0 %2145, %v2096
    %v2147 = vpop.permute.xlu0 %2146
    %v2148 = vlaneseq
    %v2149 = vshrl.u32 %v2148, 7
    %v2150 = vadd.s32 %v2149, 64
    %2151 = vset.pattern.permute.xlu0 %v2150
    %2152 = vperm.xlu0 %2151, %v2096
    %v2153 = vpop.permute.xlu0 %2152
    %v2154 = vlaneseq
    %v2155 = vshrl.u32 %v2154, 7
    %v2156 = vadd.s32 %v2155, 72
    %2157 = vset.pattern.permute.xlu0 %v2156
    %2158 = vperm.xlu0 %2157, %v2096
    %v2159 = vpop.permute.xlu0 %2158
    %v2160 = vlaneseq
    %v2161 = vshrl.u32 %v2160, 7
    %v2162 = vadd.s32 %v2161, 80
    %2163 = vset.pattern.permute.xlu0 %v2162
    %2164 = vperm.xlu0 %2163, %v2096
    %v2165 = vpop.permute.xlu0 %2164
    %v2166 = vlaneseq
    %v2167 = vshrl.u32 %v2166, 7
    %v2168 = vadd.s32 %v2167, 88
    %2169 = vset.pattern.permute.xlu0 %v2168
    %2170 = vperm.xlu0 %2169, %v2096
    %v2171 = vpop.permute.xlu0 %2170
    %v2172 = vlaneseq
    %v2173 = vshrl.u32 %v2172, 7
    %v2174 = vadd.s32 %v2173, 96
    %2175 = vset.pattern.permute.xlu0 %v2174
    %2176 = vperm.xlu0 %2175, %v2096
    %v2177 = vpop.permute.xlu0 %2176
    %v2178 = vlaneseq
    %v2179 = vshrl.u32 %v2178, 7
    %v2180 = vadd.s32 %v2179, 104
    %2181 = vset.pattern.permute.xlu0 %v2180
    %2182 = vperm.xlu0 %2181, %v2096
    %v2183 = vpop.permute.xlu0 %2182
    %v2184 = vlaneseq
    %v2185 = vshrl.u32 %v2184, 7
    %v2186 = vadd.s32 %v2185, 112
    %2187 = vset.pattern.permute.xlu0 %v2186
    %2188 = vperm.xlu0 %2187, %v2096
    %v2189 = vpop.permute.xlu0 %2188
    %v2190 = vlaneseq
    %v2191 = vshrl.u32 %v2190, 7
    %v2192 = vadd.s32 %v2191, 120
    %2193 = vset.pattern.permute.xlu0 %v2192
    %2194 = vperm.xlu0 %2193, %v2096
    %v2195 = vpop.permute.xlu0 %2194
    %v2196 = vlaneseq
    %v2197 = vshrl.u32 %v2196, 7
    %2199 = vset.pattern.permute.xlu0 %v2197
    %2200 = vperm.xlu0 %2199, %v2097
    %v2201 = vpop.permute.xlu0 %2200
    %v2202 = vlaneseq
    %v2203 = vshrl.u32 %v2202, 7
    %v2204 = vadd.s32 %v2203, 8
    %2205 = vset.pattern.permute.xlu0 %v2204
    %2206 = vperm.xlu0 %2205, %v2097
    %v2207 = vpop.permute.xlu0 %2206
    %v2208 = vlaneseq
    %v2209 = vshrl.u32 %v2208, 7
    %v2210 = vadd.s32 %v2209, 16
    %2211 = vset.pattern.permute.xlu0 %v2210
    %2212 = vperm.xlu0 %2211, %v2097
    %v2213 = vpop.permute.xlu0 %2212
    %v2214 = vlaneseq
    %v2215 = vshrl.u32 %v2214, 7
    %v2216 = vadd.s32 %v2215, 24
    %2217 = vset.pattern.permute.xlu0 %v2216
    %2218 = vperm.xlu0 %2217, %v2097
    %v2219 = vpop.permute.xlu0 %2218
    %v2220 = vlaneseq
    %v2221 = vshrl.u32 %v2220, 7
    %v2222 = vadd.s32 %v2221, 32
    %2223 = vset.pattern.permute.xlu0 %v2222
    %2224 = vperm.xlu0 %2223, %v2097
    %v2225 = vpop.permute.xlu0 %2224
    %v2226 = vlaneseq
    %v2227 = vshrl.u32 %v2226, 7
    %v2228 = vadd.s32 %v2227, 40
    %2229 = vset.pattern.permute.xlu0 %v2228
    %2230 = vperm.xlu0 %2229, %v2097
    %v2231 = vpop.permute.xlu0 %2230
    %v2232 = vlaneseq
    %v2233 = vshrl.u32 %v2232, 7
    %v2234 = vadd.s32 %v2233, 48
    %2235 = vset.pattern.permute.xlu0 %v2234
    %2236 = vperm.xlu0 %2235, %v2097
    %v2237 = vpop.permute.xlu0 %2236
    %v2238 = vlaneseq
    %v2239 = vshrl.u32 %v2238, 7
    %v2240 = vadd.s32 %v2239, 56
    %2241 = vset.pattern.permute.xlu0 %v2240
    %2242 = vperm.xlu0 %2241, %v2097
    %v2243 = vpop.permute.xlu0 %2242
    %v2244 = vlaneseq
    %v2245 = vshrl.u32 %v2244, 7
    %v2246 = vadd.s32 %v2245, 64
    %2247 = vset.pattern.permute.xlu0 %v2246
    %2248 = vperm.xlu0 %2247, %v2097
    %v2249 = vpop.permute.xlu0 %2248
    %v2250 = vlaneseq
    %v2251 = vshrl.u32 %v2250, 7
    %v2252 = vadd.s32 %v2251, 72
    %2253 = vset.pattern.permute.xlu0 %v2252
    %2254 = vperm.xlu0 %2253, %v2097
    %v2255 = vpop.permute.xlu0 %2254
    %v2256 = vlaneseq
    %v2257 = vshrl.u32 %v2256, 7
    %v2258 = vadd.s32 %v2257, 80
    %2259 = vset.pattern.permute.xlu0 %v2258
    %2260 = vperm.xlu0 %2259, %v2097
    %v2261 = vpop.permute.xlu0 %2260
    %v2262 = vlaneseq
    %v2263 = vshrl.u32 %v2262, 7
    %v2264 = vadd.s32 %v2263, 88
    %2265 = vset.pattern.permute.xlu0 %v2264
    %2266 = vperm.xlu0 %2265, %v2097
    %v2267 = vpop.permute.xlu0 %2266
    %v2268 = vlaneseq
    %v2269 = vshrl.u32 %v2268, 7
    %v2270 = vadd.s32 %v2269, 96
    %2271 = vset.pattern.permute.xlu0 %v2270
    %2272 = vperm.xlu0 %2271, %v2097
    %v2273 = vpop.permute.xlu0 %2272
    %v2274 = vlaneseq
    %v2275 = vshrl.u32 %v2274, 7
    %v2276 = vadd.s32 %v2275, 104
    %2277 = vset.pattern.permute.xlu0 %v2276
    %2278 = vperm.xlu0 %2277, %v2097
    %v2279 = vpop.permute.xlu0 %2278
    %v2280 = vlaneseq
    %v2281 = vshrl.u32 %v2280, 7
    %v2282 = vadd.s32 %v2281, 112
    %2283 = vset.pattern.permute.xlu0 %v2282
    %2284 = vperm.xlu0 %2283, %v2097
    %v2285 = vpop.permute.xlu0 %2284
    %v2286 = vlaneseq
    %v2287 = vshrl.u32 %v2286, 7
    %v2288 = vadd.s32 %v2287, 120
    %2289 = vset.pattern.permute.xlu0 %v2288
    %2290 = vperm.xlu0 %2289, %v2097
    %v2291 = vpop.permute.xlu0 %2290
    %v2292 = vlaneseq
    %v2293 = vshrl.u32 %v2292, 7
    %2295 = vset.pattern.permute.xlu0 %v2293
    %2296 = vperm.xlu0 %2295, %v2098
    %v2297 = vpop.permute.xlu0 %2296
    %v2298 = vlaneseq
    %v2299 = vshrl.u32 %v2298, 7
    %v2300 = vadd.s32 %v2299, 8
    %2301 = vset.pattern.permute.xlu0 %v2300
    %2302 = vperm.xlu0 %2301, %v2098
    %v2303 = vpop.permute.xlu0 %2302
    %v2304 = vlaneseq
    %v2305 = vshrl.u32 %v2304, 7
    %v2306 = vadd.s32 %v2305, 16
    %2307 = vset.pattern.permute.xlu0 %v2306
    %2308 = vperm.xlu0 %2307, %v2098
    %v2309 = vpop.permute.xlu0 %2308
    %v2310 = vlaneseq
    %v2311 = vshrl.u32 %v2310, 7
    %v2312 = vadd.s32 %v2311, 24
    %2313 = vset.pattern.permute.xlu0 %v2312
    %2314 = vperm.xlu0 %2313, %v2098
    %v2315 = vpop.permute.xlu0 %2314
    %v2316 = vlaneseq
    %v2317 = vshrl.u32 %v2316, 7
    %v2318 = vadd.s32 %v2317, 32
    %2319 = vset.pattern.permute.xlu0 %v2318
    %2320 = vperm.xlu0 %2319, %v2098
    %v2321 = vpop.permute.xlu0 %2320
    %v2322 = vlaneseq
    %v2323 = vshrl.u32 %v2322, 7
    %v2324 = vadd.s32 %v2323, 40
    %2325 = vset.pattern.permute.xlu0 %v2324
    %2326 = vperm.xlu0 %2325, %v2098
    %v2327 = vpop.permute.xlu0 %2326
    %v2328 = vlaneseq
    %v2329 = vshrl.u32 %v2328, 7
    %v2330 = vadd.s32 %v2329, 48
    %2331 = vset.pattern.permute.xlu0 %v2330
    %2332 = vperm.xlu0 %2331, %v2098
    %v2333 = vpop.permute.xlu0 %2332
    %v2334 = vlaneseq
    %v2335 = vshrl.u32 %v2334, 7
    %v2336 = vadd.s32 %v2335, 56
    %2337 = vset.pattern.permute.xlu0 %v2336
    %2338 = vperm.xlu0 %2337, %v2098
    %v2339 = vpop.permute.xlu0 %2338
    %v2340 = vlaneseq
    %v2341 = vshrl.u32 %v2340, 7
    %v2342 = vadd.s32 %v2341, 64
    %2343 = vset.pattern.permute.xlu0 %v2342
    %2344 = vperm.xlu0 %2343, %v2098
    %v2345 = vpop.permute.xlu0 %2344
    %v2346 = vlaneseq
    %v2347 = vshrl.u32 %v2346, 7
    %v2348 = vadd.s32 %v2347, 72
    %2349 = vset.pattern.permute.xlu0 %v2348
    %2350 = vperm.xlu0 %2349, %v2098
    %v2351 = vpop.permute.xlu0 %2350
    %v2352 = vlaneseq
    %v2353 = vshrl.u32 %v2352, 7
    %v2354 = vadd.s32 %v2353, 80
    %2355 = vset.pattern.permute.xlu0 %v2354
    %2356 = vperm.xlu0 %2355, %v2098
    %v2357 = vpop.permute.xlu0 %2356
    %v2358 = vlaneseq
    %v2359 = vshrl.u32 %v2358, 7
    %v2360 = vadd.s32 %v2359, 88
    %2361 = vset.pattern.permute.xlu0 %v2360
    %2362 = vperm.xlu0 %2361, %v2098
    %v2363 = vpop.permute.xlu0 %2362
    %v2364 = vlaneseq
    %v2365 = vshrl.u32 %v2364, 7
    %v2366 = vadd.s32 %v2365, 96
    %2367 = vset.pattern.permute.xlu0 %v2366
    %2368 = vperm.xlu0 %2367, %v2098
    %v2369 = vpop.permute.xlu0 %2368
    %v2370 = vlaneseq
    %v2371 = vshrl.u32 %v2370, 7
    %v2372 = vadd.s32 %v2371, 104
    %2373 = vset.pattern.permute.xlu0 %v2372
    %2374 = vperm.xlu0 %2373, %v2098
    %v2375 = vpop.permute.xlu0 %2374
    %v2376 = vlaneseq
    %v2377 = vshrl.u32 %v2376, 7
    %v2378 = vadd.s32 %v2377, 112
    %2379 = vset.pattern.permute.xlu0 %v2378
    %2380 = vperm.xlu0 %2379, %v2098
    %v2381 = vpop.permute.xlu0 %2380
    %v2382 = vlaneseq
    %v2383 = vshrl.u32 %v2382, 7
    %v2384 = vadd.s32 %v2383, 120
    %2385 = vset.pattern.permute.xlu0 %v2384
    %2386 = vperm.xlu0 %2385, %v2098
    %v2387 = vpop.permute.xlu0 %2386
    %v2388 = vlaneseq
    %v2389 = vshrl.u32 %v2388, 7
    %2391 = vset.pattern.permute.xlu0 %v2389
    %2392 = vperm.xlu0 %2391, %v2099
    %v2393 = vpop.permute.xlu0 %2392
    %v2394 = vlaneseq
    %v2395 = vshrl.u32 %v2394, 7
    %v2396 = vadd.s32 %v2395, 8
    %2397 = vset.pattern.permute.xlu0 %v2396
    %2398 = vperm.xlu0 %2397, %v2099
    %v2399 = vpop.permute.xlu0 %2398
    %v2400 = vlaneseq
    %v2401 = vshrl.u32 %v2400, 7
    %v2402 = vadd.s32 %v2401, 16
    %2403 = vset.pattern.permute.xlu0 %v2402
    %2404 = vperm.xlu0 %2403, %v2099
    %v2405 = vpop.permute.xlu0 %2404
    %v2406 = vlaneseq
    %v2407 = vshrl.u32 %v2406, 7
    %v2408 = vadd.s32 %v2407, 24
    %2409 = vset.pattern.permute.xlu0 %v2408
    %2410 = vperm.xlu0 %2409, %v2099
    %v2411 = vpop.permute.xlu0 %2410
    %v2412 = vlaneseq
    %v2413 = vshrl.u32 %v2412, 7
    %v2414 = vadd.s32 %v2413, 32
    %2415 = vset.pattern.permute.xlu0 %v2414
    %2416 = vperm.xlu0 %2415, %v2099
    %v2417 = vpop.permute.xlu0 %2416
    %v2418 = vlaneseq
    %v2419 = vshrl.u32 %v2418, 7
    %v2420 = vadd.s32 %v2419, 40
    %2421 = vset.pattern.permute.xlu0 %v2420
    %2422 = vperm.xlu0 %2421, %v2099
    %v2423 = vpop.permute.xlu0 %2422
    %v2424 = vlaneseq
    %v2425 = vshrl.u32 %v2424, 7
    %v2426 = vadd.s32 %v2425, 48
    %2427 = vset.pattern.permute.xlu0 %v2426
    %2428 = vperm.xlu0 %2427, %v2099
    %v2429 = vpop.permute.xlu0 %2428
    %v2430 = vlaneseq
    %v2431 = vshrl.u32 %v2430, 7
    %v2432 = vadd.s32 %v2431, 56
    %2433 = vset.pattern.permute.xlu0 %v2432
    %2434 = vperm.xlu0 %2433, %v2099
    %v2435 = vpop.permute.xlu0 %2434
    %v2436 = vlaneseq
    %v2437 = vshrl.u32 %v2436, 7
    %v2438 = vadd.s32 %v2437, 64
    %2439 = vset.pattern.permute.xlu0 %v2438
    %2440 = vperm.xlu0 %2439, %v2099
    %v2441 = vpop.permute.xlu0 %2440
    %v2442 = vlaneseq
    %v2443 = vshrl.u32 %v2442, 7
    %v2444 = vadd.s32 %v2443, 72
    %2445 = vset.pattern.permute.xlu0 %v2444
    %2446 = vperm.xlu0 %2445, %v2099
    %v2447 = vpop.permute.xlu0 %2446
    %v2448 = vlaneseq
    %v2449 = vshrl.u32 %v2448, 7
    %v2450 = vadd.s32 %v2449, 80
    %2451 = vset.pattern.permute.xlu0 %v2450
    %2452 = vperm.xlu0 %2451, %v2099
    %v2453 = vpop.permute.xlu0 %2452
    %v2454 = vlaneseq
    %v2455 = vshrl.u32 %v2454, 7
    %v2456 = vadd.s32 %v2455, 88
    %2457 = vset.pattern.permute.xlu0 %v2456
    %2458 = vperm.xlu0 %2457, %v2099
    %v2459 = vpop.permute.xlu0 %2458
    %v2460 = vlaneseq
    %v2461 = vshrl.u32 %v2460, 7
    %v2462 = vadd.s32 %v2461, 96
    %2463 = vset.pattern.permute.xlu0 %v2462
    %2464 = vperm.xlu0 %2463, %v2099
    %v2465 = vpop.permute.xlu0 %2464
    %v2466 = vlaneseq
    %v2467 = vshrl.u32 %v2466, 7
    %v2468 = vadd.s32 %v2467, 104
    %2469 = vset.pattern.permute.xlu0 %v2468
    %2470 = vperm.xlu0 %2469, %v2099
    %v2471 = vpop.permute.xlu0 %2470
    %v2472 = vlaneseq
    %v2473 = vshrl.u32 %v2472, 7
    %v2474 = vadd.s32 %v2473, 112
    %2475 = vset.pattern.permute.xlu0 %v2474
    %2476 = vperm.xlu0 %2475, %v2099
    %v2477 = vpop.permute.xlu0 %2476
    %v2478 = vlaneseq
    %v2479 = vshrl.u32 %v2478, 7
    %v2480 = vadd.s32 %v2479, 120
    %2481 = vset.pattern.permute.xlu0 %v2480
    %2482 = vperm.xlu0 %2481, %v2099
    %v2483 = vpop.permute.xlu0 %2482
    %v2548 = vadd.f32 %v1966, %v2105
    %v2549 = vadd.f32 %v1967, %v2111
    %v2550 = vadd.f32 %v1968, %v2117
    %v2551 = vadd.f32 %v1969, %v2123
    %v2552 = vadd.f32 %v1970, %v2129
    %v2553 = vadd.f32 %v1971, %v2135
    %v2554 = vadd.f32 %v1972, %v2141
    %v2555 = vadd.f32 %v1973, %v2147
    %v2556 = vadd.f32 %v1974, %v2153
    %v2557 = vadd.f32 %v1975, %v2159
    %v2558 = vadd.f32 %v1976, %v2165
    %v2559 = vadd.f32 %v1977, %v2171
    %v2560 = vadd.f32 %v1978, %v2177
    %v2561 = vadd.f32 %v1979, %v2183
    %v2562 = vadd.f32 %v1980, %v2189
    %v2563 = vadd.f32 %v1981, %v2195
    %v2564 = vadd.f32 %v1982, %v2201
    %v2565 = vadd.f32 %v1983, %v2207
    %v2566 = vadd.f32 %v1984, %v2213
    %v2567 = vadd.f32 %v1985, %v2219
    %v2568 = vadd.f32 %v1986, %v2225
    %v2569 = vadd.f32 %v1987, %v2231
    %v2570 = vadd.f32 %v1988, %v2237
    %v2571 = vadd.f32 %v1989, %v2243
    %v2572 = vadd.f32 %v1990, %v2249
    %v2573 = vadd.f32 %v1991, %v2255
    %v2574 = vadd.f32 %v1992, %v2261
    %v2575 = vadd.f32 %v1993, %v2267
    %v2576 = vadd.f32 %v1994, %v2273
    %v2577 = vadd.f32 %v1995, %v2279
    %v2578 = vadd.f32 %v1996, %v2285
    %v2579 = vadd.f32 %v1997, %v2291
    %v2580 = vadd.f32 %v1998, %v2297
    %v2581 = vadd.f32 %v1999, %v2303
    %v2582 = vadd.f32 %v2000, %v2309
    %v2583 = vadd.f32 %v2001, %v2315
    %v2584 = vadd.f32 %v2002, %v2321
    %v2585 = vadd.f32 %v2003, %v2327
    %v2586 = vadd.f32 %v2004, %v2333
    %v2587 = vadd.f32 %v2005, %v2339
    %v2588 = vadd.f32 %v2006, %v2345
    %v2589 = vadd.f32 %v2007, %v2351
    %v2590 = vadd.f32 %v2008, %v2357
    %v2591 = vadd.f32 %v2009, %v2363
    %v2592 = vadd.f32 %v2010, %v2369
    %v2593 = vadd.f32 %v2011, %v2375
    %v2594 = vadd.f32 %v2012, %v2381
    %v2595 = vadd.f32 %v2013, %v2387
    %v2596 = vadd.f32 %v2014, %v2393
    %v2597 = vadd.f32 %v2015, %v2399
    %v2598 = vadd.f32 %v2016, %v2405
    %v2599 = vadd.f32 %v2017, %v2411
    %v2600 = vadd.f32 %v2018, %v2417
    %v2601 = vadd.f32 %v2019, %v2423
    %v2602 = vadd.f32 %v2020, %v2429
    %v2603 = vadd.f32 %v2021, %v2435
    %v2604 = vadd.f32 %v2022, %v2441
    %v2605 = vadd.f32 %v2023, %v2447
    %v2606 = vadd.f32 %v2024, %v2453
    %v2607 = vadd.f32 %v2025, %v2459
    %v2608 = vadd.f32 %v2026, %v2465
    %v2609 = vadd.f32 %v2027, %v2471
    %v2610 = vadd.f32 %v2028, %v2477
    %v2611 = vadd.f32 %v2029, %v2483
    %v2612 = vadd.f32 %v2030, %v2105
    %v2613 = vadd.f32 %v2031, %v2111
    %v2614 = vadd.f32 %v2032, %v2117
    %v2615 = vadd.f32 %v2033, %v2123
    %v2616 = vadd.f32 %v2034, %v2129
    %v2617 = vadd.f32 %v2035, %v2135
    %v2618 = vadd.f32 %v2036, %v2141
    %v2619 = vadd.f32 %v2037, %v2147
    %v2620 = vadd.f32 %v2038, %v2153
    %v2621 = vadd.f32 %v2039, %v2159
    %v2622 = vadd.f32 %v2040, %v2165
    %v2623 = vadd.f32 %v2041, %v2171
    %v2624 = vadd.f32 %v2042, %v2177
    %v2625 = vadd.f32 %v2043, %v2183
    %v2626 = vadd.f32 %v2044, %v2189
    %v2627 = vadd.f32 %v2045, %v2195
    %v2628 = vadd.f32 %v2046, %v2201
    %v2629 = vadd.f32 %v2047, %v2207
    %v2630 = vadd.f32 %v2048, %v2213
    %v2631 = vadd.f32 %v2049, %v2219
    %v2632 = vadd.f32 %v2050, %v2225
    %v2633 = vadd.f32 %v2051, %v2231
    %v2634 = vadd.f32 %v2052, %v2237
    %v2635 = vadd.f32 %v2053, %v2243
    %v2636 = vadd.f32 %v2054, %v2249
    %v2637 = vadd.f32 %v2055, %v2255
    %v2638 = vadd.f32 %v2056, %v2261
    %v2639 = vadd.f32 %v2057, %v2267
    %v2640 = vadd.f32 %v2058, %v2273
    %v2641 = vadd.f32 %v2059, %v2279
    %v2642 = vadd.f32 %v2060, %v2285
    %v2643 = vadd.f32 %v2061, %v2291
    %v2644 = vadd.f32 %v2062, %v2297
    %v2645 = vadd.f32 %v2063, %v2303
    %v2646 = vadd.f32 %v2064, %v2309
    %v2647 = vadd.f32 %v2065, %v2315
    %v2648 = vadd.f32 %v2066, %v2321
    %v2649 = vadd.f32 %v2067, %v2327
    %v2650 = vadd.f32 %v2068, %v2333
    %v2651 = vadd.f32 %v2069, %v2339
    %v2652 = vadd.f32 %v2070, %v2345
    %v2653 = vadd.f32 %v2071, %v2351
    %v2654 = vadd.f32 %v2072, %v2357
    %v2655 = vadd.f32 %v2073, %v2363
    %v2656 = vadd.f32 %v2074, %v2369
    %v2657 = vadd.f32 %v2075, %v2375
    %v2658 = vadd.f32 %v2076, %v2381
    %v2659 = vadd.f32 %v2077, %v2387
    %v2660 = vadd.f32 %v2078, %v2393
    %v2661 = vadd.f32 %v2079, %v2399
    %v2662 = vadd.f32 %v2080, %v2405
    %v2663 = vadd.f32 %v2081, %v2411
    %v2664 = vadd.f32 %v2082, %v2417
    %v2665 = vadd.f32 %v2083, %v2423
    %v2666 = vadd.f32 %v2084, %v2429
    %v2667 = vadd.f32 %v2085, %v2435
    %v2668 = vadd.f32 %v2086, %v2441
    %v2669 = vadd.f32 %v2087, %v2447
    %v2670 = vadd.f32 %v2088, %v2453
    %v2671 = vadd.f32 %v2089, %v2459
    %v2672 = vadd.f32 %v2090, %v2465
    %v2673 = vadd.f32 %v2091, %v2471
    %v2674 = vadd.f32 %v2092, %v2477
    %v2675 = vadd.f32 %v2093, %v2483
    %v2676 = vld [vmem:[%s1] sm:$0xff]
    %v2677 = vld [vmem:[%s1 + $0x8] sm:$0xff]
    %v2678 = vld [vmem:[%s1 + $0x10] sm:$0xff]
    %v2679 = vld [vmem:[%s1 + $0x18] sm:$0xff]
    %v2680 = vld [vmem:[%s1 + $0x20] sm:$0xff]
    %v2681 = vld [vmem:[%s1 + $0x28] sm:$0xff]
    %v2682 = vld [vmem:[%s1 + $0x30] sm:$0xff]
    %v2683 = vld [vmem:[%s1 + $0x38] sm:$0xff]
    %v2684 = vld [vmem:[%s4] sm:$0xff]
    %v2685 = vld [vmem:[%s4 + $0x8] sm:$0xff]
    %v2686 = vld [vmem:[%s4 + $0x10] sm:$0xff]
    %v2687 = vld [vmem:[%s4 + $0x18] sm:$0xff]
    %v2688 = vld [vmem:[%s4 + $0x20] sm:$0xff]
    %v2689 = vld [vmem:[%s4 + $0x28] sm:$0xff]
    %v2690 = vld [vmem:[%s4 + $0x30] sm:$0xff]
    %v2691 = vld [vmem:[%s4 + $0x38] sm:$0x3]
    %vm2692 = vcmask 474112
    %v2694 = vsel %vm2692, %v2676, 0
    %v2697 = vsel %vm2692, %v2677, 0
    %v2700 = vsel %vm2692, %v2678, 0
    %v2703 = vsel %vm2692, %v2679, 0
    %v2706 = vsel %vm2692, %v2680, 0
    %v2709 = vsel %vm2692, %v2681, 0
    %v2712 = vsel %vm2692, %v2682, 0
    %v2715 = vsel %vm2692, %v2683, 0
    %vm2717 = vcmask 1041408
    %v2719 = vsel %vm2717, %v2691, 0
    %2721 = vmatpush.msra.mxu0 0.0
    %2722 = vmatpush.msra.mxu0 0.0
    %2723 = vmatpush.msra.mxu0 0.0
    %2724 = vmatpush.msra.mxu0 0.0
    %2725 = vmatpush.msra.mxu0 0.0
    %2726 = vmatpush.msra.mxu0 0.0
    %2727 = vmatpush.msra.mxu0 0.0
    %2728 = vmatpush.msra.mxu0 0.0
    %2729 = vmatpush.msra.mxu0 %v2719
    %2730 = vmatpush.msra.mxu0 %v2690
    %2731 = vmatpush.msra.mxu0 %v2689
    %2732 = vmatpush.msra.mxu0 %v2688
    %2733 = vmatpush.msra.mxu0 %v2687
    %2734 = vmatpush.msra.mxu0 %v2686
    %2735 = vmatpush.msra.mxu0 %v2685
    %2736 = vmatpush.msra.mxu0 %v2684
    %2737 = vmatmul.f32.gmra.mxu0 %v2694
    %v2738 = vpop.f32.mrf.mxu0
    %v2739 = vadd.f32 0.0, %v2738
    %2740 = vmatmul.f32.gmra.mxu0 %v2697
    %v2741 = vpop.f32.mrf.mxu0
    %v2742 = vadd.f32 0.0, %v2741
    %2743 = vmatmul.f32.gmra.mxu0 %v2700
    %v2744 = vpop.f32.mrf.mxu0
    %v2745 = vadd.f32 0.0, %v2744
    %2746 = vmatmul.f32.gmra.mxu0 %v2703
    %v2747 = vpop.f32.mrf.mxu0
    %v2748 = vadd.f32 0.0, %v2747
    %2749 = vmatmul.f32.gmra.mxu0 %v2706
    %v2750 = vpop.f32.mrf.mxu0
    %v2751 = vadd.f32 0.0, %v2750
    %2752 = vmatmul.f32.gmra.mxu0 %v2709
    %v2753 = vpop.f32.mrf.mxu0
    %v2754 = vadd.f32 0.0, %v2753
    %2755 = vmatmul.f32.gmra.mxu0 %v2712
    %v2756 = vpop.f32.mrf.mxu0
    %v2757 = vadd.f32 0.0, %v2756
    %2758 = vmatmul.f32.gmra.mxu0 %v2715
    %v2759 = vpop.f32.mrf.mxu0
    %v2760 = vadd.f32 0.0, %v2759
    %2761 = vdwg.mxu0
    %v2762 = vld [vmem:[%s5] sm:$0x1]
    %v2764 = vperm.slane %v2762, 0
    %v2766 = vadd.f32 %v2739, %v2764
    %v2767 = vadd.f32 %v2742, %v2764
    %v2768 = vadd.f32 %v2745, %v2764
    %v2769 = vadd.f32 %v2748, %v2764
    %v2770 = vadd.f32 %v2751, %v2764
    %v2771 = vadd.f32 %v2754, %v2764
    %v2772 = vadd.f32 %v2757, %v2764
    %v2773 = vadd.f32 %v2760, %v2764
    %vm2774 = vcmask 162816
    %v2775 = vsel %vm2774, %v2766, 0.0
    %v2776 = vsel %vm2774, %v2770, 0.0
    %v2777 = vadd.f32 %v2775, %v2776
    %2778 = vadd.xlane.f32.xlu0 %v2777
    %v2779 = vpop.xlane.xlu0 %2778
    %v2780 = vsel %vm2774, %v2767, 0.0
    %v2781 = vsel %vm2774, %v2771, 0.0
    %v2782 = vadd.f32 %v2780, %v2781
    %2783 = vadd.xlane.f32.xlu0 %v2782
    %v2784 = vpop.xlane.xlu0 %2783
    %v2785 = vsel %vm2774, %v2768, 0.0
    %v2786 = vsel %vm2774, %v2772, 0.0
    %v2787 = vadd.f32 %v2785, %v2786
    %2788 = vadd.xlane.f32.xlu0 %v2787
    %v2789 = vpop.xlane.xlu0 %2788
    %v2790 = vsel %vm2774, %v2769, 0.0
    %v2791 = vsel %vm2774, %v2773, 0.0
    %v2792 = vadd.f32 %v2790, %v2791
    %2793 = vadd.xlane.f32.xlu0 %v2792
    %v2794 = vpop.xlane.xlu0 %2793
    %v2795 = vmul.f32 %v2779, 0.025
    %v2796 = vmul.f32 %v2784, 0.025
    %v2797 = vmul.f32 %v2789, 0.025
    %v2798 = vmul.f32 %v2794, 0.025
    %v2799 = vsub.f32 %v2766, %v2795
    %v2800 = vsub.f32 %v2767, %v2796
    %v2801 = vsub.f32 %v2768, %v2797
    %v2802 = vsub.f32 %v2769, %v2798
    %v2803 = vsub.f32 %v2770, %v2795
    %v2804 = vsub.f32 %v2771, %v2796
    %v2805 = vsub.f32 %v2772, %v2797
    %v2806 = vsub.f32 %v2773, %v2798
    %v2807 = vmul.f32 %v2799, %v2799
    %v2808 = vmul.f32 %v2800, %v2800
    %v2809 = vmul.f32 %v2801, %v2801
    %v2810 = vmul.f32 %v2802, %v2802
    %v2811 = vmul.f32 %v2803, %v2803
    %v2812 = vmul.f32 %v2804, %v2804
    %v2813 = vmul.f32 %v2805, %v2805
    %v2814 = vmul.f32 %v2806, %v2806
    %v2815 = vsel %vm2774, %v2807, 0.0
    %v2816 = vsel %vm2774, %v2811, 0.0
    %v2817 = vadd.f32 %v2815, %v2816
    %2818 = vadd.xlane.f32.xlu0 %v2817
    %v2819 = vpop.xlane.xlu0 %2818
    %v2820 = vsel %vm2774, %v2808, 0.0
    %v2821 = vsel %vm2774, %v2812, 0.0
    %v2822 = vadd.f32 %v2820, %v2821
    %2823 = vadd.xlane.f32.xlu0 %v2822
    %v2824 = vpop.xlane.xlu0 %2823
    %v2825 = vsel %vm2774, %v2809, 0.0
    %v2826 = vsel %vm2774, %v2813, 0.0
    %v2827 = vadd.f32 %v2825, %v2826
    %2828 = vadd.xlane.f32.xlu0 %v2827
    %v2829 = vpop.xlane.xlu0 %2828
    %v2830 = vsel %vm2774, %v2810, 0.0
    %v2831 = vsel %vm2774, %v2814, 0.0
    %v2832 = vadd.f32 %v2830, %v2831
    %2833 = vadd.xlane.f32.xlu0 %v2832
    %v2834 = vpop.xlane.xlu0 %2833
    %v2835 = vmul.f32 %v2819, 0.025
    %v2836 = vmul.f32 %v2824, 0.025
    %v2837 = vmul.f32 %v2829, 0.025
    %v2838 = vmul.f32 %v2834, 0.025
    %v2839 = vadd.f32 %v2835, 1e-05
    %v2840 = vadd.f32 %v2836, 1e-05
    %v2841 = vadd.f32 %v2837, 1e-05
    %v2842 = vadd.f32 %v2838, 1e-05
    %v2843 = vrsqrt.pop %v2839
    %v2844 = vmul.f32 %v2843, %v2839
    %v2845 = vmul.f32 %v2844, %v2843
    %v2846 = vmul.f32 0.5, %v2845
    %v2847 = vsub.f32 1.5, %v2846
    %v2848 = vmul.f32 %v2843, %v2847
    %vm2849 = vweird.f32 %v2839
    %vm2850 = vweird.f32 %v2843
    %vm2851 = vmor %vm2849, %vm2850
    %v2852 = vsel %vm2851, %v2843, %v2848
    %v2853 = vrsqrt.pop %v2840
    %v2854 = vmul.f32 %v2853, %v2840
    %v2855 = vmul.f32 %v2854, %v2853
    %v2856 = vmul.f32 0.5, %v2855
    %v2857 = vsub.f32 1.5, %v2856
    %v2858 = vmul.f32 %v2853, %v2857
    %vm2859 = vweird.f32 %v2840
    %vm2860 = vweird.f32 %v2853
    %vm2861 = vmor %vm2859, %vm2860
    %v2862 = vsel %vm2861, %v2853, %v2858
    %v2863 = vrsqrt.pop %v2841
    %v2864 = vmul.f32 %v2863, %v2841
    %v2865 = vmul.f32 %v2864, %v2863
    %v2866 = vmul.f32 0.5, %v2865
    %v2867 = vsub.f32 1.5, %v2866
    %v2868 = vmul.f32 %v2863, %v2867
    %vm2869 = vweird.f32 %v2841
    %vm2870 = vweird.f32 %v2863
    %vm2871 = vmor %vm2869, %vm2870
    %v2872 = vsel %vm2871, %v2863, %v2868
    %v2873 = vrsqrt.pop %v2842
    %v2874 = vmul.f32 %v2873, %v2842
    %v2875 = vmul.f32 %v2874, %v2873
    %v2876 = vmul.f32 0.5, %v2875
    %v2877 = vsub.f32 1.5, %v2876
    %v2878 = vmul.f32 %v2873, %v2877
    %vm2879 = vweird.f32 %v2842
    %vm2880 = vweird.f32 %v2873
    %vm2881 = vmor %vm2879, %vm2880
    %v2882 = vsel %vm2881, %v2873, %v2878
    %v2883 = vmul.f32 %v2799, %v2852
    %v2884 = vmul.f32 %v2800, %v2862
    %v2885 = vmul.f32 %v2801, %v2872
    %v2886 = vmul.f32 %v2802, %v2882
    %v2887 = vmul.f32 %v2803, %v2852
    %v2888 = vmul.f32 %v2804, %v2862
    %v2889 = vmul.f32 %v2805, %v2872
    %v2890 = vmul.f32 %v2806, %v2882
    %v2891 = vmax.f32 %v2883, 0.0
    %v2892 = vmax.f32 %v2884, 0.0
    %v2893 = vmax.f32 %v2885, 0.0
    %v2894 = vmax.f32 %v2886, 0.0
    %v2895 = vmax.f32 %v2887, 0.0
    %v2896 = vmax.f32 %v2888, 0.0
    %v2897 = vmax.f32 %v2889, 0.0
    %v2898 = vmax.f32 %v2890, 0.0
    %2899 = vxpose.xlu0.b32.start [1/16] %v2891, 128
    %2900 = vxpose.xlu0.b32.cont [2/16] %v2892, 128
    %2901 = vxpose.xlu0.b32.cont [3/16] %v2893, 128
    %2902 = vxpose.xlu0.b32.cont [4/16] %v2894, 128
    %2903 = vxpose.xlu0.b32.cont [5/16] 0.0, 128
    %2904 = vxpose.xlu0.b32.cont [6/16] 0.0, 128
    %2905 = vxpose.xlu0.b32.cont [7/16] 0.0, 128
    %2906 = vxpose.xlu0.b32.cont [8/16] 0.0, 128
    %2907 = vxpose.xlu0.b32.cont [9/16] 0.0, 128
    %2908 = vxpose.xlu0.b32.cont [10/16] 0.0, 128
    %2909 = vxpose.xlu0.b32.cont [11/16] 0.0, 128
    %2910 = vxpose.xlu0.b32.cont [12/16] 0.0, 128
    %2911 = vxpose.xlu0.b32.cont [13/16] 0.0, 128
    %2912 = vxpose.xlu0.b32.cont [14/16] 0.0, 128
    %2913 = vxpose.xlu0.b32.cont [15/16] 0.0, 128
    %2914 = vxpose.xlu0.b32.end [16/16] 0.0, 128
    %v2915 = vpop.trf.xlu0
    %v2916 = vpop.trf.xlu0
    %v2917 = vpop.trf.xlu0
    %v2918 = vpop.trf.xlu0
    %v2919 = vpop.trf.xlu0
    %v2920 = vpop.trf.xlu0
    %v2921 = vpop.trf.xlu0
    %v2922 = vpop.trf.xlu0
    %v2923 = vpop.trf.xlu0
    %v2924 = vpop.trf.xlu0
    %v2925 = vpop.trf.xlu0
    %v2926 = vpop.trf.xlu0
    %v2927 = vpop.trf.xlu0
    %v2928 = vpop.trf.xlu0
    %v2929 = vpop.trf.xlu0
    %v2930 = vpop.trf.xlu0
    %2931 = vxpose.xlu0.b32.start [1/16] %v2895, 128
    %2932 = vxpose.xlu0.b32.cont [2/16] %v2896, 128
    %2933 = vxpose.xlu0.b32.cont [3/16] %v2897, 128
    %2934 = vxpose.xlu0.b32.cont [4/16] %v2898, 128
    %2935 = vxpose.xlu0.b32.cont [5/16] 0.0, 128
    %2936 = vxpose.xlu0.b32.cont [6/16] 0.0, 128
    %2937 = vxpose.xlu0.b32.cont [7/16] 0.0, 128
    %2938 = vxpose.xlu0.b32.cont [8/16] 0.0, 128
    %2939 = vxpose.xlu0.b32.cont [9/16] 0.0, 128
    %2940 = vxpose.xlu0.b32.cont [10/16] 0.0, 128
    %2941 = vxpose.xlu0.b32.cont [11/16] 0.0, 128
    %2942 = vxpose.xlu0.b32.cont [12/16] 0.0, 128
    %2943 = vxpose.xlu0.b32.cont [13/16] 0.0, 128
    %2944 = vxpose.xlu0.b32.cont [14/16] 0.0, 128
    %2945 = vxpose.xlu0.b32.cont [15/16] 0.0, 128
    %2946 = vxpose.xlu0.b32.end [16/16] 0.0, 128
    %v2947 = vpop.trf.xlu0
    %v2948 = vpop.trf.xlu0
    %v2949 = vpop.trf.xlu0
    %v2950 = vpop.trf.xlu0
    %v2951 = vpop.trf.xlu0
    %v2952 = vpop.trf.xlu0
    %v2953 = vpop.trf.xlu0
    %v2954 = vpop.trf.xlu0
    %v2955 = vpop.trf.xlu0
    %v2956 = vpop.trf.xlu0
    %v2957 = vpop.trf.xlu0
    %v2958 = vpop.trf.xlu0
    %v2959 = vpop.trf.xlu0
    %v2960 = vpop.trf.xlu0
    %v2961 = vpop.trf.xlu0
    %v2962 = vpop.trf.xlu0
    %v2969 = vrot.slane %v2915, 4
    %v2970 = vrot.slane %v2916, 4
    %v2971 = vrot.slane %v2947, 4
    %v2972 = vrot.slane %v2948, 4
    %v2973 = vld [vmem:[%s6] sm:$0xff]
    %v2974 = vld [vmem:[%s6 + $0x8] sm:$0xff]
    %v2975 = vld [vmem:[%s6 + $0x10] sm:$0xff]
    %v2976 = vld [vmem:[%s6 + $0x18] sm:$0xff]
    %2977 = vst [vmem:[#allocation1] ss:$2 sm:$0xff] %v2915
    %s2978 = scalar_lea.vmem [#allocation1], 1
    %2979 = vst [vmem:[%s2978] ss:$2 sm:$0xff] %v2969
    %s2980 = scalar_lea.vmem [#allocation1], 16
    %2981 = vst [vmem:[%s2980] ss:$2 sm:$0xff] %v2916
    %s2982 = scalar_lea.vmem [#allocation1], 17
    %2983 = vst [vmem:[%s2982] ss:$2 sm:$0xff] %v2970
    %s2984 = scalar_lea.vmem [#allocation1], 32
    %2985 = vst [vmem:[%s2984] ss:$2 sm:$0xff] %v2917
    %s2986 = scalar_lea.vmem [#allocation1], 33
    %2987 = vst [vmem:[%s2986] ss:$2 sm:$0xff] %v2947
    %s2988 = scalar_lea.vmem [#allocation1], 48
    %2989 = vst [vmem:[%s2988] ss:$2 sm:$0xff] %v2971
    %s2990 = scalar_lea.vmem [#allocation1], 49
    %2991 = vst [vmem:[%s2990] ss:$2 sm:$0xff] %v2948
    %v2992 = vld.sshfl [vmem:[#allocation1] sm:$0xff pattern:$0x75316420]
    %v2993 = vld.sshfl [vmem:[#allocation1 + $0x10] sm:$0xff pattern:$0x75316420]
    %v2994 = vld.sshfl [vmem:[#allocation1 + $0x20] sm:$0xff pattern:$0x75316420]
    %v2995 = vld.sshfl [vmem:[#allocation1 + $0x30] sm:$0xff pattern:$0x75316420]
    %2996 = vst [vmem:[#allocation1] ss:$2 sm:$0xff] %v2972
    %2997 = vst [vmem:[%s2978] ss:$2 sm:$0xff] %v2949
    %v2998 = vld.sshfl [vmem:[#allocation1] sm:$0xff pattern:$0x75316420]
    %vm2999 = vcmask 261120
    %v3000 = vsel %vm2999, %v2992, 0
    %v3002 = vsel %vm2999, %v2993, 0
    %v3004 = vsel %vm2999, %v2994, 0
    %v3006 = vsel %vm2999, %v2995, 0
    %v3008 = vsel %vm2999, %v2998, 0
    %3010 = vmatpush.msra.mxu0 0.0
    %3011 = vmatpush.msra.mxu0 0.0
    %3012 = vmatpush.msra.mxu0 0.0
    %3013 = vmatpush.msra.mxu0 0.0
    %3014 = vmatpush.msra.mxu0 0.0
    %3015 = vmatpush.msra.mxu0 0.0
    %3016 = vmatpush.msra.mxu0 0.0
    %3017 = vmatpush.msra.mxu0 0.0
    %3018 = vmatpush.msra.mxu0 0.0
    %3019 = vmatpush.msra.mxu0 0.0
    %3020 = vmatpush.msra.mxu0 0.0
    %3021 = vmatpush.msra.mxu0 0.0
    %3022 = vmatpush.msra.mxu0 %v2976
    %3023 = vmatpush.msra.mxu0 %v2975
    %3024 = vmatpush.msra.mxu0 %v2974
    %3025 = vmatpush.msra.mxu0 %v2973
    %3026 = vmatmul.f32.gmra.mxu0 %v3000
    %v3027 = vpop.f32.mrf.mxu0
    %v3028 = vadd.f32 0.0, %v3027
    %3029 = vmatmul.f32.gmra.mxu0 %v3002
    %v3030 = vpop.f32.mrf.mxu0
    %v3031 = vadd.f32 0.0, %v3030
    %3032 = vmatmul.f32.gmra.mxu0 %v3004
    %v3033 = vpop.f32.mrf.mxu0
    %v3034 = vadd.f32 0.0, %v3033
    %3035 = vmatmul.f32.gmra.mxu0 %v3006
    %v3036 = vpop.f32.mrf.mxu0
    %v3037 = vadd.f32 0.0, %v3036
    %3038 = vmatmul.f32.gmra.mxu0 %v3008
    %v3039 = vpop.f32.mrf.mxu0
    %v3040 = vadd.f32 0.0, %v3039
    %3041 = vdwg.mxu0
    %v3047 = vrot.slane %v3028, 4
    %v3048 = vrot.slane %v3031, 4
    %v3049 = vrot.slane %v3034, 4
    %v3050 = vrot.slane %v3037, 4
    %v3051 = vrot.slane %v3040, 4
    %v3057 = vld [vmem:[%s7] sm:$0x1]
    %v3059 = vperm.slane %v3057, 0
    %v3061 = vrot.slane %v3059, 4
    %v3063 = vadd.f32 %v3028, %v3059
    %v3064 = vadd.f32 %v3047, %v3061
    %v3065 = vadd.f32 %v3031, %v3059
    %v3066 = vadd.f32 %v3048, %v3061
    %v3067 = vadd.f32 %v3034, %v3059
    %v3068 = vadd.f32 %v3049, %v3059
    %v3069 = vadd.f32 %v3037, %v3061
    %v3070 = vadd.f32 %v3050, %v3059
    %v3071 = vadd.f32 %v3040, %v3061
    %v3072 = vadd.f32 %v3051, %v3059
    %3083 = vst [vmem:[#allocation1] ss:$2 sm:$0xff] %v3063
    %s3084 = scalar_lea.vmem [#allocation1], 1
    %3085 = vst [vmem:[%s3084] ss:$2 sm:$0xff] %v3064
    %s3086 = scalar_lea.vmem [#allocation1], 16
    %3087 = vst [vmem:[%s3086] ss:$2 sm:$0xff] %v3065
    %s3088 = scalar_lea.vmem [#allocation1], 17
    %3089 = vst [vmem:[%s3088] ss:$2 sm:$0xff] %v3066
    %s3090 = scalar_lea.vmem [#allocation1], 32
    %3091 = vst [vmem:[%s3090] ss:$2 sm:$0xff] %v3067
    %v3092 = vld.sshfl [vmem:[#allocation1] sm:$0xff pattern:$0x75316420]
    %v3093 = vld.sshfl [vmem:[#allocation1 + $0x10] sm:$0xff pattern:$0x75316420]
    %v3094 = vld.sshfl [vmem:[#allocation1 + $0x20] sm:$0xff pattern:$0x75316420]
    %s3095 = scalar_lea.vmem [#allocation1], 48
    %3096 = vst [vmem:[%s3095] ss:$2 sm:$0xff] %v3068
    %s3097 = scalar_lea.vmem [#allocation1], 49
    %3098 = vst [vmem:[%s3097] ss:$2 sm:$0xff] %v3069
    %v3099 = vld.sshfl [vmem:[#allocation1 + $0x30] sm:$0xff pattern:$0x75316420]
    %3100 = vst [vmem:[#allocation1] ss:$2 sm:$0xff] %v3070
    %3101 = vst [vmem:[%s3084] ss:$2 sm:$0xff] %v3071
    %3102 = vst [vmem:[%s3086] ss:$2 sm:$0xff] %v3072
    %v3103 = vld.sshfl [vmem:[#allocation1] sm:$0xff pattern:$0x75316420]
    %v3104 = vld.sshfl [vmem:[#allocation1 + $0x10] sm:$0xff pattern:$0x75316420]
    %vm3111 = vcmask 80896
    %v3112 = vsel %vm3111, %v3092, 0.0
    %v3113 = vsel %vm3111, %v3099, 0.0
    %v3114 = vadd.f32 %v3112, %v3113
    %3115 = vadd.xlane.f32.xlu0 %v3114
    %v3116 = vpop.xlane.xlu0 %3115
    %v3117 = vsel %vm3111, %v3093, 0.0
    %v3118 = vsel %vm3111, %v3103, 0.0
    %v3119 = vadd.f32 %v3117, %v3118
    %3120 = vadd.xlane.f32.xlu0 %v3119
    %v3121 = vpop.xlane.xlu0 %3120
    %vm3122 = vcmask 76800
    %v3123 = vsel %vm3122, %v3094, 0.0
    %v3124 = vsel %vm3122, %v3104, 0.0
    %v3125 = vadd.f32 %v3123, %v3124
    %3126 = vadd.xlane.f32.xlu0 %v3125
    %v3127 = vpop.xlane.xlu0 %3126
    %v3128 = vmul.f32 %v3116, 0.05
    %v3129 = vmul.f32 %v3121, 0.05
    %v3130 = vmul.f32 %v3127, 0.05
    %v3135 = vunpack.c.l.s4 839922192
    %v3136 = vunpack.c.0.s8 %v3135
    %v3137 = vperm.slane %v3128, %v3136
    %v3139 = vunpack.c.l.s4 1985246804
    %v3140 = vunpack.c.0.s8 %v3139
    %v3141 = vperm.slane %v3128, %v3140
    %v3143 = vunpack.c.l.s4 839922192
    %v3144 = vunpack.c.0.s8 %v3143
    %v3145 = vperm.slane %v3129, %v3144
    %v3147 = vunpack.c.l.s4 1985246804
    %v3148 = vunpack.c.0.s8 %v3147
    %v3149 = vperm.slane %v3129, %v3148
    %v3151 = vunpack.c.l.s4 839922192
    %v3152 = vunpack.c.0.s8 %v3151
    %v3153 = vperm.slane %v3130, %v3152
    %v3159 = vsub.f32 %v3063, %v3137
    %v3160 = vsub.f32 %v3064, %v3141
    %v3161 = vsub.f32 %v3065, %v3145
    %v3162 = vsub.f32 %v3066, %v3149
    %v3163 = vsub.f32 %v3067, %v3153
    %v3164 = vsub.f32 %v3068, %v3137
    %v3165 = vsub.f32 %v3069, %v3141
    %v3166 = vsub.f32 %v3070, %v3145
    %v3167 = vsub.f32 %v3071, %v3149
    %v3168 = vsub.f32 %v3072, %v3153
    %v3169 = vmul.f32 %v3159, %v3159
    %v3170 = vmul.f32 %v3160, %v3160
    %v3171 = vmul.f32 %v3161, %v3161
    %v3172 = vmul.f32 %v3162, %v3162
    %v3173 = vmul.f32 %v3163, %v3163
    %v3174 = vmul.f32 %v3164, %v3164
    %v3175 = vmul.f32 %v3165, %v3165
    %v3176 = vmul.f32 %v3166, %v3166
    %v3177 = vmul.f32 %v3167, %v3167
    %v3178 = vmul.f32 %v3168, %v3168
    %3189 = vst [vmem:[#allocation1] ss:$2 sm:$0xff] %v3169
    %s3190 = scalar_lea.vmem [#allocation1], 1
    %3191 = vst [vmem:[%s3190] ss:$2 sm:$0xff] %v3170
    %s3192 = scalar_lea.vmem [#allocation1], 16
    %3193 = vst [vmem:[%s3192] ss:$2 sm:$0xff] %v3171
    %s3194 = scalar_lea.vmem [#allocation1], 17
    %3195 = vst [vmem:[%s3194] ss:$2 sm:$0xff] %v3172
    %s3196 = scalar_lea.vmem [#allocation1], 32
    %3197 = vst [vmem:[%s3196] ss:$2 sm:$0xff] %v3173
    %v3198 = vld.sshfl [vmem:[#allocation1] sm:$0xff pattern:$0x75316420]
    %v3199 = vld.sshfl [vmem:[#allocation1 + $0x10] sm:$0xff pattern:$0x75316420]
    %v3200 = vld.sshfl [vmem:[#allocation1 + $0x20] sm:$0xff pattern:$0x75316420]
    %s3201 = scalar_lea.vmem [#allocation1], 48
    %3202 = vst [vmem:[%s3201] ss:$2 sm:$0xff] %v3174
    %s3203 = scalar_lea.vmem [#allocation1], 49
    %3204 = vst [vmem:[%s3203] ss:$2 sm:$0xff] %v3175
    %v3205 = vld.sshfl [vmem:[#allocation1 + $0x30] sm:$0xff pattern:$0x75316420]
    %3206 = vst [vmem:[#allocation1] ss:$2 sm:$0xff] %v3176
    %3207 = vst [vmem:[%s3190] ss:$2 sm:$0xff] %v3177
    %3208 = vst [vmem:[%s3192] ss:$2 sm:$0xff] %v3178
    %v3209 = vld.sshfl [vmem:[#allocation1] sm:$0xff pattern:$0x75316420]
    %v3210 = vld.sshfl [vmem:[#allocation1 + $0x10] sm:$0xff pattern:$0x75316420]
    %v3217 = vsel %vm3111, %v3198, 0.0
    %v3218 = vsel %vm3111, %v3205, 0.0
    %v3219 = vadd.f32 %v3217, %v3218
    %3220 = vadd.xlane.f32.xlu0 %v3219
    %v3221 = vpop.xlane.xlu0 %3220
    %v3222 = vsel %vm3111, %v3199, 0.0
    %v3223 = vsel %vm3111, %v3209, 0.0
    %v3224 = vadd.f32 %v3222, %v3223
    %3225 = vadd.xlane.f32.xlu0 %v3224
    %v3226 = vpop.xlane.xlu0 %3225
    %v3227 = vsel %vm3122, %v3200, 0.0
    %v3228 = vsel %vm3122, %v3210, 0.0
    %v3229 = vadd.f32 %v3227, %v3228
    %3230 = vadd.xlane.f32.xlu0 %v3229
    %v3231 = vpop.xlane.xlu0 %3230
    %v3232 = vmul.f32 %v3221, 0.05
    %v3233 = vmul.f32 %v3226, 0.05
    %v3234 = vmul.f32 %v3231, 0.05
    %v3235 = vadd.f32 %v3232, 1e-05
    %v3236 = vadd.f32 %v3233, 1e-05
    %v3237 = vadd.f32 %v3234, 1e-05
    %v3238 = vrsqrt.pop %v3235
    %v3239 = vmul.f32 %v3238, %v3235
    %v3240 = vmul.f32 %v3239, %v3238
    %v3241 = vmul.f32 0.5, %v3240
    %v3242 = vsub.f32 1.5, %v3241
    %v3243 = vmul.f32 %v3238, %v3242
    %vm3244 = vweird.f32 %v3235
    %vm3245 = vweird.f32 %v3238
    %vm3246 = vmor %vm3244, %vm3245
    %v3247 = vsel %vm3246, %v3238, %v3243
    %v3248 = vrsqrt.pop %v3236
    %v3249 = vmul.f32 %v3248, %v3236
    %v3250 = vmul.f32 %v3249, %v3248
    %v3251 = vmul.f32 0.5, %v3250
    %v3252 = vsub.f32 1.5, %v3251
    %v3253 = vmul.f32 %v3248, %v3252
    %vm3254 = vweird.f32 %v3236
    %vm3255 = vweird.f32 %v3248
    %vm3256 = vmor %vm3254, %vm3255
    %v3257 = vsel %vm3256, %v3248, %v3253
    %v3258 = vrsqrt.pop %v3237
    %v3259 = vmul.f32 %v3258, %v3237
    %v3260 = vmul.f32 %v3259, %v3258
    %v3261 = vmul.f32 0.5, %v3260
    %v3262 = vsub.f32 1.5, %v3261
    %v3263 = vmul.f32 %v3258, %v3262
    %vm3264 = vweird.f32 %v3237
    %vm3265 = vweird.f32 %v3258
    %vm3266 = vmor %vm3264, %vm3265
    %v3267 = vsel %vm3266, %v3258, %v3263
    %v3272 = vunpack.c.l.s4 839922192
    %v3273 = vunpack.c.0.s8 %v3272
    %v3274 = vperm.slane %v3247, %v3273
    %v3276 = vunpack.c.l.s4 1985246804
    %v3277 = vunpack.c.0.s8 %v3276
    %v3278 = vperm.slane %v3247, %v3277
    %v3280 = vunpack.c.l.s4 839922192
    %v3281 = vunpack.c.0.s8 %v3280
    %v3282 = vperm.slane %v3257, %v3281
    %v3284 = vunpack.c.l.s4 1985246804
    %v3285 = vunpack.c.0.s8 %v3284
    %v3286 = vperm.slane %v3257, %v3285
    %v3288 = vunpack.c.l.s4 839922192
    %v3289 = vunpack.c.0.s8 %v3288
    %v3290 = vperm.slane %v3267, %v3289
    %v3296 = vmul.f32 %v3159, %v3274
    %v3297 = vmul.f32 %v3160, %v3278
    %v3298 = vmul.f32 %v3161, %v3282
    %v3299 = vmul.f32 %v3162, %v3286
    %v3300 = vmul.f32 %v3163, %v3290
    %v3301 = vmul.f32 %v3164, %v3274
    %v3302 = vmul.f32 %v3165, %v3278
    %v3303 = vmul.f32 %v3166, %v3282
    %v3304 = vmul.f32 %v3167, %v3286
    %v3305 = vmul.f32 %v3168, %v3290
    %v3306 = vmax.f32 %v3296, 0.0
    %v3308 = vunpack.c.l.s4 1983009808
    %v3309 = vunpack.c.0.s8 %v3308
    %v3310 = vperm.slane %v3306, %v3309
    %v3311 = vmax.f32 %v3301, 0.0
    %v3313 = vunpack.c.l.s4 1983009808
    %v3314 = vunpack.c.0.s8 %v3313
    %v3315 = vperm.slane %v3311, %v3314
    %v3316 = vrot.slane %v3315, 4
    %vm3317 = vcmask 1047556
    %v3318 = vsel %vm3317, %v3316, %v3310
    %v3319 = vrot.slane %v3310, 4
    %v3320 = vsel %vm3317, %v3315, %v3319
    %v3322 = vunpack.c.l.s4 1934713408
    %v3323 = vunpack.c.0.s8 %v3322
    %v3324 = vperm.slane %v3318, %v3323
    %v3326 = vunpack.c.l.s4 1934713408
    %v3327 = vunpack.c.0.s8 %v3326
    %v3328 = vperm.slane %v3320, %v3327
    %v3329 = vrot.slane %v3324, 4
    %v3330 = vsel %vm3317, 0.0, %v3329
    %v3331 = vrot.slane %v3328, 4
    %v3332 = vsel %vm3317, 0.0, %v3331
    %v3333 = vmax.f32 %v3297, 0.0
    %v3335 = vunpack.c.l.s4 1983009808
    %v3336 = vunpack.c.0.s8 %v3335
    %v3337 = vperm.slane %v3333, %v3336
    %v3338 = vmax.f32 %v3302, 0.0
    %v3340 = vunpack.c.l.s4 1983009808
    %v3341 = vunpack.c.0.s8 %v3340
    %v3342 = vperm.slane %v3338, %v3341
    %v3343 = vrot.slane %v3342, 4
    %v3344 = vsel %vm3317, %v3343, %v3337
    %v3345 = vrot.slane %v3337, 4
    %v3346 = vsel %vm3317, %v3342, %v3345
    %v3348 = vunpack.c.l.s4 1934713408
    %v3349 = vunpack.c.0.s8 %v3348
    %v3350 = vperm.slane %v3344, %v3349
    %v3352 = vunpack.c.l.s4 1934713408
    %v3353 = vunpack.c.0.s8 %v3352
    %v3354 = vperm.slane %v3346, %v3353
    %v3355 = vrot.slane %v3350, 4
    %v3356 = vsel %vm3317, 0.0, %v3355
    %v3357 = vrot.slane %v3354, 4
    %v3358 = vsel %vm3317, 0.0, %v3357
    %v3359 = vmax.f32 %v3298, 0.0
    %v3361 = vunpack.c.l.s4 1983009808
    %v3362 = vunpack.c.0.s8 %v3361
    %v3363 = vperm.slane %v3359, %v3362
    %v3364 = vmax.f32 %v3303, 0.0
    %v3366 = vunpack.c.l.s4 1983009808
    %v3367 = vunpack.c.0.s8 %v3366
    %v3368 = vperm.slane %v3364, %v3367
    %v3369 = vrot.slane %v3368, 4
    %v3370 = vsel %vm3317, %v3369, %v3363
    %v3371 = vrot.slane %v3363, 4
    %v3372 = vsel %vm3317, %v3368, %v3371
    %v3374 = vunpack.c.l.s4 1934713408
    %v3375 = vunpack.c.0.s8 %v3374
    %v3376 = vperm.slane %v3370, %v3375
    %v3378 = vunpack.c.l.s4 1934713408
    %v3379 = vunpack.c.0.s8 %v3378
    %v3380 = vperm.slane %v3372, %v3379
    %v3381 = vrot.slane %v3376, 4
    %v3382 = vsel %vm3317, 0.0, %v3381
    %v3383 = vrot.slane %v3380, 4
    %v3384 = vsel %vm3317, 0.0, %v3383
    %v3385 = vmax.f32 %v3299, 0.0
    %v3387 = vunpack.c.l.s4 1983009808
    %v3388 = vunpack.c.0.s8 %v3387
    %v3389 = vperm.slane %v3385, %v3388
    %v3390 = vmax.f32 %v3304, 0.0
    %v3392 = vunpack.c.l.s4 1983009808
    %v3393 = vunpack.c.0.s8 %v3392
    %v3394 = vperm.slane %v3390, %v3393
    %v3395 = vrot.slane %v3394, 4
    %v3396 = vsel %vm3317, %v3395, %v3389
    %v3397 = vrot.slane %v3389, 4
    %v3398 = vsel %vm3317, %v3394, %v3397
    %v3400 = vunpack.c.l.s4 1934713408
    %v3401 = vunpack.c.0.s8 %v3400
    %v3402 = vperm.slane %v3396, %v3401
    %v3404 = vunpack.c.l.s4 1934713408
    %v3405 = vunpack.c.0.s8 %v3404
    %v3406 = vperm.slane %v3398, %v3405
    %v3407 = vrot.slane %v3402, 4
    %v3408 = vsel %vm3317, 0.0, %v3407
    %v3409 = vrot.slane %v3406, 4
    %v3410 = vsel %vm3317, 0.0, %v3409
    %v3411 = vmax.f32 %v3300, 0.0
    %v3413 = vunpack.c.l.s4 1983009808
    %v3414 = vunpack.c.0.s8 %v3413
    %v3415 = vperm.slane %v3411, %v3414
    %v3416 = vmax.f32 %v3305, 0.0
    %v3418 = vunpack.c.l.s4 1983009808
    %v3419 = vunpack.c.0.s8 %v3418
    %v3420 = vperm.slane %v3416, %v3419
    %v3421 = vrot.slane %v3420, 4
    %v3422 = vsel %vm3317, %v3421, %v3415
    %v3423 = vrot.slane %v3415, 4
    %v3424 = vsel %vm3317, %v3420, %v3423
    %v3426 = vunpack.c.l.s4 1934713408
    %v3427 = vunpack.c.0.s8 %v3426
    %v3428 = vperm.slane %v3422, %v3427
    %v3430 = vunpack.c.l.s4 1934713408
    %v3431 = vunpack.c.0.s8 %v3430
    %v3432 = vperm.slane %v3424, %v3431
    %v3433 = vrot.slane %v3428, 4
    %v3434 = vsel %vm3317, 0.0, %v3433
    %v3435 = vrot.slane %v3432, 4
    %v3436 = vsel %vm3317, 0.0, %v3435
    %3438 = vst [vmem:[#allocation1] ss:$2 sm:$0xff] %v3330
    %v3439 = vld.sshfl [vmem:[#allocation1] sm:$0xff pattern:$0x75316420]
    %3440 = vrot.lane.b32.xlu0 %v3439, 10
    %v3441 = vpop.permute.xlu0 %3440
    %3444 = vst [vmem:[#allocation1] ss:$2 sm:$0xff] %v3328
    %v3445 = vld.sshfl [vmem:[#allocation1] sm:$0xff pattern:$0x75316420]
    %3446 = vrot.lane.b32.xlu0 %v3445, 20
    %v3447 = vpop.permute.xlu0 %3446
    %3450 = vst [vmem:[#allocation1] ss:$2 sm:$0xff] %v3332
    %v3451 = vld.sshfl [vmem:[#allocation1] sm:$0xff pattern:$0x75316420]
    %3452 = vrot.lane.b32.xlu0 %v3451, 30
    %v3453 = vpop.permute.xlu0 %3452
    %3456 = vst [vmem:[#allocation1] ss:$2 sm:$0xff] %v3350
    %v3457 = vld.sshfl [vmem:[#allocation1] sm:$0xff pattern:$0x75316420]
    %3458 = vrot.lane.b32.xlu0 %v3457, 40
    %v3459 = vpop.permute.xlu0 %3458
    %3462 = vst [vmem:[#allocation1] ss:$2 sm:$0xff] %v3356
    %v3463 = vld.sshfl [vmem:[#allocation1] sm:$0xff pattern:$0x75316420]
    %3464 = vrot.lane.b32.xlu0 %v3463, 50
    %v3465 = vpop.permute.xlu0 %3464
    %3468 = vst [vmem:[#allocation1] ss:$2 sm:$0xff] %v3354
    %v3469 = vld.sshfl [vmem:[#allocation1] sm:$0xff pattern:$0x75316420]
    %3470 = vrot.lane.b32.xlu0 %v3469, 60
    %v3471 = vpop.permute.xlu0 %3470
    %3474 = vst [vmem:[#allocation1] ss:$2 sm:$0xff] %v3358
    %v3475 = vld.sshfl [vmem:[#allocation1] sm:$0xff pattern:$0x75316420]
    %3476 = vrot.lane.b32.xlu0 %v3475, 70
    %v3477 = vpop.permute.xlu0 %3476
    %3480 = vst [vmem:[#allocation1] ss:$2 sm:$0xff] %v3376
    %v3481 = vld.sshfl [vmem:[#allocation1] sm:$0xff pattern:$0x75316420]
    %3482 = vrot.lane.b32.xlu0 %v3481, 80
    %v3483 = vpop.permute.xlu0 %3482
    %3486 = vst [vmem:[#allocation1] ss:$2 sm:$0xff] %v3382
    %v3487 = vld.sshfl [vmem:[#allocation1] sm:$0xff pattern:$0x75316420]
    %3488 = vrot.lane.b32.xlu0 %v3487, 90
    %v3489 = vpop.permute.xlu0 %3488
    %3492 = vst [vmem:[#allocation1] ss:$2 sm:$0xff] %v3380
    %v3493 = vld.sshfl [vmem:[#allocation1] sm:$0xff pattern:$0x75316420]
    %3494 = vrot.lane.b32.xlu0 %v3493, 100
    %v3495 = vpop.permute.xlu0 %3494
    %3498 = vst [vmem:[#allocation1] ss:$2 sm:$0xff] %v3384
    %v3499 = vld.sshfl [vmem:[#allocation1] sm:$0xff pattern:$0x75316420]
    %3500 = vrot.lane.b32.xlu0 %v3499, 110
    %v3501 = vpop.permute.xlu0 %3500
    %3504 = vst [vmem:[#allocation1] ss:$2 sm:$0xff] %v3402
    %v3505 = vld.sshfl [vmem:[#allocation1] sm:$0xff pattern:$0x75316420]
    %3506 = vrot.lane.b32.xlu0 %v3505, 120
    %v3507 = vpop.permute.xlu0 %3506
    %3510 = vst [vmem:[#allocation1] ss:$2 sm:$0xff] %v3408
    %v3511 = vld.sshfl [vmem:[#allocation1] sm:$0xff pattern:$0x75316420]
    %3512 = vrot.lane.b32.xlu0 %v3511, 2
    %v3513 = vpop.permute.xlu0 %3512
    %3516 = vst [vmem:[#allocation1] ss:$2 sm:$0xff] %v3406
    %v3517 = vld.sshfl [vmem:[#allocation1] sm:$0xff pattern:$0x75316420]
    %3518 = vrot.lane.b32.xlu0 %v3517, 12
    %v3519 = vpop.permute.xlu0 %3518
    %3522 = vst [vmem:[#allocation1] ss:$2 sm:$0xff] %v3410
    %v3523 = vld.sshfl [vmem:[#allocation1] sm:$0xff pattern:$0x75316420]
    %3524 = vrot.lane.b32.xlu0 %v3523, 22
    %v3525 = vpop.permute.xlu0 %3524
    %3528 = vst [vmem:[#allocation1] ss:$2 sm:$0xff] %v3428
    %v3529 = vld.sshfl [vmem:[#allocation1] sm:$0xff pattern:$0x75316420]
    %3530 = vrot.lane.b32.xlu0 %v3529, 32
    %v3531 = vpop.permute.xlu0 %3530
    %3534 = vst [vmem:[#allocation1] ss:$2 sm:$0xff] %v3434
    %v3535 = vld.sshfl [vmem:[#allocation1] sm:$0xff pattern:$0x75316420]
    %3536 = vrot.lane.b32.xlu0 %v3535, 42
    %v3537 = vpop.permute.xlu0 %3536
    %3540 = vst [vmem:[#allocation1] ss:$2 sm:$0xff] %v3432
    %v3541 = vld.sshfl [vmem:[#allocation1] sm:$0xff pattern:$0x75316420]
    %3542 = vrot.lane.b32.xlu0 %v3541, 52
    %v3543 = vpop.permute.xlu0 %3542
    %3546 = vst [vmem:[#allocation1] ss:$2 sm:$0xff] %v3436
    %v3547 = vld.sshfl [vmem:[#allocation1] sm:$0xff pattern:$0x75316420]
    %3548 = vrot.lane.b32.xlu0 %v3547, 62
    %v3549 = vpop.permute.xlu0 %3548
    %v3551 = vsel %vm3111, %v3324, %v3441
    %v3552 = vsel %vm2774, %v3551, %v3447
    %vm3553 = vcmask 244736
    %v3554 = vsel %vm3553, %v3552, %v3453
    %vm3555 = vcmask 326656
    %v3556 = vsel %vm3555, %v3554, %v3459
    %vm3557 = vcmask 408576
    %v3558 = vsel %vm3557, %v3556, %v3465
    %vm3559 = vcmask 490496
    %v3560 = vsel %vm3559, %v3558, %v3471
    %vm3561 = vcmask 572416
    %v3562 = vsel %vm3561, %v3560, %v3477
    %vm3563 = vcmask 654336
    %v3564 = vsel %vm3563, %v3562, %v3483
    %vm3565 = vcmask 736256
    %v3566 = vsel %vm3565, %v3564, %v3489
    %vm3567 = vcmask 818176
    %v3568 = vsel %vm3567, %v3566, %v3495
    %vm3569 = vcmask 900096
    %v3570 = vsel %vm3569, %v3568, %v3501
    %vm3571 = vcmask 982016
    %v3572 = vsel %vm3571, %v3570, %v3507
    %vm3573 = vcmask 15360
    %v3574 = vsel %vm3573, %v3507, %v3513
    %vm3575 = vcmask 97280
    %v3576 = vsel %vm3575, %v3574, %v3519
    %vm3577 = vcmask 179200
    %v3578 = vsel %vm3577, %v3576, %v3525
    %v3579 = vsel %vm2999, %v3578, %v3531
    %vm3580 = vcmask 343040
    %v3581 = vsel %vm3580, %v3579, %v3537
    %vm3582 = vcmask 424960
    %v3583 = vsel %vm3582, %v3581, %v3543
    %vm3584 = vcmask 506880
    %v3585 = vsel %vm3584, %v3583, %v3549
    %v3586 = vld [vmem:[%s8] sm:$0xff]
    %v3587 = vld [vmem:[%s8 + $0x8] sm:$0xff]
    %v3588 = vld [vmem:[%s8 + $0x10] sm:$0xff]
    %v3589 = vld [vmem:[%s8 + $0x18] sm:$0xff]
    %v3590 = vld [vmem:[%s8 + $0x20] sm:$0xff]
    %v3591 = vld [vmem:[%s8 + $0x28] sm:$0xff]
    %v3592 = vld [vmem:[%s8 + $0x30] sm:$0xff]
    %v3593 = vld [vmem:[%s8 + $0x38] sm:$0xff]
    %v3594 = vld [vmem:[%s8 + $0x40] sm:$0xff]
    %v3595 = vld [vmem:[%s8 + $0x48] sm:$0xff]
    %v3596 = vld [vmem:[%s8 + $0x50] sm:$0xff]
    %v3597 = vld [vmem:[%s8 + $0x58] sm:$0xff]
    %v3598 = vld [vmem:[%s8 + $0x60] sm:$0xff]
    %v3599 = vld [vmem:[%s8 + $0x68] sm:$0xff]
    %v3600 = vld [vmem:[%s8 + $0x70] sm:$0xff]
    %v3601 = vld [vmem:[%s8 + $0x78] sm:$0xff]
    %v3602 = vld [vmem:[%s8 + $0x80] sm:$0xff]
    %v3603 = vld [vmem:[%s8 + $0x88] sm:$0xff]
    %v3604 = vld [vmem:[%s8 + $0x90] sm:$0xff]
    %v3605 = vld [vmem:[%s8 + $0x98] sm:$0xff]
    %v3606 = vld [vmem:[%s8 + $0xa0] sm:$0xff]
    %v3607 = vld [vmem:[%s8 + $0xa8] sm:$0xff]
    %v3608 = vld [vmem:[%s8 + $0xb0] sm:$0xff]
    %v3609 = vld [vmem:[%s8 + $0xb8] sm:$0xff]
    %v3610 = vld [vmem:[%s8 + $0xc0] sm:$0xff]
    %v3611 = vld [vmem:[%s8 + $0xc8] sm:$0xff]
    %v3612 = vld [vmem:[%s8 + $0xd0] sm:$0xff]
    %v3613 = vld [vmem:[%s8 + $0xd8] sm:$0xff]
    %v3614 = vld [vmem:[%s8 + $0xe0] sm:$0xff]
    %v3615 = vld [vmem:[%s8 + $0xe8] sm:$0xff]
    %v3616 = vld [vmem:[%s8 + $0xf0] sm:$0xff]
    %v3617 = vld [vmem:[%s8 + $0xf8] sm:$0xff]
    %v3618 = vld [vmem:[%s8 + $0x100] sm:$0xff]
    %v3619 = vld [vmem:[%s8 + $0x108] sm:$0xff]
    %v3620 = vld [vmem:[%s8 + $0x110] sm:$0xff]
    %v3621 = vld [vmem:[%s8 + $0x118] sm:$0xff]
    %v3622 = vld [vmem:[%s8 + $0x120] sm:$0xff]
    %v3623 = vld [vmem:[%s8 + $0x128] sm:$0xff]
    %v3624 = vld [vmem:[%s8 + $0x130] sm:$0xff]
    %v3625 = vld [vmem:[%s8 + $0x138] sm:$0xff]
    %v3626 = vld [vmem:[%s8 + $0x140] sm:$0xff]
    %v3627 = vld [vmem:[%s8 + $0x148] sm:$0xff]
    %v3628 = vld [vmem:[%s8 + $0x150] sm:$0xff]
    %v3629 = vld [vmem:[%s8 + $0x158] sm:$0xff]
    %v3630 = vld [vmem:[%s8 + $0x160] sm:$0xff]
    %v3631 = vld [vmem:[%s8 + $0x168] sm:$0xff]
    %v3632 = vld [vmem:[%s8 + $0x170] sm:$0xff]
    %v3633 = vld [vmem:[%s8 + $0x178] sm:$0xff]
    %v3634 = vld [vmem:[%s8 + $0x180] sm:$0xff]
    %v3635 = vld [vmem:[%s8 + $0x188] sm:$0xff]
    %v3636 = vld [vmem:[%s8 + $0x190] sm:$0xff]
    %v3637 = vld [vmem:[%s8 + $0x198] sm:$0xff]
    %v3638 = vld [vmem:[%s8 + $0x1a0] sm:$0xff]
    %v3639 = vld [vmem:[%s8 + $0x1a8] sm:$0xff]
    %v3640 = vld [vmem:[%s8 + $0x1b0] sm:$0xff]
    %v3641 = vld [vmem:[%s8 + $0x1b8] sm:$0xff]
    %v3642 = vld [vmem:[%s8 + $0x1c0] sm:$0xff]
    %v3643 = vld [vmem:[%s8 + $0x1c8] sm:$0xff]
    %v3644 = vld [vmem:[%s8 + $0x1d0] sm:$0xff]
    %v3645 = vld [vmem:[%s8 + $0x1d8] sm:$0xff]
    %v3646 = vld [vmem:[%s8 + $0x1e0] sm:$0xff]
    %v3647 = vld [vmem:[%s8 + $0x1e8] sm:$0xff]
    %v3648 = vld [vmem:[%s8 + $0x1f0] sm:$0xff]
    %v3649 = vld [vmem:[%s8 + $0x1f8] sm:$0xff]
    %v3650 = vld [vmem:[%s9] sm:$0xff]
    %v3651 = vld [vmem:[%s9 + $0x8] sm:$0xff]
    %v3652 = vld [vmem:[%s9 + $0x10] sm:$0xff]
    %v3653 = vld [vmem:[%s9 + $0x18] sm:$0xff]
    %v3654 = vld [vmem:[%s9 + $0x20] sm:$0xff]
    %v3655 = vld [vmem:[%s9 + $0x28] sm:$0xff]
    %v3656 = vld [vmem:[%s9 + $0x30] sm:$0xff]
    %v3657 = vld [vmem:[%s9 + $0x38] sm:$0xff]
    %v3658 = vld [vmem:[%s9 + $0x40] sm:$0xff]
    %v3659 = vld [vmem:[%s9 + $0x48] sm:$0xff]
    %v3660 = vld [vmem:[%s9 + $0x50] sm:$0xff]
    %v3661 = vld [vmem:[%s9 + $0x58] sm:$0xff]
    %v3662 = vld [vmem:[%s9 + $0x60] sm:$0xff]
    %v3663 = vld [vmem:[%s9 + $0x68] sm:$0xff]
    %v3664 = vld [vmem:[%s9 + $0x70] sm:$0xff]
    %v3665 = vld [vmem:[%s9 + $0x78] sm:$0xff]
    %v3666 = vld [vmem:[%s9 + $0x80] sm:$0xff]
    %v3667 = vld [vmem:[%s9 + $0x88] sm:$0xff]
    %v3668 = vld [vmem:[%s9 + $0x90] sm:$0xff]
    %v3669 = vld [vmem:[%s9 + $0x98] sm:$0xff]
    %v3670 = vld [vmem:[%s9 + $0xa0] sm:$0xff]
    %v3671 = vld [vmem:[%s9 + $0xa8] sm:$0xff]
    %v3672 = vld [vmem:[%s9 + $0xb0] sm:$0xff]
    %v3673 = vld [vmem:[%s9 + $0xb8] sm:$0xff]
    %v3674 = vld [vmem:[%s9 + $0xc0] sm:$0xff]
    %vm3675 = vcmask 588800
    %v3677 = vsel %vm3675, %v3585, 0
    %3679 = vmatpush.msra.mxu0 %v3665
    %3680 = vmatpush.msra.mxu0 %v3664
    %3681 = vmatpush.msra.mxu0 %v3663
    %3682 = vmatpush.msra.mxu0 %v3662
    %3683 = vmatpush.msra.mxu0 %v3661
    %3684 = vmatpush.msra.mxu0 %v3660
    %3685 = vmatpush.msra.mxu0 %v3659
    %3686 = vmatpush.msra.mxu0 %v3658
    %3687 = vmatpush.msra.mxu0 %v3657
    %3688 = vmatpush.msra.mxu0 %v3656
    %3689 = vmatpush.msra.mxu0 %v3655
    %3690 = vmatpush.msra.mxu0 %v3654
    %3691 = vmatpush.msra.mxu0 %v3653
    %3692 = vmatpush.msra.mxu0 %v3652
    %3693 = vmatpush.msra.mxu0 %v3651
    %3694 = vmatpush.msra.mxu0 %v3650
    %3695 = vmatmul.f32.gmra.mxu0 %v3572
    %v3696 = vpop.f32.mrf.mxu0
    %v3697 = vadd.f32 0.0, %v3696
    %3698 = vdwg.mxu0
    %3699 = vmatpush.msra.mxu0 0.0
    %3700 = vmatpush.msra.mxu0 0.0
    %3701 = vmatpush.msra.mxu0 0.0
    %3702 = vmatpush.msra.mxu0 0.0
    %3703 = vmatpush.msra.mxu0 0.0
    %3704 = vmatpush.msra.mxu0 0.0
    %3705 = vmatpush.msra.mxu0 0.0
    %3706 = vmatpush.msra.mxu0 %v3674
    %3707 = vmatpush.msra.mxu0 %v3673
    %3708 = vmatpush.msra.mxu0 %v3672
    %3709 = vmatpush.msra.mxu0 %v3671
    %3710 = vmatpush.msra.mxu0 %v3670
    %3711 = vmatpush.msra.mxu0 %v3669
    %3712 = vmatpush.msra.mxu0 %v3668
    %3713 = vmatpush.msra.mxu0 %v3667
    %3714 = vmatpush.msra.mxu0 %v3666
    %3715 = vmatmul.f32.gmra.mxu0 %v3677
    %v3716 = vpop.f32.mrf.mxu0
    %v3717 = vadd.f32 %v3697, %v3716
    %3718 = vdwg.mxu0
    %3847 = vset.pattern.permute.xlu0 0
    %3848 = vperm.xlu0 %3847, %v2548
    %v3849 = vpop.permute.xlu0 %3848
    %3850 = vset.pattern.permute.xlu0 0
    %3851 = vperm.xlu0 %3850, %v2549
    %v3852 = vpop.permute.xlu0 %3851
    %3853 = vset.pattern.permute.xlu0 0
    %3854 = vperm.xlu0 %3853, %v2550
    %v3855 = vpop.permute.xlu0 %3854
    %3856 = vset.pattern.permute.xlu0 0
    %3857 = vperm.xlu0 %3856, %v2551
    %v3858 = vpop.permute.xlu0 %3857
    %3859 = vset.pattern.permute.xlu0 0
    %3860 = vperm.xlu0 %3859, %v2552
    %v3861 = vpop.permute.xlu0 %3860
    %3862 = vset.pattern.permute.xlu0 0
    %3863 = vperm.xlu0 %3862, %v2553
    %v3864 = vpop.permute.xlu0 %3863
    %3865 = vset.pattern.permute.xlu0 0
    %3866 = vperm.xlu0 %3865, %v2554
    %v3867 = vpop.permute.xlu0 %3866
    %3868 = vset.pattern.permute.xlu0 0
    %3869 = vperm.xlu0 %3868, %v2555
    %v3870 = vpop.permute.xlu0 %3869
    %3871 = vset.pattern.permute.xlu0 0
    %3872 = vperm.xlu0 %3871, %v2556
    %v3873 = vpop.permute.xlu0 %3872
    %3874 = vset.pattern.permute.xlu0 0
    %3875 = vperm.xlu0 %3874, %v2557
    %v3876 = vpop.permute.xlu0 %3875
    %3877 = vset.pattern.permute.xlu0 0
    %3878 = vperm.xlu0 %3877, %v2558
    %v3879 = vpop.permute.xlu0 %3878
    %3880 = vset.pattern.permute.xlu0 0
    %3881 = vperm.xlu0 %3880, %v2559
    %v3882 = vpop.permute.xlu0 %3881
    %3883 = vset.pattern.permute.xlu0 0
    %3884 = vperm.xlu0 %3883, %v2560
    %v3885 = vpop.permute.xlu0 %3884
    %3886 = vset.pattern.permute.xlu0 0
    %3887 = vperm.xlu0 %3886, %v2561
    %v3888 = vpop.permute.xlu0 %3887
    %3889 = vset.pattern.permute.xlu0 0
    %3890 = vperm.xlu0 %3889, %v2562
    %v3891 = vpop.permute.xlu0 %3890
    %3892 = vset.pattern.permute.xlu0 0
    %3893 = vperm.xlu0 %3892, %v2563
    %v3894 = vpop.permute.xlu0 %3893
    %3895 = vset.pattern.permute.xlu0 0
    %3896 = vperm.xlu0 %3895, %v2564
    %v3897 = vpop.permute.xlu0 %3896
    %3898 = vset.pattern.permute.xlu0 0
    %3899 = vperm.xlu0 %3898, %v2565
    %v3900 = vpop.permute.xlu0 %3899
    %3901 = vset.pattern.permute.xlu0 0
    %3902 = vperm.xlu0 %3901, %v2566
    %v3903 = vpop.permute.xlu0 %3902
    %3904 = vset.pattern.permute.xlu0 0
    %3905 = vperm.xlu0 %3904, %v2567
    %v3906 = vpop.permute.xlu0 %3905
    %3907 = vset.pattern.permute.xlu0 0
    %3908 = vperm.xlu0 %3907, %v2568
    %v3909 = vpop.permute.xlu0 %3908
    %3910 = vset.pattern.permute.xlu0 0
    %3911 = vperm.xlu0 %3910, %v2569
    %v3912 = vpop.permute.xlu0 %3911
    %3913 = vset.pattern.permute.xlu0 0
    %3914 = vperm.xlu0 %3913, %v2570
    %v3915 = vpop.permute.xlu0 %3914
    %3916 = vset.pattern.permute.xlu0 0
    %3917 = vperm.xlu0 %3916, %v2571
    %v3918 = vpop.permute.xlu0 %3917
    %3919 = vset.pattern.permute.xlu0 0
    %3920 = vperm.xlu0 %3919, %v2572
    %v3921 = vpop.permute.xlu0 %3920
    %3922 = vset.pattern.permute.xlu0 0
    %3923 = vperm.xlu0 %3922, %v2573
    %v3924 = vpop.permute.xlu0 %3923
    %3925 = vset.pattern.permute.xlu0 0
    %3926 = vperm.xlu0 %3925, %v2574
    %v3927 = vpop.permute.xlu0 %3926
    %3928 = vset.pattern.permute.xlu0 0
    %3929 = vperm.xlu0 %3928, %v2575
    %v3930 = vpop.permute.xlu0 %3929
    %3931 = vset.pattern.permute.xlu0 0
    %3932 = vperm.xlu0 %3931, %v2576
    %v3933 = vpop.permute.xlu0 %3932
    %3934 = vset.pattern.permute.xlu0 0
    %3935 = vperm.xlu0 %3934, %v2577
    %v3936 = vpop.permute.xlu0 %3935
    %3937 = vset.pattern.permute.xlu0 0
    %3938 = vperm.xlu0 %3937, %v2578
    %v3939 = vpop.permute.xlu0 %3938
    %3940 = vset.pattern.permute.xlu0 0
    %3941 = vperm.xlu0 %3940, %v2579
    %v3942 = vpop.permute.xlu0 %3941
    %3943 = vset.pattern.permute.xlu0 0
    %3944 = vperm.xlu0 %3943, %v2580
    %v3945 = vpop.permute.xlu0 %3944
    %3946 = vset.pattern.permute.xlu0 0
    %3947 = vperm.xlu0 %3946, %v2581
    %v3948 = vpop.permute.xlu0 %3947
    %3949 = vset.pattern.permute.xlu0 0
    %3950 = vperm.xlu0 %3949, %v2582
    %v3951 = vpop.permute.xlu0 %3950
    %3952 = vset.pattern.permute.xlu0 0
    %3953 = vperm.xlu0 %3952, %v2583
    %v3954 = vpop.permute.xlu0 %3953
    %3955 = vset.pattern.permute.xlu0 0
    %3956 = vperm.xlu0 %3955, %v2584
    %v3957 = vpop.permute.xlu0 %3956
    %3958 = vset.pattern.permute.xlu0 0
    %3959 = vperm.xlu0 %3958, %v2585
    %v3960 = vpop.permute.xlu0 %3959
    %3961 = vset.pattern.permute.xlu0 0
    %3962 = vperm.xlu0 %3961, %v2586
    %v3963 = vpop.permute.xlu0 %3962
    %3964 = vset.pattern.permute.xlu0 0
    %3965 = vperm.xlu0 %3964, %v2587
    %v3966 = vpop.permute.xlu0 %3965
    %3967 = vset.pattern.permute.xlu0 0
    %3968 = vperm.xlu0 %3967, %v2588
    %v3969 = vpop.permute.xlu0 %3968
    %3970 = vset.pattern.permute.xlu0 0
    %3971 = vperm.xlu0 %3970, %v2589
    %v3972 = vpop.permute.xlu0 %3971
    %3973 = vset.pattern.permute.xlu0 0
    %3974 = vperm.xlu0 %3973, %v2590
    %v3975 = vpop.permute.xlu0 %3974
    %3976 = vset.pattern.permute.xlu0 0
    %3977 = vperm.xlu0 %3976, %v2591
    %v3978 = vpop.permute.xlu0 %3977
    %3979 = vset.pattern.permute.xlu0 0
    %3980 = vperm.xlu0 %3979, %v2592
    %v3981 = vpop.permute.xlu0 %3980
    %3982 = vset.pattern.permute.xlu0 0
    %3983 = vperm.xlu0 %3982, %v2593
    %v3984 = vpop.permute.xlu0 %3983
    %3985 = vset.pattern.permute.xlu0 0
    %3986 = vperm.xlu0 %3985, %v2594
    %v3987 = vpop.permute.xlu0 %3986
    %3988 = vset.pattern.permute.xlu0 0
    %3989 = vperm.xlu0 %3988, %v2595
    %v3990 = vpop.permute.xlu0 %3989
    %3991 = vset.pattern.permute.xlu0 0
    %3992 = vperm.xlu0 %3991, %v2596
    %v3993 = vpop.permute.xlu0 %3992
    %3994 = vset.pattern.permute.xlu0 0
    %3995 = vperm.xlu0 %3994, %v2597
    %v3996 = vpop.permute.xlu0 %3995
    %3997 = vset.pattern.permute.xlu0 0
    %3998 = vperm.xlu0 %3997, %v2598
    %v3999 = vpop.permute.xlu0 %3998
    %4000 = vset.pattern.permute.xlu0 0
    %4001 = vperm.xlu0 %4000, %v2599
    %v4002 = vpop.permute.xlu0 %4001
    %4003 = vset.pattern.permute.xlu0 0
    %4004 = vperm.xlu0 %4003, %v2600
    %v4005 = vpop.permute.xlu0 %4004
    %4006 = vset.pattern.permute.xlu0 0
    %4007 = vperm.xlu0 %4006, %v2601
    %v4008 = vpop.permute.xlu0 %4007
    %4009 = vset.pattern.permute.xlu0 0
    %4010 = vperm.xlu0 %4009, %v2602
    %v4011 = vpop.permute.xlu0 %4010
    %4012 = vset.pattern.permute.xlu0 0
    %4013 = vperm.xlu0 %4012, %v2603
    %v4014 = vpop.permute.xlu0 %4013
    %4015 = vset.pattern.permute.xlu0 0
    %4016 = vperm.xlu0 %4015, %v2604
    %v4017 = vpop.permute.xlu0 %4016
    %4018 = vset.pattern.permute.xlu0 0
    %4019 = vperm.xlu0 %4018, %v2605
    %v4020 = vpop.permute.xlu0 %4019
    %4021 = vset.pattern.permute.xlu0 0
    %4022 = vperm.xlu0 %4021, %v2606
    %v4023 = vpop.permute.xlu0 %4022
    %4024 = vset.pattern.permute.xlu0 0
    %4025 = vperm.xlu0 %4024, %v2607
    %v4026 = vpop.permute.xlu0 %4025
    %4027 = vset.pattern.permute.xlu0 0
    %4028 = vperm.xlu0 %4027, %v2608
    %v4029 = vpop.permute.xlu0 %4028
    %4030 = vset.pattern.permute.xlu0 0
    %4031 = vperm.xlu0 %4030, %v2609
    %v4032 = vpop.permute.xlu0 %4031
    %4033 = vset.pattern.permute.xlu0 0
    %4034 = vperm.xlu0 %4033, %v2610
    %v4035 = vpop.permute.xlu0 %4034
    %4036 = vset.pattern.permute.xlu0 0
    %4037 = vperm.xlu0 %4036, %v2611
    %v4038 = vpop.permute.xlu0 %4037
    %4039 = vset.pattern.permute.xlu0 0
    %4040 = vperm.xlu0 %4039, %v2612
    %v4041 = vpop.permute.xlu0 %4040
    %4042 = vset.pattern.permute.xlu0 0
    %4043 = vperm.xlu0 %4042, %v2613
    %v4044 = vpop.permute.xlu0 %4043
    %4045 = vset.pattern.permute.xlu0 0
    %4046 = vperm.xlu0 %4045, %v2614
    %v4047 = vpop.permute.xlu0 %4046
    %4048 = vset.pattern.permute.xlu0 0
    %4049 = vperm.xlu0 %4048, %v2615
    %v4050 = vpop.permute.xlu0 %4049
    %4051 = vset.pattern.permute.xlu0 0
    %4052 = vperm.xlu0 %4051, %v2616
    %v4053 = vpop.permute.xlu0 %4052
    %4054 = vset.pattern.permute.xlu0 0
    %4055 = vperm.xlu0 %4054, %v2617
    %v4056 = vpop.permute.xlu0 %4055
    %4057 = vset.pattern.permute.xlu0 0
    %4058 = vperm.xlu0 %4057, %v2618
    %v4059 = vpop.permute.xlu0 %4058
    %4060 = vset.pattern.permute.xlu0 0
    %4061 = vperm.xlu0 %4060, %v2619
    %v4062 = vpop.permute.xlu0 %4061
    %4063 = vset.pattern.permute.xlu0 0
    %4064 = vperm.xlu0 %4063, %v2620
    %v4065 = vpop.permute.xlu0 %4064
    %4066 = vset.pattern.permute.xlu0 0
    %4067 = vperm.xlu0 %4066, %v2621
    %v4068 = vpop.permute.xlu0 %4067
    %4069 = vset.pattern.permute.xlu0 0
    %4070 = vperm.xlu0 %4069, %v2622
    %v4071 = vpop.permute.xlu0 %4070
    %4072 = vset.pattern.permute.xlu0 0
    %4073 = vperm.xlu0 %4072, %v2623
    %v4074 = vpop.permute.xlu0 %4073
    %4075 = vset.pattern.permute.xlu0 0
    %4076 = vperm.xlu0 %4075, %v2624
    %v4077 = vpop.permute.xlu0 %4076
    %4078 = vset.pattern.permute.xlu0 0
    %4079 = vperm.xlu0 %4078, %v2625
    %v4080 = vpop.permute.xlu0 %4079
    %4081 = vset.pattern.permute.xlu0 0
    %4082 = vperm.xlu0 %4081, %v2626
    %v4083 = vpop.permute.xlu0 %4082
    %4084 = vset.pattern.permute.xlu0 0
    %4085 = vperm.xlu0 %4084, %v2627
    %v4086 = vpop.permute.xlu0 %4085
    %4087 = vset.pattern.permute.xlu0 0
    %4088 = vperm.xlu0 %4087, %v2628
    %v4089 = vpop.permute.xlu0 %4088
    %4090 = vset.pattern.permute.xlu0 0
    %4091 = vperm.xlu0 %4090, %v2629
    %v4092 = vpop.permute.xlu0 %4091
    %4093 = vset.pattern.permute.xlu0 0
    %4094 = vperm.xlu0 %4093, %v2630
    %v4095 = vpop.permute.xlu0 %4094
    %4096 = vset.pattern.permute.xlu0 0
    %4097 = vperm.xlu0 %4096, %v2631
    %v4098 = vpop.permute.xlu0 %4097
    %4099 = vset.pattern.permute.xlu0 0
    %4100 = vperm.xlu0 %4099, %v2632
    %v4101 = vpop.permute.xlu0 %4100
    %4102 = vset.pattern.permute.xlu0 0
    %4103 = vperm.xlu0 %4102, %v2633
    %v4104 = vpop.permute.xlu0 %4103
    %4105 = vset.pattern.permute.xlu0 0
    %4106 = vperm.xlu0 %4105, %v2634
    %v4107 = vpop.permute.xlu0 %4106
    %4108 = vset.pattern.permute.xlu0 0
    %4109 = vperm.xlu0 %4108, %v2635
    %v4110 = vpop.permute.xlu0 %4109
    %4111 = vset.pattern.permute.xlu0 0
    %4112 = vperm.xlu0 %4111, %v2636
    %v4113 = vpop.permute.xlu0 %4112
    %4114 = vset.pattern.permute.xlu0 0
    %4115 = vperm.xlu0 %4114, %v2637
    %v4116 = vpop.permute.xlu0 %4115
    %4117 = vset.pattern.permute.xlu0 0
    %4118 = vperm.xlu0 %4117, %v2638
    %v4119 = vpop.permute.xlu0 %4118
    %4120 = vset.pattern.permute.xlu0 0
    %4121 = vperm.xlu0 %4120, %v2639
    %v4122 = vpop.permute.xlu0 %4121
    %4123 = vset.pattern.permute.xlu0 0
    %4124 = vperm.xlu0 %4123, %v2640
    %v4125 = vpop.permute.xlu0 %4124
    %4126 = vset.pattern.permute.xlu0 0
    %4127 = vperm.xlu0 %4126, %v2641
    %v4128 = vpop.permute.xlu0 %4127
    %4129 = vset.pattern.permute.xlu0 0
    %4130 = vperm.xlu0 %4129, %v2642
    %v4131 = vpop.permute.xlu0 %4130
    %4132 = vset.pattern.permute.xlu0 0
    %4133 = vperm.xlu0 %4132, %v2643
    %v4134 = vpop.permute.xlu0 %4133
    %4135 = vset.pattern.permute.xlu0 0
    %4136 = vperm.xlu0 %4135, %v2644
    %v4137 = vpop.permute.xlu0 %4136
    %4138 = vset.pattern.permute.xlu0 0
    %4139 = vperm.xlu0 %4138, %v2645
    %v4140 = vpop.permute.xlu0 %4139
    %4141 = vset.pattern.permute.xlu0 0
    %4142 = vperm.xlu0 %4141, %v2646
    %v4143 = vpop.permute.xlu0 %4142
    %4144 = vset.pattern.permute.xlu0 0
    %4145 = vperm.xlu0 %4144, %v2647
    %v4146 = vpop.permute.xlu0 %4145
    %4147 = vset.pattern.permute.xlu0 0
    %4148 = vperm.xlu0 %4147, %v2648
    %v4149 = vpop.permute.xlu0 %4148
    %4150 = vset.pattern.permute.xlu0 0
    %4151 = vperm.xlu0 %4150, %v2649
    %v4152 = vpop.permute.xlu0 %4151
    %4153 = vset.pattern.permute.xlu0 0
    %4154 = vperm.xlu0 %4153, %v2650
    %v4155 = vpop.permute.xlu0 %4154
    %4156 = vset.pattern.permute.xlu0 0
    %4157 = vperm.xlu0 %4156, %v2651
    %v4158 = vpop.permute.xlu0 %4157
    %4159 = vset.pattern.permute.xlu0 0
    %4160 = vperm.xlu0 %4159, %v2652
    %v4161 = vpop.permute.xlu0 %4160
    %4162 = vset.pattern.permute.xlu0 0
    %4163 = vperm.xlu0 %4162, %v2653
    %v4164 = vpop.permute.xlu0 %4163
    %4165 = vset.pattern.permute.xlu0 0
    %4166 = vperm.xlu0 %4165, %v2654
    %v4167 = vpop.permute.xlu0 %4166
    %4168 = vset.pattern.permute.xlu0 0
    %4169 = vperm.xlu0 %4168, %v2655
    %v4170 = vpop.permute.xlu0 %4169
    %4171 = vset.pattern.permute.xlu0 0
    %4172 = vperm.xlu0 %4171, %v2656
    %v4173 = vpop.permute.xlu0 %4172
    %4174 = vset.pattern.permute.xlu0 0
    %4175 = vperm.xlu0 %4174, %v2657
    %v4176 = vpop.permute.xlu0 %4175
    %4177 = vset.pattern.permute.xlu0 0
    %4178 = vperm.xlu0 %4177, %v2658
    %v4179 = vpop.permute.xlu0 %4178
    %4180 = vset.pattern.permute.xlu0 0
    %4181 = vperm.xlu0 %4180, %v2659
    %v4182 = vpop.permute.xlu0 %4181
    %4183 = vset.pattern.permute.xlu0 0
    %4184 = vperm.xlu0 %4183, %v2660
    %v4185 = vpop.permute.xlu0 %4184
    %4186 = vset.pattern.permute.xlu0 0
    %4187 = vperm.xlu0 %4186, %v2661
    %v4188 = vpop.permute.xlu0 %4187
    %4189 = vset.pattern.permute.xlu0 0
    %4190 = vperm.xlu0 %4189, %v2662
    %v4191 = vpop.permute.xlu0 %4190
    %4192 = vset.pattern.permute.xlu0 0
    %4193 = vperm.xlu0 %4192, %v2663
    %v4194 = vpop.permute.xlu0 %4193
    %4195 = vset.pattern.permute.xlu0 0
    %4196 = vperm.xlu0 %4195, %v2664
    %v4197 = vpop.permute.xlu0 %4196
    %4198 = vset.pattern.permute.xlu0 0
    %4199 = vperm.xlu0 %4198, %v2665
    %v4200 = vpop.permute.xlu0 %4199
    %4201 = vset.pattern.permute.xlu0 0
    %4202 = vperm.xlu0 %4201, %v2666
    %v4203 = vpop.permute.xlu0 %4202
    %4204 = vset.pattern.permute.xlu0 0
    %4205 = vperm.xlu0 %4204, %v2667
    %v4206 = vpop.permute.xlu0 %4205
    %4207 = vset.pattern.permute.xlu0 0
    %4208 = vperm.xlu0 %4207, %v2668
    %v4209 = vpop.permute.xlu0 %4208
    %4210 = vset.pattern.permute.xlu0 0
    %4211 = vperm.xlu0 %4210, %v2669
    %v4212 = vpop.permute.xlu0 %4211
    %4213 = vset.pattern.permute.xlu0 0
    %4214 = vperm.xlu0 %4213, %v2670
    %v4215 = vpop.permute.xlu0 %4214
    %4216 = vset.pattern.permute.xlu0 0
    %4217 = vperm.xlu0 %4216, %v2671
    %v4218 = vpop.permute.xlu0 %4217
    %4219 = vset.pattern.permute.xlu0 0
    %4220 = vperm.xlu0 %4219, %v2672
    %v4221 = vpop.permute.xlu0 %4220
    %4222 = vset.pattern.permute.xlu0 0
    %4223 = vperm.xlu0 %4222, %v2673
    %v4224 = vpop.permute.xlu0 %4223
    %4225 = vset.pattern.permute.xlu0 0
    %4226 = vperm.xlu0 %4225, %v2674
    %v4227 = vpop.permute.xlu0 %4226
    %4228 = vset.pattern.permute.xlu0 0
    %4229 = vperm.xlu0 %4228, %v2675
    %v4230 = vpop.permute.xlu0 %4229
    %v4231 = vlaneseq
    %v4232 = vand.u32 %v4231, 127
    %v4233 = vperm.slane %v3849, %v4232
    %v4234 = vadd.s32 %v4232, 4294967288
    %v4235 = vperm.slane %v3852, %v4234
    %vm4236 = vcmask 130112
    %v4237 = vsel %vm4236, %v4235, %v4233
    %v4238 = vadd.s32 %v4232, 4294967280
    %v4239 = vperm.slane %v3855, %v4238
    %vm4240 = vcmask 195712
    %v4241 = vsel %vm4240, %v4239, %v4237
    %v4242 = vadd.s32 %v4232, 4294967272
    %v4243 = vperm.slane %v3858, %v4242
    %vm4244 = vcmask 261312
    %v4245 = vsel %vm4244, %v4243, %v4241
    %v4246 = vadd.s32 %v4232, 4294967264
    %v4247 = vperm.slane %v3861, %v4246
    %vm4248 = vcmask 326912
    %v4249 = vsel %vm4248, %v4247, %v4245
    %v4250 = vadd.s32 %v4232, 4294967256
    %v4251 = vperm.slane %v3864, %v4250
    %vm4252 = vcmask 392512
    %v4253 = vsel %vm4252, %v4251, %v4249
    %v4254 = vadd.s32 %v4232, 4294967248
    %v4255 = vperm.slane %v3867, %v4254
    %vm4256 = vcmask 458112
    %v4257 = vsel %vm4256, %v4255, %v4253
    %v4258 = vadd.s32 %v4232, 4294967240
    %v4259 = vperm.slane %v3870, %v4258
    %vm4260 = vcmask 523712
    %v4261 = vsel %vm4260, %v4259, %v4257
    %v4262 = vadd.s32 %v4232, 4294967232
    %v4263 = vperm.slane %v3873, %v4262
    %vm4264 = vcmask 589312
    %v4265 = vsel %vm4264, %v4263, %v4261
    %v4266 = vadd.s32 %v4232, 4294967224
    %v4267 = vperm.slane %v3876, %v4266
    %vm4268 = vcmask 654912
    %v4269 = vsel %vm4268, %v4267, %v4265
    %v4270 = vadd.s32 %v4232, 4294967216
    %v4271 = vperm.slane %v3879, %v4270
    %vm4272 = vcmask 720512
    %v4273 = vsel %vm4272, %v4271, %v4269
    %v4274 = vadd.s32 %v4232, 4294967208
    %v4275 = vperm.slane %v3882, %v4274
    %vm4276 = vcmask 786112
    %v4277 = vsel %vm4276, %v4275, %v4273
    %v4278 = vadd.s32 %v4232, 4294967200
    %v4279 = vperm.slane %v3885, %v4278
    %vm4280 = vcmask 851712
    %v4281 = vsel %vm4280, %v4279, %v4277
    %v4282 = vadd.s32 %v4232, 4294967192
    %v4283 = vperm.slane %v3888, %v4282
    %vm4284 = vcmask 917312
    %v4285 = vsel %vm4284, %v4283, %v4281
    %v4286 = vadd.s32 %v4232, 4294967184
    %v4287 = vperm.slane %v3891, %v4286
    %vm4288 = vcmask 982912
    %v4289 = vsel %vm4288, %v4287, %v4285
    %v4290 = vadd.s32 %v4232, 4294967176
    %v4291 = vperm.slane %v3894, %v4290
    %vm4292 = vcmask 1048512
    %v4293 = vsel %vm4292, %v4291, %v4289
    %v4294 = vperm.slane %v3897, %v4232
    %v4295 = vperm.slane %v3900, %v4234
    %v4296 = vsel %vm4236, %v4295, %v4294
    %v4297 = vperm.slane %v3903, %v4238
    %v4298 = vsel %vm4240, %v4297, %v4296
    %v4299 = vperm.slane %v3906, %v4242
    %v4300 = vsel %vm4244, %v4299, %v4298
    %v4301 = vperm.slane %v3909, %v4246
    %v4302 = vsel %vm4248, %v4301, %v4300
    %v4303 = vperm.slane %v3912, %v4250
    %v4304 = vsel %vm4252, %v4303, %v4302
    %v4305 = vperm.slane %v3915, %v4254
    %v4306 = vsel %vm4256, %v4305, %v4304
    %v4307 = vperm.slane %v3918, %v4258
    %v4308 = vsel %vm4260, %v4307, %v4306
    %v4309 = vperm.slane %v3921, %v4262
    %v4310 = vsel %vm4264, %v4309, %v4308
    %v4311 = vperm.slane %v3924, %v4266
    %v4312 = vsel %vm4268, %v4311, %v4310
    %v4313 = vperm.slane %v3927, %v4270
    %v4314 = vsel %vm4272, %v4313, %v4312
    %v4315 = vperm.slane %v3930, %v4274
    %v4316 = vsel %vm4276, %v4315, %v4314
    %v4317 = vperm.slane %v3933, %v4278
    %v4318 = vsel %vm4280, %v4317, %v4316
    %v4319 = vperm.slane %v3936, %v4282
    %v4320 = vsel %vm4284, %v4319, %v4318
    %v4321 = vperm.slane %v3939, %v4286
    %v4322 = vsel %vm4288, %v4321, %v4320
    %v4323 = vperm.slane %v3942, %v4290
    %v4324 = vsel %vm4292, %v4323, %v4322
    %v4325 = vperm.slane %v3945, %v4232
    %v4326 = vperm.slane %v3948, %v4234
    %v4327 = vsel %vm4236, %v4326, %v4325
    %v4328 = vperm.slane %v3951, %v4238
    %v4329 = vsel %vm4240, %v4328, %v4327
    %v4330 = vperm.slane %v3954, %v4242
    %v4331 = vsel %vm4244, %v4330, %v4329
    %v4332 = vperm.slane %v3957, %v4246
    %v4333 = vsel %vm4248, %v4332, %v4331
    %v4334 = vperm.slane %v3960, %v4250
    %v4335 = vsel %vm4252, %v4334, %v4333
    %v4336 = vperm.slane %v3963, %v4254
    %v4337 = vsel %vm4256, %v4336, %v4335
    %v4338 = vperm.slane %v3966, %v4258
    %v4339 = vsel %vm4260, %v4338, %v4337
    %v4340 = vperm.slane %v3969, %v4262
    %v4341 = vsel %vm4264, %v4340, %v4339
    %v4342 = vperm.slane %v3972, %v4266
    %v4343 = vsel %vm4268, %v4342, %v4341
    %v4344 = vperm.slane %v3975, %v4270
    %v4345 = vsel %vm4272, %v4344, %v4343
    %v4346 = vperm.slane %v3978, %v4274
    %v4347 = vsel %vm4276, %v4346, %v4345
    %v4348 = vperm.slane %v3981, %v4278
    %v4349 = vsel %vm4280, %v4348, %v4347
    %v4350 = vperm.slane %v3984, %v4282
    %v4351 = vsel %vm4284, %v4350, %v4349
    %v4352 = vperm.slane %v3987, %v4286
    %v4353 = vsel %vm4288, %v4352, %v4351
    %v4354 = vperm.slane %v3990, %v4290
    %v4355 = vsel %vm4292, %v4354, %v4353
    %v4356 = vperm.slane %v3993, %v4232
    %v4357 = vperm.slane %v3996, %v4234
    %v4358 = vsel %vm4236, %v4357, %v4356
    %v4359 = vperm.slane %v3999, %v4238
    %v4360 = vsel %vm4240, %v4359, %v4358
    %v4361 = vperm.slane %v4002, %v4242
    %v4362 = vsel %vm4244, %v4361, %v4360
    %v4363 = vperm.slane %v4005, %v4246
    %v4364 = vsel %vm4248, %v4363, %v4362
    %v4365 = vperm.slane %v4008, %v4250
    %v4366 = vsel %vm4252, %v4365, %v4364
    %v4367 = vperm.slane %v4011, %v4254
    %v4368 = vsel %vm4256, %v4367, %v4366
    %v4369 = vperm.slane %v4014, %v4258
    %v4370 = vsel %vm4260, %v4369, %v4368
    %v4371 = vperm.slane %v4017, %v4262
    %v4372 = vsel %vm4264, %v4371, %v4370
    %v4373 = vperm.slane %v4020, %v4266
    %v4374 = vsel %vm4268, %v4373, %v4372
    %v4375 = vperm.slane %v4023, %v4270
    %v4376 = vsel %vm4272, %v4375, %v4374
    %v4377 = vperm.slane %v4026, %v4274
    %v4378 = vsel %vm4276, %v4377, %v4376
    %v4379 = vperm.slane %v4029, %v4278
    %v4380 = vsel %vm4280, %v4379, %v4378
    %v4381 = vperm.slane %v4032, %v4282
    %v4382 = vsel %vm4284, %v4381, %v4380
    %v4383 = vperm.slane %v4035, %v4286
    %v4384 = vsel %vm4288, %v4383, %v4382
    %v4385 = vperm.slane %v4038, %v4290
    %v4386 = vsel %vm4292, %v4385, %v4384
    %v4387 = vperm.slane %v4041, %v4232
    %v4388 = vperm.slane %v4044, %v4234
    %v4389 = vsel %vm4236, %v4388, %v4387
    %v4390 = vperm.slane %v4047, %v4238
    %v4391 = vsel %vm4240, %v4390, %v4389
    %v4392 = vperm.slane %v4050, %v4242
    %v4393 = vsel %vm4244, %v4392, %v4391
    %v4394 = vperm.slane %v4053, %v4246
    %v4395 = vsel %vm4248, %v4394, %v4393
    %v4396 = vperm.slane %v4056, %v4250
    %v4397 = vsel %vm4252, %v4396, %v4395
    %v4398 = vperm.slane %v4059, %v4254
    %v4399 = vsel %vm4256, %v4398, %v4397
    %v4400 = vperm.slane %v4062, %v4258
    %v4401 = vsel %vm4260, %v4400, %v4399
    %v4402 = vperm.slane %v4065, %v4262
    %v4403 = vsel %vm4264, %v4402, %v4401
    %v4404 = vperm.slane %v4068, %v4266
    %v4405 = vsel %vm4268, %v4404, %v4403
    %v4406 = vperm.slane %v4071, %v4270
    %v4407 = vsel %vm4272, %v4406, %v4405
    %v4408 = vperm.slane %v4074, %v4274
    %v4409 = vsel %vm4276, %v4408, %v4407
    %v4410 = vperm.slane %v4077, %v4278
    %v4411 = vsel %vm4280, %v4410, %v4409
    %v4412 = vperm.slane %v4080, %v4282
    %v4413 = vsel %vm4284, %v4412, %v4411
    %v4414 = vperm.slane %v4083, %v4286
    %v4415 = vsel %vm4288, %v4414, %v4413
    %v4416 = vperm.slane %v4086, %v4290
    %v4417 = vsel %vm4292, %v4416, %v4415
    %v4418 = vperm.slane %v4089, %v4232
    %v4419 = vperm.slane %v4092, %v4234
    %v4420 = vsel %vm4236, %v4419, %v4418
    %v4421 = vperm.slane %v4095, %v4238
    %v4422 = vsel %vm4240, %v4421, %v4420
    %v4423 = vperm.slane %v4098, %v4242
    %v4424 = vsel %vm4244, %v4423, %v4422
    %v4425 = vperm.slane %v4101, %v4246
    %v4426 = vsel %vm4248, %v4425, %v4424
    %v4427 = vperm.slane %v4104, %v4250
    %v4428 = vsel %vm4252, %v4427, %v4426
    %v4429 = vperm.slane %v4107, %v4254
    %v4430 = vsel %vm4256, %v4429, %v4428
    %v4431 = vperm.slane %v4110, %v4258
    %v4432 = vsel %vm4260, %v4431, %v4430
    %v4433 = vperm.slane %v4113, %v4262
    %v4434 = vsel %vm4264, %v4433, %v4432
    %v4435 = vperm.slane %v4116, %v4266
    %v4436 = vsel %vm4268, %v4435, %v4434
    %v4437 = vperm.slane %v4119, %v4270
    %v4438 = vsel %vm4272, %v4437, %v4436
    %v4439 = vperm.slane %v4122, %v4274
    %v4440 = vsel %vm4276, %v4439, %v4438
    %v4441 = vperm.slane %v4125, %v4278
    %v4442 = vsel %vm4280, %v4441, %v4440
    %v4443 = vperm.slane %v4128, %v4282
    %v4444 = vsel %vm4284, %v4443, %v4442
    %v4445 = vperm.slane %v4131, %v4286
    %v4446 = vsel %vm4288, %v4445, %v4444
    %v4447 = vperm.slane %v4134, %v4290
    %v4448 = vsel %vm4292, %v4447, %v4446
    %v4449 = vperm.slane %v4137, %v4232
    %v4450 = vperm.slane %v4140, %v4234
    %v4451 = vsel %vm4236, %v4450, %v4449
    %v4452 = vperm.slane %v4143, %v4238
    %v4453 = vsel %vm4240, %v4452, %v4451
    %v4454 = vperm.slane %v4146, %v4242
    %v4455 = vsel %vm4244, %v4454, %v4453
    %v4456 = vperm.slane %v4149, %v4246
    %v4457 = vsel %vm4248, %v4456, %v4455
    %v4458 = vperm.slane %v4152, %v4250
    %v4459 = vsel %vm4252, %v4458, %v4457
    %v4460 = vperm.slane %v4155, %v4254
    %v4461 = vsel %vm4256, %v4460, %v4459
    %v4462 = vperm.slane %v4158, %v4258
    %v4463 = vsel %vm4260, %v4462, %v4461
    %v4464 = vperm.slane %v4161, %v4262
    %v4465 = vsel %vm4264, %v4464, %v4463
    %v4466 = vperm.slane %v4164, %v4266
    %v4467 = vsel %vm4268, %v4466, %v4465
    %v4468 = vperm.slane %v4167, %v4270
    %v4469 = vsel %vm4272, %v4468, %v4467
    %v4470 = vperm.slane %v4170, %v4274
    %v4471 = vsel %vm4276, %v4470, %v4469
    %v4472 = vperm.slane %v4173, %v4278
    %v4473 = vsel %vm4280, %v4472, %v4471
    %v4474 = vperm.slane %v4176, %v4282
    %v4475 = vsel %vm4284, %v4474, %v4473
    %v4476 = vperm.slane %v4179, %v4286
    %v4477 = vsel %vm4288, %v4476, %v4475
    %v4478 = vperm.slane %v4182, %v4290
    %v4479 = vsel %vm4292, %v4478, %v4477
    %v4480 = vperm.slane %v4185, %v4232
    %v4481 = vperm.slane %v4188, %v4234
    %v4482 = vsel %vm4236, %v4481, %v4480
    %v4483 = vperm.slane %v4191, %v4238
    %v4484 = vsel %vm4240, %v4483, %v4482
    %v4485 = vperm.slane %v4194, %v4242
    %v4486 = vsel %vm4244, %v4485, %v4484
    %v4487 = vperm.slane %v4197, %v4246
    %v4488 = vsel %vm4248, %v4487, %v4486
    %v4489 = vperm.slane %v4200, %v4250
    %v4490 = vsel %vm4252, %v4489, %v4488
    %v4491 = vperm.slane %v4203, %v4254
    %v4492 = vsel %vm4256, %v4491, %v4490
    %v4493 = vperm.slane %v4206, %v4258
    %v4494 = vsel %vm4260, %v4493, %v4492
    %v4495 = vperm.slane %v4209, %v4262
    %v4496 = vsel %vm4264, %v4495, %v4494
    %v4497 = vperm.slane %v4212, %v4266
    %v4498 = vsel %vm4268, %v4497, %v4496
    %v4499 = vperm.slane %v4215, %v4270
    %v4500 = vsel %vm4272, %v4499, %v4498
    %v4501 = vperm.slane %v4218, %v4274
    %v4502 = vsel %vm4276, %v4501, %v4500
    %v4503 = vperm.slane %v4221, %v4278
    %v4504 = vsel %vm4280, %v4503, %v4502
    %v4505 = vperm.slane %v4224, %v4282
    %v4506 = vsel %vm4284, %v4505, %v4504
    %v4507 = vperm.slane %v4227, %v4286
    %v4508 = vsel %vm4288, %v4507, %v4506
    %v4509 = vperm.slane %v4230, %v4290
    %v4510 = vsel %vm4292, %v4509, %v4508
    %vm4511 = vcmask 1041409
    %v4512 = vsel %vm4511, %v4417, %v4293
    %v4513 = vsel %vm4511, %v4448, %v4324
    %v4514 = vsel %vm4511, %v4479, %v4355
    %v4515 = vsel %vm4511, %v4510, %v4386
    %4520 = vmatpush.msra.mxu0 %v3601
    %4521 = vmatpush.msra.mxu0 %v3600
    %4522 = vmatpush.msra.mxu0 %v3599
    %4523 = vmatpush.msra.mxu0 %v3598
    %4524 = vmatpush.msra.mxu0 %v3597
    %4525 = vmatpush.msra.mxu0 %v3596
    %4526 = vmatpush.msra.mxu0 %v3595
    %4527 = vmatpush.msra.mxu0 %v3594
    %4528 = vmatpush.msra.mxu0 %v3593
    %4529 = vmatpush.msra.mxu0 %v3592
    %4530 = vmatpush.msra.mxu0 %v3591
    %4531 = vmatpush.msra.mxu0 %v3590
    %4532 = vmatpush.msra.mxu0 %v3589
    %4533 = vmatpush.msra.mxu0 %v3588
    %4534 = vmatpush.msra.mxu0 %v3587
    %4535 = vmatpush.msra.mxu0 %v3586
    %4536 = vmatmul.f32.gmra.mxu0 %v4512
    %v4537 = vpop.f32.mrf.mxu0
    %v4538 = vadd.f32 %v3717, %v4537
    %4539 = vdwg.mxu0
    %4540 = vmatpush.msra.mxu0 %v3617
    %4541 = vmatpush.msra.mxu0 %v3616
    %4542 = vmatpush.msra.mxu0 %v3615
    %4543 = vmatpush.msra.mxu0 %v3614
    %4544 = vmatpush.msra.mxu0 %v3613
    %4545 = vmatpush.msra.mxu0 %v3612
    %4546 = vmatpush.msra.mxu0 %v3611
    %4547 = vmatpush.msra.mxu0 %v3610
    %4548 = vmatpush.msra.mxu0 %v3609
    %4549 = vmatpush.msra.mxu0 %v3608
    %4550 = vmatpush.msra.mxu0 %v3607
    %4551 = vmatpush.msra.mxu0 %v3606
    %4552 = vmatpush.msra.mxu0 %v3605
    %4553 = vmatpush.msra.mxu0 %v3604
    %4554 = vmatpush.msra.mxu0 %v3603
    %4555 = vmatpush.msra.mxu0 %v3602
    %4556 = vmatmul.f32.gmra.mxu0 %v4513
    %v4557 = vpop.f32.mrf.mxu0
    %v4558 = vadd.f32 %v4538, %v4557
    %4559 = vdwg.mxu0
    %4560 = vmatpush.msra.mxu0 %v3633
    %4561 = vmatpush.msra.mxu0 %v3632
    %4562 = vmatpush.msra.mxu0 %v3631
    %4563 = vmatpush.msra.mxu0 %v3630
    %4564 = vmatpush.msra.mxu0 %v3629
    %4565 = vmatpush.msra.mxu0 %v3628
    %4566 = vmatpush.msra.mxu0 %v3627
    %4567 = vmatpush.msra.mxu0 %v3626
    %4568 = vmatpush.msra.mxu0 %v3625
    %4569 = vmatpush.msra.mxu0 %v3624
    %4570 = vmatpush.msra.mxu0 %v3623
    %4571 = vmatpush.msra.mxu0 %v3622
    %4572 = vmatpush.msra.mxu0 %v3621
    %4573 = vmatpush.msra.mxu0 %v3620
    %4574 = vmatpush.msra.mxu0 %v3619
    %4575 = vmatpush.msra.mxu0 %v3618
    %4576 = vmatmul.f32.gmra.mxu0 %v4514
    %v4577 = vpop.f32.mrf.mxu0
    %v4578 = vadd.f32 %v4558, %v4577
    %4579 = vdwg.mxu0
    %4580 = vmatpush.msra.mxu0 %v3649
    %4581 = vmatpush.msra.mxu0 %v3648
    %4582 = vmatpush.msra.mxu0 %v3647
    %4583 = vmatpush.msra.mxu0 %v3646
    %4584 = vmatpush.msra.mxu0 %v3645
    %4585 = vmatpush.msra.mxu0 %v3644
    %4586 = vmatpush.msra.mxu0 %v3643
    %4587 = vmatpush.msra.mxu0 %v3642
    %4588 = vmatpush.msra.mxu0 %v3641
    %4589 = vmatpush.msra.mxu0 %v3640
    %4590 = vmatpush.msra.mxu0 %v3639
    %4591 = vmatpush.msra.mxu0 %v3638
    %4592 = vmatpush.msra.mxu0 %v3637
    %4593 = vmatpush.msra.mxu0 %v3636
    %4594 = vmatpush.msra.mxu0 %v3635
    %4595 = vmatpush.msra.mxu0 %v3634
    %4596 = vmatmul.f32.gmra.mxu0 %v4515
    %v4597 = vpop.f32.mrf.mxu0
    %v4598 = vadd.f32 %v4578, %v4597
    %4599 = vdwg.mxu0
    %v4600 = vld [vmem:[%s10] sm:$0x1]
    %v4602 = vperm.slane %v4600, 0
    %v4604 = vadd.f32 %v4598, %v4602
    %4605 = vst [vmem:[#allocation2] sm:$0x3] %v4604
    // Predicated region
    $region46: #{head_net_forward.3} parent=1 // pred_check
      _
    $region47: #{head_net_forward.3} parent=1 // pred_check_branch
      %4607 = sbr.rel (0) target = $region49
    $region48: #{head_net_forward.3} parent=1 // pred_region
      %4609 = vsyncadd [#allocation3], 0
      %s4611 = sshll.u32 [#allocation2], 4
      %s4612 = int_to_ptr.vmem [resolvable:$true] %s4611
      %s4613 = sshll.u32 %s11, 4
      %s4614 = int_to_ptr.hbm [resolvable:$true] %s4613
      %4616 = dma.vmem_to_hbm [thread:$0]  %s4612, 32, %s4614, [#allocation3]
    $region49: #{head_net_forward.3} parent=1 // pred_fallthru
      _
    // Predicated region
    $region50: #{head_net_forward.3} parent=1 // pred_check
      _
    $region51: #{head_net_forward.3} parent=1 // pred_check_branch
      %4618 = sbr.rel (0) target = $region53
    $region52: #{head_net_forward.3} parent=1 // pred_region
      %4620 = dma.done [#allocation3], 32
    $region53: #{head_net_forward.3} parent=1 // pred_fallthru
      _
    %4621 = vsyncpa [#allocation3], 1

</llo_original>
